<compile_context>
chip_gen: v5e
topology: v5e:2x2
jax: 0.10.0
libtpu: 0.0.40
codegen_flags: <defaults>
</compile_context>

<pallas_src>
import functools

import jax
import jax.numpy as jnp
from jax import lax
from jax.experimental import pallas as pl
from jax.experimental.pallas import tpu as pltpu


# 32 MiB scoped VMEM: >= the default on every generation and well under v7x's
# 64 MiB physical VMEM; the largest double-buffered tile set here is < 4 MiB.
_VMEM_LIMIT = 32 * 1024 * 1024


def _round_up(x, m):
    return (x + m - 1) // m * m


def _tiles(M, K, N):
    """Tile sizes + padded dims: N lane-padded to >=128, K padded to sublane
    multiples, 256-aligned tiles when the dims allow (v6e/v7x MXU friendly)."""
    tm = min(256, _round_up(M, 8))
    Mp = _round_up(M, tm)
    tn = 256 if N >= 256 else 128
    Np = _round_up(N, tn)
    if K <= 512:
        Kp = _round_up(K, 8)
        tk = Kp
    else:
        Kp = _round_up(K, 512)
        tk = 512
    return (tm, tn, tk), (Mp, Np, Kp)


# ----------------------------------------------------------------------------
# Pallas kernels: matmul + bias (+ReLU)
# ----------------------------------------------------------------------------
def _mm_bias_single_kernel(x_ref, w_ref, b_ref, o_ref, *, relu):
    """Single-K-step matmul + bias (+ReLU); whole reduction resident in VMEM,
    result written straight to the output tile (no accumulator scratch)."""
    y = jnp.dot(x_ref[...], w_ref[...],
                preferred_element_type=jnp.float32) + b_ref[...]
    if relu:
        y = jnp.maximum(y, 0.0)
    o_ref[...] = y


def _mm_bias_multi_kernel(x_ref, w_ref, b_ref, o_ref, acc_ref, *, relu):
    """K-tiled matmul + bias (+ReLU); K is the 'arbitrary' reduction axis."""
    @pl.when(pl.program_id(2) == 0)
    def _():
        acc_ref[...] = jnp.zeros_like(acc_ref)

    acc_ref[...] += jnp.dot(x_ref[...], w_ref[...],
                            preferred_element_type=jnp.float32)

    @pl.when(pl.program_id(2) == pl.num_programs(2) - 1)
    def _():
        y = acc_ref[...] + b_ref[...]
        if relu:
            y = jnp.maximum(y, 0.0)
        o_ref[...] = y


def matmul_bias(x, w, b, *, relu=False):
    """y = relu?(x @ w + b);  x:(M,K)  w:(K,N)  b:(N,) -> (M,N) float32."""
    M, K = x.shape
    K2, N = w.shape
    assert K == K2
    (tm, tn, tk), (Mp, Np, Kp) = _tiles(M, K, N)
    xp = jnp.pad(x, ((0, Mp - M), (0, Kp - K)))
    wp = jnp.pad(w, ((0, Kp - K), (0, Np - N)))
    bp = jnp.pad(b, (0, Np - N)).reshape(1, Np)

    if Kp == tk:
        # Fast path: one K step -> no accumulator scratch, 2-D parallel grid.
        out = pl.pallas_call(
            functools.partial(_mm_bias_single_kernel, relu=relu),
            out_shape=jax.ShapeDtypeStruct((Mp, Np), jnp.float32),
            grid_spec=pltpu.PrefetchScalarGridSpec(
                num_scalar_prefetch=0,
                grid=(Mp // tm, Np // tn),
                in_specs=[
                    pl.BlockSpec((tm, Kp), lambda i, j: (i, 0)),
                    pl.BlockSpec((Kp, tn), lambda i, j: (0, j)),
                    pl.BlockSpec((1, tn), lambda i, j: (0, j)),
                ],
                out_specs=pl.BlockSpec((tm, tn), lambda i, j: (i, j))),
            compiler_params=pltpu.CompilerParams(
                dimension_semantics=("parallel", "parallel"),
                vmem_limit_bytes=_VMEM_LIMIT),
        )(xp, wp, bp)
    else:
        out = pl.pallas_call(
            functools.partial(_mm_bias_multi_kernel, relu=relu),
            out_shape=jax.ShapeDtypeStruct((Mp, Np), jnp.float32),
            grid_spec=pltpu.PrefetchScalarGridSpec(
                num_scalar_prefetch=0,
                grid=(Mp // tm, Np // tn, Kp // tk),
                in_specs=[
                    pl.BlockSpec((tm, tk), lambda i, j, k: (i, k)),
                    pl.BlockSpec((tk, tn), lambda i, j, k: (k, j)),
                    pl.BlockSpec((1, tn), lambda i, j, k: (0, j)),
                ],
                out_specs=pl.BlockSpec((tm, tn), lambda i, j, k: (i, j)),
                scratch_shapes=[pltpu.VMEM((tm, tn), jnp.float32)]),
            compiler_params=pltpu.CompilerParams(
                dimension_semantics=("parallel", "parallel", "arbitrary"),
                vmem_limit_bytes=_VMEM_LIMIT),
        )(xp, wp, bp)
    return out[:M, :N]


# ----------------------------------------------------------------------------
# Pallas kernels: matmul + bias fused with MSE (scalar output only)
# ----------------------------------------------------------------------------
def _mm_bias_mse_single_kernel(x_ref, w_ref, b_ref, t_ref, o_ref, sse_ref,
                               *, m_real, tm, inv_count):
    """Single-K-step matmul + bias fused with mean((y - target)^2).  Only the
    scalar mean is emitted; grid is sequential (SMEM SSE accumulation)."""
    i = pl.program_id(0)
    j = pl.program_id(1)

    @pl.when((i == 0) & (j == 0))
    def _():
        sse_ref[0] = 0.0

    y = jnp.dot(x_ref[...], w_ref[...],
                preferred_element_type=jnp.float32) + b_ref[...]
    d = y - t_ref[...]
    row = i * tm + lax.broadcasted_iota(jnp.int32, d.shape, 0)
    d = jnp.where(row < m_real, d, 0.0)          # mask M-padding rows
    sse_ref[0] += jnp.sum(d * d)

    @pl.when((i == pl.num_programs(0) - 1) & (j == pl.num_programs(1) - 1))
    def _():
        o_ref[0, 0] = sse_ref[0] * inv_count


def _mm_bias_mse_multi_kernel(x_ref, w_ref, b_ref, t_ref, o_ref, acc_ref,
                              sse_ref, *, m_real, tm, inv_count):
    """K-tiled variant of the fused matmul+MSE kernel."""
    i = pl.program_id(0)
    j = pl.program_id(1)
    k = pl.program_id(2)
    nk = pl.num_programs(2)

    @pl.when((i == 0) & (j == 0) & (k == 0))
    def _():
        sse_ref[0] = 0.0

    @pl.when(k == 0)
    def _():
        acc_ref[...] = jnp.zeros_like(acc_ref)

    acc_ref[...] += jnp.dot(x_ref[...], w_ref[...],
                            preferred_element_type=jnp.float32)

    @pl.when(k == nk - 1)
    def _():
        y = acc_ref[...] + b_ref[...]
        d = y - t_ref[...]
        row = i * tm + lax.broadcasted_iota(jnp.int32, d.shape, 0)
        d = jnp.where(row < m_real, d, 0.0)
        sse_ref[0] += jnp.sum(d * d)

    @pl.when((i == pl.num_programs(0) - 1) &
             (j == pl.num_programs(1) - 1) & (k == nk - 1))
    def _():
        o_ref[0, 0] = sse_ref[0] * inv_count


def matmul_bias_mse(x, w, b, target):
    """mean((x @ w + b - target)^2) over the un-padded (M, N) elements.
    Padded K/N columns contribute exactly zero (zero weights, bias, target)."""
    M, K = x.shape
    K2, N = w.shape
    assert K == K2 and target.shape == (M, N)
    (tm, tn, tk), (Mp, Np, Kp) = _tiles(M, K, N)
    xp = jnp.pad(x, ((0, Mp - M), (0, Kp - K)))
    wp = jnp.pad(w, ((0, Kp - K), (0, Np - N)))
    bp = jnp.pad(b, (0, Np - N)).reshape(1, Np)
    tp = jnp.pad(target, ((0, Mp - M), (0, Np - N)))
    inv_count = 1.0 / float(M * N)

    if Kp == tk:
        return pl.pallas_call(
            functools.partial(_mm_bias_mse_single_kernel, m_real=M, tm=tm,
                              inv_count=inv_count),
            out_shape=jax.ShapeDtypeStruct((1, 1), jnp.float32),
            grid_spec=pltpu.PrefetchScalarGridSpec(
                num_scalar_prefetch=0,
                grid=(Mp // tm, Np // tn),
                in_specs=[
                    pl.BlockSpec((tm, Kp), lambda i, j: (i, 0)),
                    pl.BlockSpec((Kp, tn), lambda i, j: (0, j)),
                    pl.BlockSpec((1, tn), lambda i, j: (0, j)),
                    pl.BlockSpec((tm, tn), lambda i, j: (i, j)),
                ],
                out_specs=pl.BlockSpec((1, 1), lambda i, j: (0, 0),
                                       memory_space=pltpu.MemorySpace.SMEM),
                scratch_shapes=[pltpu.SMEM((1,), jnp.float32)]),
            compiler_params=pltpu.CompilerParams(
                dimension_semantics=("arbitrary", "arbitrary"),
                vmem_limit_bytes=_VMEM_LIMIT),
        )(xp, wp, bp, tp)

    return pl.pallas_call(
        functools.partial(_mm_bias_mse_multi_kernel, m_real=M, tm=tm,
                          inv_count=inv_count),
        out_shape=jax.ShapeDtypeStruct((1, 1), jnp.float32),
        grid_spec=pltpu.PrefetchScalarGridSpec(
            num_scalar_prefetch=0,
            grid=(Mp // tm, Np // tn, Kp // tk),
            in_specs=[
                pl.BlockSpec((tm, tk), lambda i, j, k: (i, k)),
                pl.BlockSpec((tk, tn), lambda i, j, k: (k, j)),
                pl.BlockSpec((1, tn), lambda i, j, k: (0, j)),
                pl.BlockSpec((tm, tn), lambda i, j, k: (i, j)),
            ],
            out_specs=pl.BlockSpec((1, 1), lambda i, j, k: (0, 0),
                                   memory_space=pltpu.MemorySpace.SMEM),
            scratch_shapes=[pltpu.VMEM((tm, tn), jnp.float32),
                            pltpu.SMEM((1,), jnp.float32)]),
        compiler_params=pltpu.CompilerParams(
            dimension_semantics=("arbitrary", "arbitrary", "arbitrary"),
            vmem_limit_bytes=_VMEM_LIMIT),
    )(xp, wp, bp, tp)


# ----------------------------------------------------------------------------
# Pallas kernel: fused 1x1 encoder conv + vector quantizer
# ----------------------------------------------------------------------------
def _enc1x1_vq_kernel(h_ref, w_ref, b_ref, e_ref, q_ref, loss_ref, sse_ref,
                      *, ke_real, m_real, tm, loss_scale):
    """Fused 1x1 conv (encoder layer 3) + vector quantizer, gridded over M with
    the codebook resident in VMEM; VQ loss accumulated in SMEM."""
    i = pl.program_id(0)

    @pl.when(i == 0)
    def _():
        sse_ref[0] = 0.0

    # 1x1 conv: x = h @ W + b          (embedding dim lane-padded to 128)
    x = jnp.dot(h_ref[...], w_ref[...],
                preferred_element_type=jnp.float32) + b_ref[...]      # (tm,Dp)
    emb = e_ref[...]                                                  # (Kep,Dp)

    # ||x - e||^2 ; codebook pad rows masked to +inf so they never win.
    x2 = jnp.sum(x * x, axis=1, keepdims=True)                        # (tm,1)
    e2 = jnp.sum(emb * emb, axis=1)[None, :]                          # (1,Kep)
    xe = jnp.dot(x, emb.T, preferred_element_type=jnp.float32)        # (tm,Kep)
    dist = x2 + e2 - 2.0 * xe
    col = lax.broadcasted_iota(jnp.int32, dist.shape, 1)
    dist = jnp.where(col < ke_real, dist, jnp.inf)

    # first-index argmin as a one-hot -> codebook gather is an MXU matmul
    dmin = jnp.min(dist, axis=1, keepdims=True)
    idx = jnp.min(jnp.where(dist == dmin, col, dist.shape[1]),
                  axis=1, keepdims=True)
    onehot = (col == idx).astype(jnp.float32)
    q = jnp.dot(onehot, emb, preferred_element_type=jnp.float32)      # (tm,Dp)

    # q_latent_loss and e_latent_loss are numerically identical in the forward
    # pass -> a single masked SSE scaled by (1 + beta) / (M*D).
    row = i * tm + lax.broadcasted_iota(jnp.int32, q.shape, 0)
    diff = jnp.where(row < m_real, q - x, 0.0)
    sse_ref[0] += jnp.sum(diff * diff)

    # straight-through forward value: x + (q - x).detach() == q
    q_ref[...] = q

    @pl.when(i == pl.num_programs(0) - 1)
    def _():
        loss_ref[0, 0] = loss_scale * sse_ref[0]


def enc1x1_vq(h_flat, w3_oihw, b3, codebook, commitment_cost):
    """Fused 1x1 conv + VQ.  h_flat:(M,Cin)  w3:(D,Cin,1,1) torch Conv2d layout.
    Returns (quantized (M,D), vq_loss (1,1))."""
    M, Kc = h_flat.shape
    O = w3_oihw.shape[0]
    Ke, D = codebook.shape
    assert O == D
    w3 = w3_oihw.reshape(O, Kc).T                      # (Kc, D)

    Kcp = _round_up(Kc, 8)
    Dp = _round_up(D, 128)                             # lane-pad embedding dim
    Kep = _round_up(Ke, 128)                           # lane-pad codebook axis
    tm = min(256, _round_up(M, 8))
    Mp = _round_up(M, tm)

    hp = jnp.pad(h_flat, ((0, Mp - M), (0, Kcp - Kc)))
    w3p = jnp.pad(w3, ((0, Kcp - Kc), (0, Dp - D)))
    b3p = jnp.pad(b3, (0, Dp - D)).reshape(1, Dp)
    ebp = jnp.pad(codebook, ((0, Kep - Ke), (0, Dp - D)))

    q, loss = pl.pallas_call(
        functools.partial(_enc1x1_vq_kernel, ke_real=Ke, m_real=M, tm=tm,
                          loss_scale=(1.0 + commitment_cost) / float(M * D)),
        out_shape=(jax.ShapeDtypeStruct((Mp, Dp), jnp.float32),
                   jax.ShapeDtypeStruct((1, 1), jnp.float32)),
        grid_spec=pltpu.PrefetchScalarGridSpec(
            num_scalar_prefetch=0,
            grid=(Mp // tm,),
            in_specs=[
                pl.BlockSpec((tm, Kcp), lambda i: (i, 0)),    # activations
                pl.BlockSpec((Kcp, Dp), lambda i: (0, 0)),    # 1x1 weight (resident)
                pl.BlockSpec((1, Dp), lambda i: (0, 0)),      # bias (resident)
                pl.BlockSpec((Kep, Dp), lambda i: (0, 0)),    # codebook (resident)
            ],
            out_specs=(
                pl.BlockSpec((tm, Dp), lambda i: (i, 0)),
                pl.BlockSpec((1, 1), lambda i: (0, 0),
                             memory_space=pltpu.MemorySpace.SMEM),
            ),
            scratch_shapes=[pltpu.SMEM((1,), jnp.float32)]),
        compiler_params=pltpu.CompilerParams(
            dimension_semantics=("arbitrary",),   # sequential SMEM loss accum
            vmem_limit_bytes=_VMEM_LIMIT),
    )(hp, w3p, b3p, ebp)
    return q[:M, :D], loss


# ----------------------------------------------------------------------------
# Conv layers (plain-JAX layout glue around the Pallas matmuls)
# ----------------------------------------------------------------------------
def _im2col(x, K, stride):
    """x: padded NHWC -> (N*Ho*Wo, K*K*C) with (kh, kw, c) column ordering."""
    N, Hp, Wp, C = x.shape
    Ho = (Hp - K) // stride + 1
    Wo = (Wp - K) // stride + 1
    patches = []
    for kh in range(K):
        for kw in range(K):
            patches.append(
                x[:, kh:kh + stride * (Ho - 1) + 1:stride,
                     kw:kw + stride * (Wo - 1) + 1:stride, :])
    cols = jnp.concatenate(patches, axis=-1)
    return cols.reshape(N * Ho * Wo, K * K * C), (N, Ho, Wo)


def conv2d(x, w, b, *, stride, pad, relu):
    """x: NHWC; w: torch Conv2d layout (O, I, K, K)."""
    O, I, K, _ = w.shape
    xp = jnp.pad(x, ((0, 0), (pad, pad), (pad, pad), (0, 0)))
    cols, (N, Ho, Wo) = _im2col(xp, K, stride)
    w_mat = jnp.transpose(w, (2, 3, 1, 0)).reshape(K * K * I, O)
    out = matmul_bias(cols, w_mat, b, relu=relu)
    return out.reshape(N, Ho, Wo, O)


def conv_transpose2d_s2(x, w, b, *, relu):
    """ConvTranspose2d(K=3, stride=2, padding=1, output_padding=1) in NHWC via
    a one-shot sub-pixel decomposition: a single (M, 4*Cin) x (4*Cin, 4*Cout)
    matmul (no zero-dilated tensor), then depth-to-space.  w: torch
    ConvTranspose2d layout (Cin, Cout, 3, 3)."""
    N, H, W, Cin = x.shape
    Cout = w.shape[1]

    # shifted input views (zero beyond the bottom/right edge)
    xp = jnp.pad(x, ((0, 0), (0, 1), (0, 1), (0, 0)))
    A = xp[:, 1:H + 1, 1:W + 1, :]     # x[i+1, j+1]
    B = xp[:, 1:H + 1, 0:W, :]         # x[i+1, j]
    C = xp[:, 0:H, 1:W + 1, :]         # x[i,   j+1]
    D = x                              # x[i,   j]
    cols = jnp.concatenate([A, B, C, D], axis=-1).reshape(N * H * W, 4 * Cin)

    # phase-packed weight matrix; output phase p = 2*(oh%2) + (ow%2)
    Z = jnp.zeros((Cin, Cout), w.dtype)
    Wk = lambda kh, kw: w[:, :, kh, kw]
    wmat = jnp.concatenate([
        jnp.concatenate([Z,        Z,        Z,        Wk(0, 0)], axis=1),  # A
        jnp.concatenate([Z,        Z,        Wk(0, 1), Wk(0, 2)], axis=1),  # B
        jnp.concatenate([Z,        Wk(1, 0), Z,        Wk(2, 0)], axis=1),  # C
        jnp.concatenate([Wk(1, 1), Wk(1, 2), Wk(2, 1), Wk(2, 2)], axis=1),  # D
    ], axis=0)                                          # (4*Cin, 4*Cout)
    bmat = jnp.tile(b, 4)                               # (4*Cout,)

    out = matmul_bias(cols, wmat, bmat, relu=relu)      # (N*H*W, 4*Cout)
    out = out.reshape(N, H, W, 2, 2, Cout)
    out = jnp.transpose(out, (0, 1, 3, 2, 4, 5)).reshape(N, 2 * H, 2 * W, Cout)
    return out


def conv_transpose2d_s1_mse(x, w, b, target_nhwc, *, padding=1):
    """ConvTranspose2d(K=3, stride=1, padding) fused with mse(recon, target).
    Only the scalar MSE is produced (training forward never needs x_recon)."""
    I, O, K, _ = w.shape
    p = K - 1 - padding
    xp = jnp.pad(x, ((0, 0), (p, p), (p, p), (0, 0)))
    # equivalent regular conv: flip spatially, swap in/out channels
    w_conv = jnp.transpose(jnp.flip(w, axis=(2, 3)), (1, 0, 2, 3))  # (O,I,K,K)
    cols, (N, Ho, Wo) = _im2col(xp, K, 1)
    w_mat = jnp.transpose(w_conv, (2, 3, 1, 0)).reshape(K * K * I, O)
    tgt = target_nhwc.reshape(N * Ho * Wo, O)
    return matmul_bias_mse(cols, w_mat, b, tgt)


# ----------------------------------------------------------------------------
# VQ-VAE forward (training mode -> scalar loss, like the PyTorch module default)
# ----------------------------------------------------------------------------
def vqvae_forward(x_nhwc, params, *, commitment_cost, data_variance):
    # Encoder (two stride-2 convs)
    # TODO(synk): im2col for these two convs is still materialized in plain JAX
    # glue rather than fused into the kernel's index_map.
    h = conv2d(x_nhwc, params["enc_w1"], params["enc_b1"], stride=2, pad=1, relu=True)
    h = conv2d(h, params["enc_w2"], params["enc_b2"], stride=2, pad=1, relu=True)

    # Fused 1x1 conv (encoder layer 3) + vector quantizer
    N, Hz, Wz, Ch = h.shape
    D = params["codebook"].shape[1]
    q_flat, vq_loss = enc1x1_vq(h.reshape(N * Hz * Wz, Ch),
                                params["enc_w3"], params["enc_b3"],
                                params["codebook"], commitment_cost)
    e = q_flat.reshape(N, Hz, Wz, D)

    # Decoder: two sub-pixel stride-2 transpose convs, then the final stride-1
    # transpose conv fused with the reconstruction MSE.
    d = conv_transpose2d_s2(e, params["dec_w1"], params["dec_b1"], relu=True)
    d = conv_transpose2d_s2(d, params["dec_w2"], params["dec_b2"], relu=True)
    recon_mse = conv_transpose2d_s1_mse(d, params["dec_w3"], params["dec_b3"],
                                        x_nhwc, padding=1)

    # TODO(synk): .detach()/straight-through only changes gradients; the
    # training-mode forward value is exact.
    return vq_loss[0, 0] + recon_mse[0, 0] / data_variance


# ----------------------------------------------------------------------------
# Deterministic parameter init (shapes from the PyTorch module __init__)
# ----------------------------------------------------------------------------
def init_params(key, in_dim, embedding_dim, num_embeddings):
    ks = jax.random.split(key, 13)

    def u(k, shape, fan_in):
        bound = 1.0 / float(fan_in) ** 0.5
        return jax.random.uniform(k, shape, jnp.float32, -bound, bound)

    p = {}
    # Encoder: Conv2d(in,32,3,s2,p1) -> Conv2d(32,64,3,s2,p1) -> Conv2d(64,D,1)
    p["enc_w1"] = u(ks[0], (32, in_dim, 3, 3), in_dim * 9)
    p["enc_b1"] = u(ks[1], (32,), in_dim * 9)
    p["enc_w2"] = u(ks[2], (64, 32, 3, 3), 32 * 9)
    p["enc_b2"] = u(ks[3], (64,), 32 * 9)
    p["enc_w3"] = u(ks[4], (embedding_dim, 64, 1, 1), 64)
    p["enc_b3"] = u(ks[5], (embedding_dim,), 64)
    # Codebook: uniform(-1/K, 1/K)
    p["codebook"] = jax.random.uniform(
        ks[6], (num_embeddings, embedding_dim), jnp.float32,
        -1.0 / num_embeddings, 1.0 / num_embeddings)
    # Decoder: ConvT(D,64,3,s2,p1,op1) -> ConvT(64,32,3,s2,p1,op1) -> ConvT(32,in,3,p1)
    p["dec_w1"] = u(ks[7], (embedding_dim, 64, 3, 3), 64 * 9)
    p["dec_b1"] = u(ks[8], (64,), 64 * 9)
    p["dec_w2"] = u(ks[9], (64, 32, 3, 3), 32 * 9)
    p["dec_b2"] = u(ks[10], (32,), 32 * 9)
    p["dec_w3"] = u(ks[11], (32, in_dim, 3, 3), in_dim * 9)
    p["dec_b3"] = u(ks[12], (in_dim,), in_dim * 9)
    return p


if __name__ == "__main__":
    IN_DIM = 3
    EMBEDDING_DIM = 16
    NUM_EMBEDDINGS = 64
    COMMITMENT_COST = 0.25
    DATA_VARIANCE = 0.5

    key = jax.random.PRNGKey(0)
    k_x, k_p = jax.random.split(key)

    # PyTorch-convention input (NCHW), converted once to NHWC for the kernels.
    x_nchw = jax.random.normal(k_x, (2, IN_DIM, 16, 16), jnp.float32)
    x_nhwc = jnp.transpose(x_nchw, (0, 2, 3, 1))

    params = init_params(k_p, IN_DIM, EMBEDDING_DIM, NUM_EMBEDDINGS)

    fwd = jax.jit(functools.partial(
        vqvae_forward, commitment_cost=COMMITMENT_COST, data_variance=DATA_VARIANCE))
    loss = fwd(x_nhwc, params)
    jax.block_until_ready(loss)
    assert loss.shape == () and jnp.isfinite(loss)
    print("KERNEL_OK")
</pallas_src>

<mosaic_0001>
module attributes {stable_mosaic.version = 11 : i64} {
  func.func @_mm_bias_single_kernel(%arg0: i32, %arg1: i32, %arg2: memref<128x32xf32, #tpu.memory_space<vmem>>, %arg3: memref<32x128xf32, #tpu.memory_space<vmem>>, %arg4: memref<1x128xf32, #tpu.memory_space<vmem>>, %arg5: memref<128x128xf32, #tpu.memory_space<vmem>>) attributes {dimension_semantics = [#tpu.dimension_semantics<parallel>, #tpu.dimension_semantics<parallel>], iteration_bounds = array<i64: 1, 1>, scalar_prefetch = 0 : i64, scratch_operands = 0 : i64, tpu.core_type = #tpu.core_type<tc>, window_params = [{transform_indices = @transform_0, window_bounds = array<i64: 128, 32>}, {transform_indices = @transform_1, window_bounds = array<i64: 32, 128>}, {transform_indices = @transform_2, window_bounds = array<i64: 1, 128>}, {transform_indices = @transform_3, window_bounds = array<i64: 128, 128>}]} {
    %c0 = arith.constant 0 : index
    %c0_0 = arith.constant 0 : index
    %0 = vector.load %arg2[%c0, %c0_0] : memref<128x32xf32, #tpu.memory_space<vmem>>, vector<128x32xf32>
    %c0_1 = arith.constant 0 : index
    %c0_2 = arith.constant 0 : index
    %1 = vector.load %arg3[%c0_1, %c0_2] : memref<32x128xf32, #tpu.memory_space<vmem>>, vector<32x128xf32>
    %cst = arith.constant dense<0.000000e+00> : vector<128x128xf32>
    %2 = tpu.matmul %0, %1, %cst {dimension_numbers = #tpu.dot_dimension_numbers<[1], [0], [0], [1], [0, 0, 1, 1], [], []>} : vector<128x32xf32>, vector<32x128xf32>, vector<128x128xf32> -> vector<128x128xf32>
    %c0_3 = arith.constant 0 : index
    %c0_4 = arith.constant 0 : index
    %3 = vector.load %arg4[%c0_3, %c0_4] : memref<1x128xf32, #tpu.memory_space<vmem>>, vector<1x128xf32>
    %4 = vector.broadcast %3 : vector<1x128xf32> to vector<128x128xf32>
    %5 = arith.addf %2, %4 : vector<128x128xf32>
    %cst_5 = arith.constant 0.000000e+00 : f32
    %6 = vector.broadcast %cst_5 : f32 to vector<128x128xf32>
    %7 = arith.maximumf %5, %6 : vector<128x128xf32>
    %c0_6 = arith.constant 0 : index
    %c0_7 = arith.constant 0 : index
    %8 = vector.load %arg5[%c0_6, %c0_7] : memref<128x128xf32, #tpu.memory_space<vmem>>, vector<128x128xf32>
    tpu.vector_store %arg5[%c0_6, %c0_7], %7 {strides = array<i32>} : memref<128x128xf32, #tpu.memory_space<vmem>>, vector<128x128xf32>,
    return
  }
  func.func @transform_0(%arg0: i32, %arg1: i32) -> (i32, i32) {
    %c0_i32 = arith.constant 0 : i32
    %c0_i32_0 = arith.constant 0 : i32
    return %arg0, %c0_i32 : i32, i32
  }
  func.func @transform_1(%arg0: i32, %arg1: i32) -> (i32, i32) {
    %c0_i32 = arith.constant 0 : i32
    %c0_i32_0 = arith.constant 0 : i32
    return %c0_i32, %arg1 : i32, i32
  }
  func.func @transform_2(%arg0: i32, %arg1: i32) -> (i32, i32) {
    %c0_i32 = arith.constant 0 : i32
    %c0_i32_0 = arith.constant 0 : i32
    return %c0_i32, %arg1 : i32, i32
  }
  func.func @transform_3(%arg0: i32, %arg1: i32) -> (i32, i32) {
    %c0_i32 = arith.constant 0 : i32
    return %arg0, %arg1 : i32, i32
  }
}

module attributes {stable_mosaic.version = 11 : i64} {
  func.func @_mm_bias_single_kernel(%arg0: i32, %arg1: i32, %arg2: memref<32x288xf32, #tpu.memory_space<vmem>>, %arg3: memref<288x128xf32, #tpu.memory_space<vmem>>, %arg4: memref<1x128xf32, #tpu.memory_space<vmem>>, %arg5: memref<32x128xf32, #tpu.memory_space<vmem>>) attributes {dimension_semantics = [#tpu.dimension_semantics<parallel>, #tpu.dimension_semantics<parallel>], iteration_bounds = array<i64: 1, 1>, scalar_prefetch = 0 : i64, scratch_operands = 0 : i64, tpu.core_type = #tpu.core_type<tc>, window_params = [{transform_indices = @transform_0, window_bounds = array<i64: 32, 288>}, {transform_indices = @transform_1, window_bounds = array<i64: 288, 128>}, {transform_indices = @transform_2, window_bounds = array<i64: 1, 128>}, {transform_indices = @transform_3, window_bounds = array<i64: 32, 128>}]} {
    %c0 = arith.constant 0 : index
    %c0_0 = arith.constant 0 : index
    %0 = vector.load %arg2[%c0, %c0_0] : memref<32x288xf32, #tpu.memory_space<vmem>>, vector<32x288xf32>
    %c0_1 = arith.constant 0 : index
    %c0_2 = arith.constant 0 : index
    %1 = vector.load %arg3[%c0_1, %c0_2] : memref<288x128xf32, #tpu.memory_space<vmem>>, vector<288x128xf32>
    %cst = arith.constant dense<0.000000e+00> : vector<32x128xf32>
    %2 = tpu.matmul %0, %1, %cst {dimension_numbers = #tpu.dot_dimension_numbers<[1], [0], [0], [1], [0, 0, 1, 1], [], []>} : vector<32x288xf32>, vector<288x128xf32>, vector<32x128xf32> -> vector<32x128xf32>
    %c0_3 = arith.constant 0 : index
    %c0_4 = arith.constant 0 : index
    %3 = vector.load %arg4[%c0_3, %c0_4] : memref<1x128xf32, #tpu.memory_space<vmem>>, vector<1x128xf32>
    %4 = vector.broadcast %3 : vector<1x128xf32> to vector<32x128xf32>
    %5 = arith.addf %2, %4 : vector<32x128xf32>
    %cst_5 = arith.constant 0.000000e+00 : f32
    %6 = vector.broadcast %cst_5 : f32 to vector<32x128xf32>
    %7 = arith.maximumf %5, %6 : vector<32x128xf32>
    %c0_6 = arith.constant 0 : index
    %c0_7 = arith.constant 0 : index
    %8 = vector.load %arg5[%c0_6, %c0_7] : memref<32x128xf32, #tpu.memory_space<vmem>>, vector<32x128xf32>
    tpu.vector_store %arg5[%c0_6, %c0_7], %7 {strides = array<i32>} : memref<32x128xf32, #tpu.memory_space<vmem>>, vector<32x128xf32>,
    return
  }
  func.func @transform_0(%arg0: i32, %arg1: i32) -> (i32, i32) {
    %c0_i32 = arith.constant 0 : i32
    %c0_i32_0 = arith.constant 0 : i32
    return %arg0, %c0_i32 : i32, i32
  }
  func.func @transform_1(%arg0: i32, %arg1: i32) -> (i32, i32) {
    %c0_i32 = arith.constant 0 : i32
    %c0_i32_0 = arith.constant 0 : i32
    return %c0_i32, %arg1 : i32, i32
  }
  func.func @transform_2(%arg0: i32, %arg1: i32) -> (i32, i32) {
    %c0_i32 = arith.constant 0 : i32
    %c0_i32_0 = arith.constant 0 : i32
    return %c0_i32, %arg1 : i32, i32
  }
  func.func @transform_3(%arg0: i32, %arg1: i32) -> (i32, i32) {
    %c0_i32 = arith.constant 0 : i32
    return %arg0, %arg1 : i32, i32
  }
}

module attributes {stable_mosaic.version = 11 : i64} {
  func.func @_enc1x1_vq_kernel(%arg0: i32, %arg1: memref<32x64xf32, #tpu.memory_space<vmem>>, %arg2: memref<64x128xf32, #tpu.memory_space<vmem>>, %arg3: memref<1x128xf32, #tpu.memory_space<vmem>>, %arg4: memref<128x128xf32, #tpu.memory_space<vmem>>, %arg5: memref<32x128xf32, #tpu.memory_space<vmem>>, %arg6: memref<1x1xf32, #tpu.memory_space<smem>>, %arg7: memref<1xf32, #tpu.memory_space<smem>>) attributes {dimension_semantics = [#tpu.dimension_semantics<arbitrary>], iteration_bounds = array<i64: 1>, scalar_prefetch = 0 : i64, scratch_operands = 1 : i64, tpu.core_type = #tpu.core_type<tc>, window_params = [{transform_indices = @transform_0, window_bounds = array<i64: 32, 64>}, {pipeline_mode = #tpu.pipeline_mode<synchronous>, transform_indices = @transform_1, window_bounds = array<i64: 64, 128>}, {pipeline_mode = #tpu.pipeline_mode<synchronous>, transform_indices = @transform_2, window_bounds = array<i64: 1, 128>}, {pipeline_mode = #tpu.pipeline_mode<synchronous>, transform_indices = @transform_3, window_bounds = array<i64: 128, 128>}, {transform_indices = @transform_4, window_bounds = array<i64: 32, 128>}, {transform_indices = @transform_5, window_bounds = array<i64: 1, 1>}]} {
    %c0_i32 = arith.constant 0 : i32
    %0 = arith.cmpi eq, %arg0, %c0_i32 : i32
    %1 = arith.extui %0 : i1 to i32
    %c0_i32_0 = arith.constant 0 : i32
    %2 = arith.cmpi ne, %1, %c0_i32_0 : i32
    scf.if %2 {
      %cst_25 = arith.constant 0.000000e+00 : f32
      %c0_26 = arith.constant 0 : index
      %63 = memref.load %arg7[%c0_26] : memref<1xf32, #tpu.memory_space<smem>>
      memref.store %cst_25, %arg7[%c0_26] : memref<1xf32, #tpu.memory_space<smem>>
    } else {
    }
    %c0 = arith.constant 0 : index
    %c0_1 = arith.constant 0 : index
    %3 = vector.load %arg1[%c0, %c0_1] : memref<32x64xf32, #tpu.memory_space<vmem>>, vector<32x64xf32>
    %c0_2 = arith.constant 0 : index
    %c0_3 = arith.constant 0 : index
    %4 = vector.load %arg2[%c0_2, %c0_3] : memref<64x128xf32, #tpu.memory_space<vmem>>, vector<64x128xf32>
    %cst = arith.constant dense<0.000000e+00> : vector<32x128xf32>
    %5 = tpu.matmul %3, %4, %cst {dimension_numbers = #tpu.dot_dimension_numbers<[1], [0], [0], [1], [0, 0, 1, 1], [], []>} : vector<32x64xf32>, vector<64x128xf32>, vector<32x128xf32> -> vector<32x128xf32>
    %c0_4 = arith.constant 0 : index
    %c0_5 = arith.constant 0 : index
    %6 = vector.load %arg3[%c0_4, %c0_5] : memref<1x128xf32, #tpu.memory_space<vmem>>, vector<1x128xf32>
    %7 = vector.broadcast %6 : vector<1x128xf32> to vector<32x128xf32>
    %8 = arith.addf %5, %7 : vector<32x128xf32>
    %c0_6 = arith.constant 0 : index
    %c0_7 = arith.constant 0 : index
    %9 = vector.load %arg4[%c0_6, %c0_7] : memref<128x128xf32, #tpu.memory_space<vmem>>, vector<128x128xf32>
    %10 = arith.mulf %8, %8 : vector<32x128xf32>
    %cst_8 = arith.constant dense<0.000000e+00> : vector<32xf32>
    %11 = vector.multi_reduction <add>, %10, %cst_8 [1] : vector<32x128xf32> to vector<32xf32>
    %12 = vector.shape_cast %11 : vector<32xf32> to vector<32x1xf32>
    %13 = arith.mulf %9, %9 : vector<128x128xf32>
    %cst_9 = arith.constant dense<0.000000e+00> : vector<128xf32>
    %14 = vector.multi_reduction <add>, %13, %cst_9 [1] : vector<128x128xf32> to vector<128xf32>
    %15 = vector.shape_cast %14 : vector<128xf32> to vector<1x128xf32>
    %16 = tpu.transpose %9, [1, 0] : vector<128x128xf32> -> vector<128x128xf32>
    %cst_10 = arith.constant dense<0.000000e+00> : vector<32x128xf32>
    %17 = tpu.matmul %8, %16, %cst_10 {dimension_numbers = #tpu.dot_dimension_numbers<[1], [0], [0], [1], [0, 0, 1, 1], [], []>} : vector<32x128xf32>, vector<128x128xf32>, vector<32x128xf32> -> vector<32x128xf32>
    %18 = vector.broadcast %12 : vector<32x1xf32> to vector<32x128xf32>
    %19 = vector.broadcast %15 : vector<1x128xf32> to vector<32x128xf32>
    %20 = arith.addf %18, %19 : vector<32x128xf32>
    %cst_11 = arith.constant 2.000000e+00 : f32
    %21 = vector.broadcast %cst_11 : f32 to vector<32x128xf32>
    %22 = arith.mulf %21, %17 : vector<32x128xf32>
    %23 = arith.subf %20, %22 : vector<32x128xf32>
    %24 = tpu.iota {dimensions = array<i32: 1>} : vector<32x128xi32>
    %c64_i32 = arith.constant 64 : i32
    %25 = vector.broadcast %c64_i32 : i32 to vector<32x128xi32>
    %26 = arith.cmpi slt, %24, %25 : vector<32x128xi32>
    %cst_12 = arith.constant 0x7F800000 : f32
    %27 = vector.broadcast %cst_12 : f32 to vector<32x128xf32>
    %28 = arith.select %26, %23, %27 : vector<32x128xi1>, vector<32x128xf32>
    %cst_13 = arith.constant dense<0x7F800000> : vector<32xf32>
    %29 = vector.multi_reduction <minimumf>, %28, %cst_13 [1] : vector<32x128xf32> to vector<32xf32>
    %30 = vector.shape_cast %29 : vector<32xf32> to vector<32x1xf32>
    %31 = vector.broadcast %30 : vector<32x1xf32> to vector<32x128xf32>
    %32 = arith.cmpf oeq, %28, %31 : vector<32x128xf32>
    %c128_i32 = arith.constant 128 : i32
    %33 = vector.broadcast %c128_i32 : i32 to vector<32x128xi32>
    %34 = arith.select %32, %24, %33 : vector<32x128xi1>, vector<32x128xi32>
    %cst_14 = arith.constant dense<2147483647> : vector<32xi32>
    %35 = vector.multi_reduction <minsi>, %34, %cst_14 [1] : vector<32x128xi32> to vector<32xi32>
    %36 = vector.shape_cast %35 : vector<32xi32> to vector<32x1xi32>
    %37 = vector.broadcast %36 : vector<32x1xi32> to vector<32x128xi32>
    %38 = arith.cmpi eq, %24, %37 : vector<32x128xi32>
    %39 = arith.extui %38 : vector<32x128xi1> to vector<32x128xi32>
    %40 = arith.sitofp %39 : vector<32x128xi32> to vector<32x128xf32>
    %cst_15 = arith.constant dense<0.000000e+00> : vector<32x128xf32>
    %41 = tpu.matmul %40, %9, %cst_15 {dimension_numbers = #tpu.dot_dimension_numbers<[1], [0], [0], [1], [0, 0, 1, 1], [], []>} : vector<32x128xf32>, vector<128x128xf32>, vector<32x128xf32> -> vector<32x128xf32>
    %c32_i32 = arith.constant 32 : i32
    %42 = arith.muli %arg0, %c32_i32 : i32
    %43 = tpu.iota {dimensions = array<i32: 0>} : vector<32x128xi32>
    %44 = vector.broadcast %42 : i32 to vector<32x128xi32>
    %45 = arith.addi %44, %43 : vector<32x128xi32>
    %c32_i32_16 = arith.constant 32 : i32
    %46 = vector.broadcast %c32_i32_16 : i32 to vector<32x128xi32>
    %47 = arith.cmpi slt, %45, %46 : vector<32x128xi32>
    %48 = arith.subf %41, %8 : vector<32x128xf32>
    %cst_17 = arith.constant 0.000000e+00 : f32
    %49 = vector.broadcast %cst_17 : f32 to vector<32x128xf32>
    %50 = arith.select %47, %48, %49 : vector<32x128xi1>, vector<32x128xf32>
    %c0_18 = arith.constant 0 : index
    %51 = memref.load %arg7[%c0_18] : memref<1xf32, #tpu.memory_space<smem>>
    %52 = arith.mulf %50, %50 : vector<32x128xf32>
    %53 = vector.shape_cast %52 : vector<32x128xf32> to vector<1x32x128xf32>
    %cst_19 = arith.constant dense<0.000000e+00> : vector<1xf32>
    %54 = vector.multi_reduction <add>, %53, %cst_19 [1, 2] : vector<1x32x128xf32> to vector<1xf32>
    %55 = vector.shape_cast %54 : vector<1xf32> to vector<1x1x1xf32>
    %56 = vector.extract %55[0, 0, 0] : f32 from vector<1x1x1xf32>
    %57 = arith.addf %51, %56 : f32
    %c0_20 = arith.constant 0 : index
    %58 = memref.load %arg7[%c0_20] : memref<1xf32, #tpu.memory_space<smem>>
    memref.store %57, %arg7[%c0_20] : memref<1xf32, #tpu.memory_space<smem>>
    %c0_21 = arith.constant 0 : index
    %c0_22 = arith.constant 0 : index
    %59 = vector.load %arg5[%c0_21, %c0_22] : memref<32x128xf32, #tpu.memory_space<vmem>>, vector<32x128xf32>
    tpu.vector_store %arg5[%c0_21, %c0_22], %41 {strides = array<i32>} : memref<32x128xf32, #tpu.memory_space<vmem>>, vector<32x128xf32>,
    %c0_i32_23 = arith.constant 0 : i32
    %60 = arith.cmpi eq, %arg0, %c0_i32_23 : i32
    %61 = arith.extui %60 : i1 to i32
    %c0_i32_24 = arith.constant 0 : i32
    %62 = arith.cmpi ne, %61, %c0_i32_24 : i32
    scf.if %62 {
      %c0_25 = arith.constant 0 : index
      %63 = memref.load %arg7[%c0_25] : memref<1xf32, #tpu.memory_space<smem>>
      %cst_26 = arith.constant 0.00244140625 : f32
      %64 = arith.mulf %cst_26, %63 : f32
      %c0_27 = arith.constant 0 : index
      %c0_28 = arith.constant 0 : index
      %65 = memref.load %arg6[%c0_27, %c0_28] : memref<1x1xf32, #tpu.memory_space<smem>>
      memref.store %64, %arg6[%c0_27, %c0_28] : memref<1x1xf32, #tpu.memory_space<smem>>
    } else {
    }
    return
  }
  func.func @transform_0(%arg0: i32) -> (i32, i32) {
    %c0_i32 = arith.constant 0 : i32
    %c0_i32_0 = arith.constant 0 : i32
    return %arg0, %c0_i32 : i32, i32
  }
  func.func @transform_1(%arg0: i32) -> (i32, i32) {
    %c0_i32 = arith.constant 0 : i32
    %c0_i32_0 = arith.constant 0 : i32
    %c0_i32_1 = arith.constant 0 : i32
    return %c0_i32, %c0_i32_0 : i32, i32
  }
  func.func @transform_2(%arg0: i32) -> (i32, i32) {
    %c0_i32 = arith.constant 0 : i32
    %c0_i32_0 = arith.constant 0 : i32
    %c0_i32_1 = arith.constant 0 : i32
    return %c0_i32, %c0_i32_0 : i32, i32
  }
  func.func @transform_3(%arg0: i32) -> (i32, i32) {
    %c0_i32 = arith.constant 0 : i32
    %c0_i32_0 = arith.constant 0 : i32
    %c0_i32_1 = arith.constant 0 : i32
    return %c0_i32, %c0_i32_0 : i32, i32
  }
  func.func @transform_4(%arg0: i32) -> (i32, i32) {
    %c0_i32 = arith.constant 0 : i32
    %c0_i32_0 = arith.constant 0 : i32
    return %arg0, %c0_i32 : i32, i32
  }
  func.func @transform_5(%arg0: i32) -> (i32, i32) {
    %c0_i32 = arith.constant 0 : i32
    %c0_i32_0 = arith.constant 0 : i32
    %c0_i32_1 = arith.constant 0 : i32
    return %c0_i32, %c0_i32_0 : i32, i32
  }
}

module attributes {stable_mosaic.version = 11 : i64} {
  func.func @_mm_bias_single_kernel(%arg0: i32, %arg1: i32, %arg2: memref<32x64xf32, #tpu.memory_space<vmem>>, %arg3: memref<64x256xf32, #tpu.memory_space<vmem>>, %arg4: memref<1x256xf32, #tpu.memory_space<vmem>>, %arg5: memref<32x256xf32, #tpu.memory_space<vmem>>) attributes {dimension_semantics = [#tpu.dimension_semantics<parallel>, #tpu.dimension_semantics<parallel>], iteration_bounds = array<i64: 1, 1>, scalar_prefetch = 0 : i64, scratch_operands = 0 : i64, tpu.core_type = #tpu.core_type<tc>, window_params = [{transform_indices = @transform_0, window_bounds = array<i64: 32, 64>}, {transform_indices = @transform_1, window_bounds = array<i64: 64, 256>}, {transform_indices = @transform_2, window_bounds = array<i64: 1, 256>}, {transform_indices = @transform_3, window_bounds = array<i64: 32, 256>}]} {
    %c0 = arith.constant 0 : index
    %c0_0 = arith.constant 0 : index
    %0 = vector.load %arg2[%c0, %c0_0] : memref<32x64xf32, #tpu.memory_space<vmem>>, vector<32x64xf32>
    %c0_1 = arith.constant 0 : index
    %c0_2 = arith.constant 0 : index
    %1 = vector.load %arg3[%c0_1, %c0_2] : memref<64x256xf32, #tpu.memory_space<vmem>>, vector<64x256xf32>
    %cst = arith.constant dense<0.000000e+00> : vector<32x256xf32>
    %2 = tpu.matmul %0, %1, %cst {dimension_numbers = #tpu.dot_dimension_numbers<[1], [0], [0], [1], [0, 0, 1, 1], [], []>} : vector<32x64xf32>, vector<64x256xf32>, vector<32x256xf32> -> vector<32x256xf32>
    %c0_3 = arith.constant 0 : index
    %c0_4 = arith.constant 0 : index
    %3 = vector.load %arg4[%c0_3, %c0_4] : memref<1x256xf32, #tpu.memory_space<vmem>>, vector<1x256xf32>
    %4 = vector.broadcast %3 : vector<1x256xf32> to vector<32x256xf32>
    %5 = arith.addf %2, %4 : vector<32x256xf32>
    %cst_5 = arith.constant 0.000000e+00 : f32
    %6 = vector.broadcast %cst_5 : f32 to vector<32x256xf32>
    %7 = arith.maximumf %5, %6 : vector<32x256xf32>
    %c0_6 = arith.constant 0 : index
    %c0_7 = arith.constant 0 : index
    %8 = vector.load %arg5[%c0_6, %c0_7] : memref<32x256xf32, #tpu.memory_space<vmem>>, vector<32x256xf32>
    tpu.vector_store %arg5[%c0_6, %c0_7], %7 {strides = array<i32>} : memref<32x256xf32, #tpu.memory_space<vmem>>, vector<32x256xf32>,
    return
  }
  func.func @transform_0(%arg0: i32, %arg1: i32) -> (i32, i32) {
    %c0_i32 = arith.constant 0 : i32
    %c0_i32_0 = arith.constant 0 : i32
    return %arg0, %c0_i32 : i32, i32
  }
  func.func @transform_1(%arg0: i32, %arg1: i32) -> (i32, i32) {
    %c0_i32 = arith.constant 0 : i32
    %c0_i32_0 = arith.constant 0 : i32
    return %c0_i32, %arg1 : i32, i32
  }
  func.func @transform_2(%arg0: i32, %arg1: i32) -> (i32, i32) {
    %c0_i32 = arith.constant 0 : i32
    %c0_i32_0 = arith.constant 0 : i32
    return %c0_i32, %arg1 : i32, i32
  }
  func.func @transform_3(%arg0: i32, %arg1: i32) -> (i32, i32) {
    %c0_i32 = arith.constant 0 : i32
    return %arg0, %arg1 : i32, i32
  }
}

module attributes {stable_mosaic.version = 11 : i64} {
  func.func @_mm_bias_single_kernel(%arg0: i32, %arg1: i32, %arg2: memref<128x256xf32, #tpu.memory_space<vmem>>, %arg3: memref<256x128xf32, #tpu.memory_space<vmem>>, %arg4: memref<1x128xf32, #tpu.memory_space<vmem>>, %arg5: memref<128x128xf32, #tpu.memory_space<vmem>>) attributes {dimension_semantics = [#tpu.dimension_semantics<parallel>, #tpu.dimension_semantics<parallel>], iteration_bounds = array<i64: 1, 1>, scalar_prefetch = 0 : i64, scratch_operands = 0 : i64, tpu.core_type = #tpu.core_type<tc>, window_params = [{transform_indices = @transform_0, window_bounds = array<i64: 128, 256>}, {transform_indices = @transform_1, window_bounds = array<i64: 256, 128>}, {transform_indices = @transform_2, window_bounds = array<i64: 1, 128>}, {transform_indices = @transform_3, window_bounds = array<i64: 128, 128>}]} {
    %c0 = arith.constant 0 : index
    %c0_0 = arith.constant 0 : index
    %0 = vector.load %arg2[%c0, %c0_0] : memref<128x256xf32, #tpu.memory_space<vmem>>, vector<128x256xf32>
    %c0_1 = arith.constant 0 : index
    %c0_2 = arith.constant 0 : index
    %1 = vector.load %arg3[%c0_1, %c0_2] : memref<256x128xf32, #tpu.memory_space<vmem>>, vector<256x128xf32>
    %cst = arith.constant dense<0.000000e+00> : vector<128x128xf32>
    %2 = tpu.matmul %0, %1, %cst {dimension_numbers = #tpu.dot_dimension_numbers<[1], [0], [0], [1], [0, 0, 1, 1], [], []>} : vector<128x256xf32>, vector<256x128xf32>, vector<128x128xf32> -> vector<128x128xf32>
    %c0_3 = arith.constant 0 : index
    %c0_4 = arith.constant 0 : index
    %3 = vector.load %arg4[%c0_3, %c0_4] : memref<1x128xf32, #tpu.memory_space<vmem>>, vector<1x128xf32>
    %4 = vector.broadcast %3 : vector<1x128xf32> to vector<128x128xf32>
    %5 = arith.addf %2, %4 : vector<128x128xf32>
    %cst_5 = arith.constant 0.000000e+00 : f32
    %6 = vector.broadcast %cst_5 : f32 to vector<128x128xf32>
    %7 = arith.maximumf %5, %6 : vector<128x128xf32>
    %c0_6 = arith.constant 0 : index
    %c0_7 = arith.constant 0 : index
    %8 = vector.load %arg5[%c0_6, %c0_7] : memref<128x128xf32, #tpu.memory_space<vmem>>, vector<128x128xf32>
    tpu.vector_store %arg5[%c0_6, %c0_7], %7 {strides = array<i32>} : memref<128x128xf32, #tpu.memory_space<vmem>>, vector<128x128xf32>,
    return
  }
  func.func @transform_0(%arg0: i32, %arg1: i32) -> (i32, i32) {
    %c0_i32 = arith.constant 0 : i32
    %c0_i32_0 = arith.constant 0 : i32
    return %arg0, %c0_i32 : i32, i32
  }
  func.func @transform_1(%arg0: i32, %arg1: i32) -> (i32, i32) {
    %c0_i32 = arith.constant 0 : i32
    %c0_i32_0 = arith.constant 0 : i32
    return %c0_i32, %arg1 : i32, i32
  }
  func.func @transform_2(%arg0: i32, %arg1: i32) -> (i32, i32) {
    %c0_i32 = arith.constant 0 : i32
    %c0_i32_0 = arith.constant 0 : i32
    return %c0_i32, %arg1 : i32, i32
  }
  func.func @transform_3(%arg0: i32, %arg1: i32) -> (i32, i32) {
    %c0_i32 = arith.constant 0 : i32
    return %arg0, %arg1 : i32, i32
  }
}

module attributes {stable_mosaic.version = 11 : i64} {
  func.func @_mm_bias_mse_single_kernel(%arg0: i32, %arg1: i32, %arg2: memref<256x288xf32, #tpu.memory_space<vmem>>, %arg3: memref<288x128xf32, #tpu.memory_space<vmem>>, %arg4: memref<1x128xf32, #tpu.memory_space<vmem>>, %arg5: memref<256x128xf32, #tpu.memory_space<vmem>>, %arg6: memref<1x1xf32, #tpu.memory_space<smem>>, %arg7: memref<1xf32, #tpu.memory_space<smem>>) attributes {dimension_semantics = [#tpu.dimension_semantics<arbitrary>, #tpu.dimension_semantics<arbitrary>], iteration_bounds = array<i64: 2, 1>, scalar_prefetch = 0 : i64, scratch_operands = 1 : i64, tpu.core_type = #tpu.core_type<tc>, window_params = [{transform_indices = @transform_0, window_bounds = array<i64: 256, 288>}, {transform_indices = @transform_1, window_bounds = array<i64: 288, 128>}, {transform_indices = @transform_2, window_bounds = array<i64: 1, 128>}, {transform_indices = @transform_3, window_bounds = array<i64: 256, 128>}, {transform_indices = @transform_4, window_bounds = array<i64: 1, 1>}]} {
    %c0_i32 = arith.constant 0 : i32
    %0 = arith.cmpi eq, %arg0, %c0_i32 : i32
    %c0_i32_0 = arith.constant 0 : i32
    %1 = arith.cmpi eq, %arg1, %c0_i32_0 : i32
    %2 = arith.andi %0, %1 : i1
    %3 = arith.extui %2 : i1 to i32
    %c0_i32_1 = arith.constant 0 : i32
    %4 = arith.cmpi ne, %3, %c0_i32_1 : i32
    scf.if %4 {
      %cst_15 = arith.constant 0.000000e+00 : f32
      %c0_16 = arith.constant 0 : index
      %34 = memref.load %arg7[%c0_16] : memref<1xf32, #tpu.memory_space<smem>>
      memref.store %cst_15, %arg7[%c0_16] : memref<1xf32, #tpu.memory_space<smem>>
    } else {
    }
    %c0 = arith.constant 0 : index
    %c0_2 = arith.constant 0 : index
    %5 = vector.load %arg2[%c0, %c0_2] : memref<256x288xf32, #tpu.memory_space<vmem>>, vector<256x288xf32>
    %c0_3 = arith.constant 0 : index
    %c0_4 = arith.constant 0 : index
    %6 = vector.load %arg3[%c0_3, %c0_4] : memref<288x128xf32, #tpu.memory_space<vmem>>, vector<288x128xf32>
    %cst = arith.constant dense<0.000000e+00> : vector<256x128xf32>
    %7 = tpu.matmul %5, %6, %cst {dimension_numbers = #tpu.dot_dimension_numbers<[1], [0], [0], [1], [0, 0, 1, 1], [], []>} : vector<256x288xf32>, vector<288x128xf32>, vector<256x128xf32> -> vector<256x128xf32>
    %c0_5 = arith.constant 0 : index
    %c0_6 = arith.constant 0 : index
    %8 = vector.load %arg4[%c0_5, %c0_6] : memref<1x128xf32, #tpu.memory_space<vmem>>, vector<1x128xf32>
    %9 = vector.broadcast %8 : vector<1x128xf32> to vector<256x128xf32>
    %10 = arith.addf %7, %9 : vector<256x128xf32>
    %c0_7 = arith.constant 0 : index
    %c0_8 = arith.constant 0 : index
    %11 = vector.load %arg5[%c0_7, %c0_8] : memref<256x128xf32, #tpu.memory_space<vmem>>, vector<256x128xf32>
    %12 = arith.subf %10, %11 : vector<256x128xf32>
    %c256_i32 = arith.constant 256 : i32
    %13 = arith.muli %arg0, %c256_i32 : i32
    %14 = tpu.iota {dimensions = array<i32: 0>} : vector<256x128xi32>
    %15 = vector.broadcast %13 : i32 to vector<256x128xi32>
    %16 = arith.addi %15, %14 : vector<256x128xi32>
    %c512_i32 = arith.constant 512 : i32
    %17 = vector.broadcast %c512_i32 : i32 to vector<256x128xi32>
    %18 = arith.cmpi slt, %16, %17 : vector<256x128xi32>
    %cst_9 = arith.constant 0.000000e+00 : f32
    %19 = vector.broadcast %cst_9 : f32 to vector<256x128xf32>
    %20 = arith.select %18, %12, %19 : vector<256x128xi1>, vector<256x128xf32>
    %c0_10 = arith.constant 0 : index
    %21 = memref.load %arg7[%c0_10] : memref<1xf32, #tpu.memory_space<smem>>
    %22 = arith.mulf %20, %20 : vector<256x128xf32>
    %23 = vector.shape_cast %22 : vector<256x128xf32> to vector<1x256x128xf32>
    %cst_11 = arith.constant dense<0.000000e+00> : vector<1xf32>
    %24 = vector.multi_reduction <add>, %23, %cst_11 [1, 2] : vector<1x256x128xf32> to vector<1xf32>
    %25 = vector.shape_cast %24 : vector<1xf32> to vector<1x1x1xf32>
    %26 = vector.extract %25[0, 0, 0] : f32 from vector<1x1x1xf32>
    %27 = arith.addf %21, %26 : f32
    %c0_12 = arith.constant 0 : index
    %28 = memref.load %arg7[%c0_12] : memref<1xf32, #tpu.memory_space<smem>>
    memref.store %27, %arg7[%c0_12] : memref<1xf32, #tpu.memory_space<smem>>
    %c1_i32 = arith.constant 1 : i32
    %29 = arith.cmpi eq, %arg0, %c1_i32 : i32
    %c0_i32_13 = arith.constant 0 : i32
    %30 = arith.cmpi eq, %arg1, %c0_i32_13 : i32
    %31 = arith.andi %29, %30 : i1
    %32 = arith.extui %31 : i1 to i32
    %c0_i32_14 = arith.constant 0 : i32
    %33 = arith.cmpi ne, %32, %c0_i32_14 : i32
    scf.if %33 {
      %c0_15 = arith.constant 0 : index
      %34 = memref.load %arg7[%c0_15] : memref<1xf32, #tpu.memory_space<smem>>
      %cst_16 = arith.constant 6.51041686E-4 : f32
      %35 = arith.mulf %34, %cst_16 : f32
      %c0_17 = arith.constant 0 : index
      %c0_18 = arith.constant 0 : index
      %36 = memref.load %arg6[%c0_17, %c0_18] : memref<1x1xf32, #tpu.memory_space<smem>>
      memref.store %35, %arg6[%c0_17, %c0_18] : memref<1x1xf32, #tpu.memory_space<smem>>
    } else {
    }
    return
  }
  func.func @transform_0(%arg0: i32, %arg1: i32) -> (i32, i32) {
    %c0_i32 = arith.constant 0 : i32
    %c0_i32_0 = arith.constant 0 : i32
    return %arg0, %c0_i32 : i32, i32
  }
  func.func @transform_1(%arg0: i32, %arg1: i32) -> (i32, i32) {
    %c0_i32 = arith.constant 0 : i32
    %c0_i32_0 = arith.constant 0 : i32
    return %c0_i32, %arg1 : i32, i32
  }
  func.func @transform_2(%arg0: i32, %arg1: i32) -> (i32, i32) {
    %c0_i32 = arith.constant 0 : i32
    %c0_i32_0 = arith.constant 0 : i32
    return %c0_i32, %arg1 : i32, i32
  }
  func.func @transform_3(%arg0: i32, %arg1: i32) -> (i32, i32) {
    %c0_i32 = arith.constant 0 : i32
    return %arg0, %arg1 : i32, i32
  }
  func.func @transform_4(%arg0: i32, %arg1: i32) -> (i32, i32) {
    %c0_i32 = arith.constant 0 : i32
    %c0_i32_0 = arith.constant 0 : i32
    %c0_i32_1 = arith.constant 0 : i32
    return %c0_i32, %c0_i32_0 : i32, i32
  }
}

</mosaic_0001>

<llo_original>
// kernel: vqvae_forward.6
$region0: #{vqvae_forward.6}
  #allocation0 [shape = 'u32[]', space=smem, size = 0x4, offset = 0x4, fixed_abs, tag = 'smem constant byte address 0x4 - core index']
  #allocation1 [shape = 'u32[72,128]{1,0:T(1,128)}', space=vmem, size = 0x9000, scoped, tag = 'internal scratch']
  %s0 = inlined_call_operand.vmem [shape: f32[128,32], index: 0, kind: input, shape index: {}]
  %s1 = inlined_call_operand.vmem [shape: f32[32,128], index: 1, kind: input, shape index: {}]
  %s2 = inlined_call_operand.vmem [shape: f32[1,128], index: 2, kind: input, shape index: {}]
  %s3 = inlined_call_operand.vmem [shape: f32[128,128], index: 3, kind: output, shape index: {}]
  %s4 = sld [smem:[#allocation0]]
  $region22: #{vqvae_forward.6} parent=0
    _
  %s6 = ssub.s32 1, %s4
  %s7 = scalar_select 0, %s6, %s4
  // Predicated region
  $region2: #{vqvae_forward.6} parent=0 // pred_check
    _
  $region3: #{vqvae_forward.6} parent=0 // pred_check_branch
    %9 = sbr.rel (0) target = $region5
  $region4: #{vqvae_forward.6} parent=0 // pred_region
    _
  $region5: #{vqvae_forward.6} parent=0 // pred_fallthru
    _
  // Predicated region
  $region6: #{vqvae_forward.6} parent=0 // pred_check
    _
  $region7: #{vqvae_forward.6} parent=0 // pred_check_branch
    %11 = sbr.rel (0) target = $region9
  $region8: #{vqvae_forward.6} parent=0 // pred_region
    _
  $region9: #{vqvae_forward.6} parent=0 // pred_fallthru
    _
  // Predicated region
  $region10: #{vqvae_forward.6} parent=0 // pred_check
    _
  $region11: #{vqvae_forward.6} parent=0 // pred_check_branch
    %13 = sbr.rel (0) target = $region13
  $region12: #{vqvae_forward.6} parent=0 // pred_region
    _
  $region13: #{vqvae_forward.6} parent=0 // pred_fallthru
    _
  %v14 = vld [vmem:[%s0] sm:$0xff]
  %v15 = vld [vmem:[%s0 + $0x8] sm:$0xff]
  %v16 = vld [vmem:[%s0 + $0x10] sm:$0xff]
  %v17 = vld [vmem:[%s0 + $0x18] sm:$0xff]
  %v18 = vld [vmem:[%s0 + $0x20] sm:$0xff]
  %v19 = vld [vmem:[%s0 + $0x28] sm:$0xff]
  %v20 = vld [vmem:[%s0 + $0x30] sm:$0xff]
  %v21 = vld [vmem:[%s0 + $0x38] sm:$0xff]
  %v22 = vld [vmem:[%s0 + $0x40] sm:$0xff]
  %v23 = vld [vmem:[%s0 + $0x48] sm:$0xff]
  %v24 = vld [vmem:[%s0 + $0x50] sm:$0xff]
  %v25 = vld [vmem:[%s0 + $0x58] sm:$0xff]
  %v26 = vld [vmem:[%s0 + $0x60] sm:$0xff]
  %v27 = vld [vmem:[%s0 + $0x68] sm:$0xff]
  %v28 = vld [vmem:[%s0 + $0x70] sm:$0xff]
  %v29 = vld [vmem:[%s0 + $0x78] sm:$0xff]
  %v30 = vld [vmem:[%s1] sm:$0xff]
  %v31 = vld [vmem:[%s1 + $0x8] sm:$0xff]
  %v32 = vld [vmem:[%s1 + $0x10] sm:$0xff]
  %v33 = vld [vmem:[%s1 + $0x18] sm:$0xff]
  %v34 = vld [vmem:[%s2] sm:$0x1]
  %v36 = vperm.slane %v34, 0
  %vm38 = vcmask 261120
  %v40 = vsel %vm38, %v14, 0
  %v43 = vsel %vm38, %v15, 0
  %v46 = vsel %vm38, %v16, 0
  %v49 = vsel %vm38, %v17, 0
  %v52 = vsel %vm38, %v18, 0
  %v55 = vsel %vm38, %v19, 0
  %v58 = vsel %vm38, %v20, 0
  %v61 = vsel %vm38, %v21, 0
  %v64 = vsel %vm38, %v22, 0
  %v67 = vsel %vm38, %v23, 0
  %v70 = vsel %vm38, %v24, 0
  %v73 = vsel %vm38, %v25, 0
  %v76 = vsel %vm38, %v26, 0
  %v79 = vsel %vm38, %v27, 0
  %v82 = vsel %vm38, %v28, 0
  %v85 = vsel %vm38, %v29, 0
  %87 = vmatpush.msra.mxu0 0.0
  %88 = vmatpush.msra.mxu0 0.0
  %89 = vmatpush.msra.mxu0 0.0
  %90 = vmatpush.msra.mxu0 0.0
  %91 = vmatpush.msra.mxu0 0.0
  %92 = vmatpush.msra.mxu0 0.0
  %93 = vmatpush.msra.mxu0 0.0
  %94 = vmatpush.msra.mxu0 0.0
  %95 = vmatpush.msra.mxu0 0.0
  %96 = vmatpush.msra.mxu0 0.0
  %97 = vmatpush.msra.mxu0 0.0
  %98 = vmatpush.msra.mxu0 0.0
  %99 = vmatpush.msra.mxu0 %v33
  %100 = vmatpush.msra.mxu0 %v32
  %101 = vmatpush.msra.mxu0 %v31
  %102 = vmatpush.msra.mxu0 %v30
  %103 = vmatmul.f32.gmra.mxu0 %v40
  %v104 = vpop.f32.mrf.mxu0
  %v105 = vadd.f32 %v36, %v104
  %106 = vmatmul.f32.gmra.mxu0 %v43
  %v107 = vpop.f32.mrf.mxu0
  %v108 = vadd.f32 %v36, %v107
  %109 = vmatmul.f32.gmra.mxu0 %v46
  %v110 = vpop.f32.mrf.mxu0
  %v111 = vadd.f32 %v36, %v110
  %112 = vmatmul.f32.gmra.mxu0 %v49
  %v113 = vpop.f32.mrf.mxu0
  %v114 = vadd.f32 %v36, %v113
  %115 = vmatmul.f32.gmra.mxu0 %v52
  %v116 = vpop.f32.mrf.mxu0
  %v117 = vadd.f32 %v36, %v116
  %118 = vmatmul.f32.gmra.mxu0 %v55
  %v119 = vpop.f32.mrf.mxu0
  %v120 = vadd.f32 %v36, %v119
  %121 = vmatmul.f32.gmra.mxu0 %v58
  %v122 = vpop.f32.mrf.mxu0
  %v123 = vadd.f32 %v36, %v122
  %124 = vmatmul.f32.gmra.mxu0 %v61
  %v125 = vpop.f32.mrf.mxu0
  %v126 = vadd.f32 %v36, %v125
  %127 = vmatmul.f32.gmra.mxu0 %v64
  %v128 = vpop.f32.mrf.mxu0
  %v129 = vadd.f32 %v36, %v128
  %130 = vmatmul.f32.gmra.mxu0 %v67
  %v131 = vpop.f32.mrf.mxu0
  %v132 = vadd.f32 %v36, %v131
  %133 = vmatmul.f32.gmra.mxu0 %v70
  %v134 = vpop.f32.mrf.mxu0
  %v135 = vadd.f32 %v36, %v134
  %136 = vmatmul.f32.gmra.mxu0 %v73
  %v137 = vpop.f32.mrf.mxu0
  %v138 = vadd.f32 %v36, %v137
  %139 = vmatmul.f32.gmra.mxu0 %v76
  %v140 = vpop.f32.mrf.mxu0
  %v141 = vadd.f32 %v36, %v140
  %142 = vmatmul.f32.gmra.mxu0 %v79
  %v143 = vpop.f32.mrf.mxu0
  %v144 = vadd.f32 %v36, %v143
  %145 = vmatmul.f32.gmra.mxu0 %v82
  %v146 = vpop.f32.mrf.mxu0
  %v147 = vadd.f32 %v36, %v146
  %148 = vmatmul.f32.gmra.mxu0 %v85
  %v149 = vpop.f32.mrf.mxu0
  %v150 = vadd.f32 %v36, %v149
  %151 = vdwg.mxu0
  %v152 = vmax.f32 %v105, 0.0
  %v153 = vmax.f32 %v108, 0.0
  %v154 = vmax.f32 %v111, 0.0
  %v155 = vmax.f32 %v114, 0.0
  %v156 = vmax.f32 %v117, 0.0
  %v157 = vmax.f32 %v120, 0.0
  %v158 = vmax.f32 %v123, 0.0
  %v159 = vmax.f32 %v126, 0.0
  %v160 = vmax.f32 %v129, 0.0
  %v161 = vmax.f32 %v132, 0.0
  %v162 = vmax.f32 %v135, 0.0
  %v163 = vmax.f32 %v138, 0.0
  %v164 = vmax.f32 %v141, 0.0
  %v165 = vmax.f32 %v144, 0.0
  %v166 = vmax.f32 %v147, 0.0
  %v167 = vmax.f32 %v150, 0.0
  %168 = vst [vmem:[%s3] sm:$0xff] %v152
  %169 = vst [vmem:[%s3 + $0x8] sm:$0xff] %v153
  %170 = vst [vmem:[%s3 + $0x10] sm:$0xff] %v154
  %171 = vst [vmem:[%s3 + $0x18] sm:$0xff] %v155
  %172 = vst [vmem:[%s3 + $0x20] sm:$0xff] %v156
  %173 = vst [vmem:[%s3 + $0x28] sm:$0xff] %v157
  %174 = vst [vmem:[%s3 + $0x30] sm:$0xff] %v158
  %175 = vst [vmem:[%s3 + $0x38] sm:$0xff] %v159
  %176 = vst [vmem:[%s3 + $0x40] sm:$0xff] %v160
  %177 = vst [vmem:[%s3 + $0x48] sm:$0xff] %v161
  %178 = vst [vmem:[%s3 + $0x50] sm:$0xff] %v162
  %179 = vst [vmem:[%s3 + $0x58] sm:$0xff] %v163
  %180 = vst [vmem:[%s3 + $0x60] sm:$0xff] %v164
  %181 = vst [vmem:[%s3 + $0x68] sm:$0xff] %v165
  %182 = vst [vmem:[%s3 + $0x70] sm:$0xff] %v166
  %183 = vst [vmem:[%s3 + $0x78] sm:$0xff] %v167
  // Predicated region
  $region14: #{vqvae_forward.6} parent=0 // pred_check
    _
  $region15: #{vqvae_forward.6} parent=0 // pred_check_branch
    %185 = sbr.rel (0) target = $region17
  $region16: #{vqvae_forward.6} parent=0 // pred_region
    _
  $region17: #{vqvae_forward.6} parent=0 // pred_fallthru
    _
  // Predicated region
  $region18: #{vqvae_forward.6} parent=0 // pred_check
    _
  $region19: #{vqvae_forward.6} parent=0 // pred_check_branch
    %187 = sbr.rel (0) target = $region21
  $region20: #{vqvae_forward.6} parent=0 // pred_region
    _
  $region21: #{vqvae_forward.6} parent=0 // pred_fallthru
    _

// kernel: vqvae_forward.7
$region0: #{vqvae_forward.7}
  #allocation0 [shape = 'u32[]', space=smem, size = 0x4, offset = 0x4, fixed_abs, tag = 'smem constant byte address 0x4 - core index']
  #allocation1 [shape = 'u32[72,128]{1,0:T(1,128)}', space=vmem, size = 0x9000, scoped, tag = 'internal scratch']
  %s0 = inlined_call_operand.vmem [shape: f32[32,288], index: 0, kind: input, shape index: {}]
  %s1 = inlined_call_operand.vmem [shape: f32[288,128], index: 1, kind: input, shape index: {}]
  %s2 = inlined_call_operand.vmem [shape: f32[1,128], index: 2, kind: input, shape index: {}]
  %s3 = inlined_call_operand.vmem [shape: f32[32,128], index: 3, kind: output, shape index: {}]
  %s4 = sld [smem:[#allocation0]]
  $region22: #{vqvae_forward.7} parent=0
    _
  %s6 = ssub.s32 1, %s4
  %s7 = scalar_select 0, %s6, %s4
  // Predicated region
  $region2: #{vqvae_forward.7} parent=0 // pred_check
    _
  $region3: #{vqvae_forward.7} parent=0 // pred_check_branch
    %9 = sbr.rel (0) target = $region5
  $region4: #{vqvae_forward.7} parent=0 // pred_region
    _
  $region5: #{vqvae_forward.7} parent=0 // pred_fallthru
    _
  // Predicated region
  $region6: #{vqvae_forward.7} parent=0 // pred_check
    _
  $region7: #{vqvae_forward.7} parent=0 // pred_check_branch
    %11 = sbr.rel (0) target = $region9
  $region8: #{vqvae_forward.7} parent=0 // pred_region
    _
  $region9: #{vqvae_forward.7} parent=0 // pred_fallthru
    _
  // Predicated region
  $region10: #{vqvae_forward.7} parent=0 // pred_check
    _
  $region11: #{vqvae_forward.7} parent=0 // pred_check_branch
    %13 = sbr.rel (0) target = $region13
  $region12: #{vqvae_forward.7} parent=0 // pred_region
    _
  $region13: #{vqvae_forward.7} parent=0 // pred_fallthru
    _
  %v14 = vld [vmem:[%s0] sm:$0xff]
  %v15 = vld [vmem:[%s0 + $0x8] sm:$0xff]
  %v16 = vld [vmem:[%s0 + $0x10] sm:$0xff]
  %v17 = vld [vmem:[%s0 + $0x18] sm:$0xff]
  %v18 = vld [vmem:[%s0 + $0x20] sm:$0xff]
  %v19 = vld [vmem:[%s0 + $0x28] sm:$0xff]
  %v20 = vld [vmem:[%s0 + $0x30] sm:$0xff]
  %v21 = vld [vmem:[%s0 + $0x38] sm:$0xff]
  %v22 = vld [vmem:[%s0 + $0x40] sm:$0xff]
  %v23 = vld [vmem:[%s0 + $0x48] sm:$0xff]
  %v24 = vld [vmem:[%s0 + $0x50] sm:$0xff]
  %v25 = vld [vmem:[%s0 + $0x58] sm:$0xff]
  %v26 = vld [vmem:[%s1] sm:$0xff]
  %v27 = vld [vmem:[%s1 + $0x8] sm:$0xff]
  %v28 = vld [vmem:[%s1 + $0x10] sm:$0xff]
  %v29 = vld [vmem:[%s1 + $0x18] sm:$0xff]
  %v30 = vld [vmem:[%s1 + $0x20] sm:$0xff]
  %v31 = vld [vmem:[%s1 + $0x28] sm:$0xff]
  %v32 = vld [vmem:[%s1 + $0x30] sm:$0xff]
  %v33 = vld [vmem:[%s1 + $0x38] sm:$0xff]
  %v34 = vld [vmem:[%s1 + $0x40] sm:$0xff]
  %v35 = vld [vmem:[%s1 + $0x48] sm:$0xff]
  %v36 = vld [vmem:[%s1 + $0x50] sm:$0xff]
  %v37 = vld [vmem:[%s1 + $0x58] sm:$0xff]
  %v38 = vld [vmem:[%s1 + $0x60] sm:$0xff]
  %v39 = vld [vmem:[%s1 + $0x68] sm:$0xff]
  %v40 = vld [vmem:[%s1 + $0x70] sm:$0xff]
  %v41 = vld [vmem:[%s1 + $0x78] sm:$0xff]
  %v42 = vld [vmem:[%s1 + $0x80] sm:$0xff]
  %v43 = vld [vmem:[%s1 + $0x88] sm:$0xff]
  %v44 = vld [vmem:[%s1 + $0x90] sm:$0xff]
  %v45 = vld [vmem:[%s1 + $0x98] sm:$0xff]
  %v46 = vld [vmem:[%s1 + $0xa0] sm:$0xff]
  %v47 = vld [vmem:[%s1 + $0xa8] sm:$0xff]
  %v48 = vld [vmem:[%s1 + $0xb0] sm:$0xff]
  %v49 = vld [vmem:[%s1 + $0xb8] sm:$0xff]
  %v50 = vld [vmem:[%s1 + $0xc0] sm:$0xff]
  %v51 = vld [vmem:[%s1 + $0xc8] sm:$0xff]
  %v52 = vld [vmem:[%s1 + $0xd0] sm:$0xff]
  %v53 = vld [vmem:[%s1 + $0xd8] sm:$0xff]
  %v54 = vld [vmem:[%s1 + $0xe0] sm:$0xff]
  %v55 = vld [vmem:[%s1 + $0xe8] sm:$0xff]
  %v56 = vld [vmem:[%s1 + $0xf0] sm:$0xff]
  %v57 = vld [vmem:[%s1 + $0xf8] sm:$0xff]
  %v58 = vld [vmem:[%s1 + $0x100] sm:$0xff]
  %v59 = vld [vmem:[%s1 + $0x108] sm:$0xff]
  %v60 = vld [vmem:[%s1 + $0x110] sm:$0xff]
  %v61 = vld [vmem:[%s1 + $0x118] sm:$0xff]
  %v62 = vld [vmem:[%s2] sm:$0x1]
  %v64 = vperm.slane %v62, 0
  %vm66 = vcmask 261120
  %v68 = vsel %vm66, %v16, 0
  %v71 = vsel %vm66, %v19, 0
  %v74 = vsel %vm66, %v22, 0
  %v77 = vsel %vm66, %v25, 0
  %79 = vmatpush.msra.mxu0 %v41
  %80 = vmatpush.msra.mxu0 %v40
  %81 = vmatpush.msra.mxu0 %v39
  %82 = vmatpush.msra.mxu0 %v38
  %83 = vmatpush.msra.mxu0 %v37
  %84 = vmatpush.msra.mxu0 %v36
  %85 = vmatpush.msra.mxu0 %v35
  %86 = vmatpush.msra.mxu0 %v34
  %87 = vmatpush.msra.mxu0 %v33
  %88 = vmatpush.msra.mxu0 %v32
  %89 = vmatpush.msra.mxu0 %v31
  %90 = vmatpush.msra.mxu0 %v30
  %91 = vmatpush.msra.mxu0 %v29
  %92 = vmatpush.msra.mxu0 %v28
  %93 = vmatpush.msra.mxu0 %v27
  %94 = vmatpush.msra.mxu0 %v26
  %95 = vmatmul.f32.gmra.mxu0 %v14
  %v96 = vpop.f32.mrf.mxu0
  %v97 = vadd.f32 %v64, %v96
  %98 = vmatmul.f32.gmra.mxu0 %v17
  %v99 = vpop.f32.mrf.mxu0
  %v100 = vadd.f32 %v64, %v99
  %101 = vmatmul.f32.gmra.mxu0 %v20
  %v102 = vpop.f32.mrf.mxu0
  %v103 = vadd.f32 %v64, %v102
  %104 = vmatmul.f32.gmra.mxu0 %v23
  %v105 = vpop.f32.mrf.mxu0
  %v106 = vadd.f32 %v64, %v105
  %107 = vdwg.mxu0
  %108 = vmatpush.msra.mxu0 %v57
  %109 = vmatpush.msra.mxu0 %v56
  %110 = vmatpush.msra.mxu0 %v55
  %111 = vmatpush.msra.mxu0 %v54
  %112 = vmatpush.msra.mxu0 %v53
  %113 = vmatpush.msra.mxu0 %v52
  %114 = vmatpush.msra.mxu0 %v51
  %115 = vmatpush.msra.mxu0 %v50
  %116 = vmatpush.msra.mxu0 %v49
  %117 = vmatpush.msra.mxu0 %v48
  %118 = vmatpush.msra.mxu0 %v47
  %119 = vmatpush.msra.mxu0 %v46
  %120 = vmatpush.msra.mxu0 %v45
  %121 = vmatpush.msra.mxu0 %v44
  %122 = vmatpush.msra.mxu0 %v43
  %123 = vmatpush.msra.mxu0 %v42
  %124 = vmatmul.f32.gmra.mxu0 %v15
  %v125 = vpop.f32.mrf.mxu0
  %v126 = vadd.f32 %v97, %v125
  %127 = vmatmul.f32.gmra.mxu0 %v18
  %v128 = vpop.f32.mrf.mxu0
  %v129 = vadd.f32 %v100, %v128
  %130 = vmatmul.f32.gmra.mxu0 %v21
  %v131 = vpop.f32.mrf.mxu0
  %v132 = vadd.f32 %v103, %v131
  %133 = vmatmul.f32.gmra.mxu0 %v24
  %v134 = vpop.f32.mrf.mxu0
  %v135 = vadd.f32 %v106, %v134
  %136 = vdwg.mxu0
  %137 = vmatpush.msra.mxu0 0.0
  %138 = vmatpush.msra.mxu0 0.0
  %139 = vmatpush.msra.mxu0 0.0
  %140 = vmatpush.msra.mxu0 0.0
  %141 = vmatpush.msra.mxu0 0.0
  %142 = vmatpush.msra.mxu0 0.0
  %143 = vmatpush.msra.mxu0 0.0
  %144 = vmatpush.msra.mxu0 0.0
  %145 = vmatpush.msra.mxu0 0.0
  %146 = vmatpush.msra.mxu0 0.0
  %147 = vmatpush.msra.mxu0 0.0
  %148 = vmatpush.msra.mxu0 0.0
  %149 = vmatpush.msra.mxu0 %v61
  %150 = vmatpush.msra.mxu0 %v60
  %151 = vmatpush.msra.mxu0 %v59
  %152 = vmatpush.msra.mxu0 %v58
  %153 = vmatmul.f32.gmra.mxu0 %v68
  %v154 = vpop.f32.mrf.mxu0
  %v155 = vadd.f32 %v126, %v154
  %156 = vmatmul.f32.gmra.mxu0 %v71
  %v157 = vpop.f32.mrf.mxu0
  %v158 = vadd.f32 %v129, %v157
  %159 = vmatmul.f32.gmra.mxu0 %v74
  %v160 = vpop.f32.mrf.mxu0
  %v161 = vadd.f32 %v132, %v160
  %162 = vmatmul.f32.gmra.mxu0 %v77
  %v163 = vpop.f32.mrf.mxu0
  %v164 = vadd.f32 %v135, %v163
  %165 = vdwg.mxu0
  %v166 = vmax.f32 %v155, 0.0
  %v167 = vmax.f32 %v158, 0.0
  %v168 = vmax.f32 %v161, 0.0
  %v169 = vmax.f32 %v164, 0.0
  %170 = vst [vmem:[%s3] sm:$0xff] %v166
  %171 = vst [vmem:[%s3 + $0x8] sm:$0xff] %v167
  %172 = vst [vmem:[%s3 + $0x10] sm:$0xff] %v168
  %173 = vst [vmem:[%s3 + $0x18] sm:$0xff] %v169
  // Predicated region
  $region14: #{vqvae_forward.7} parent=0 // pred_check
    _
  $region15: #{vqvae_forward.7} parent=0 // pred_check_branch
    %175 = sbr.rel (0) target = $region17
  $region16: #{vqvae_forward.7} parent=0 // pred_region
    _
  $region17: #{vqvae_forward.7} parent=0 // pred_fallthru
    _
  // Predicated region
  $region18: #{vqvae_forward.7} parent=0 // pred_check
    _
  $region19: #{vqvae_forward.7} parent=0 // pred_check_branch
    %177 = sbr.rel (0) target = $region21
  $region20: #{vqvae_forward.7} parent=0 // pred_region
    _
  $region21: #{vqvae_forward.7} parent=0 // pred_fallthru
    _

// kernel: tile.13
$region0: #{tile.13}
  #allocation0 [shape = 's32[1]{0}', space=sflag, size = 0x4, scoped, tag = 'scoped memory for tile.13']
  %s0 = inlined_call_operand.vmem [shape: f32[64], index: 0, kind: input, shape index: {}]
  %s1 = inlined_call_operand.vmem [shape: f32[4,64], index: 1, kind: output, shape index: {}]
  // Predicated region
  $region2: #{tile.13} parent=0 // pred_check
    _
  $region3: #{tile.13} parent=0 // pred_check_branch
    %3 = sbr.rel (0) target = $region5
  $region4: #{tile.13} parent=0 // pred_region
    _
  $region5: #{tile.13} parent=0 // pred_fallthru
    _
  %v4 = vld [vmem:[%s0] ss:$0 sm:$0xff]
  %5 = vst [vmem:[%s1] sm:$0xf] %v4

// kernel: tile.18
$region0: #{tile.18}
  #allocation0 [shape = 's32[1]{0}', space=sflag, size = 0x4, scoped, tag = 'scoped memory for tile.18']
  %s0 = inlined_call_operand.vmem [shape: f32[32], index: 0, kind: input, shape index: {}]
  %s1 = inlined_call_operand.vmem [shape: f32[4,32], index: 1, kind: output, shape index: {}]
  // Predicated region
  $region2: #{tile.18} parent=0 // pred_check
    _
  $region3: #{tile.18} parent=0 // pred_check_branch
    %3 = sbr.rel (0) target = $region5
  $region4: #{tile.18} parent=0 // pred_region
    _
  $region5: #{tile.18} parent=0 // pred_fallthru
    _
  %v4 = vld [vmem:[%s0] ss:$0 sm:$0xff]
  %5 = vst [vmem:[%s1] sm:$0xf] %v4

// kernel: vqvae_forward.9
$region0: #{vqvae_forward.9}
  #allocation0 [shape = 'u32[]', space=smem, size = 0x4, offset = 0x4, fixed_abs, tag = 'smem constant byte address 0x4 - core index']
  #allocation1 [shape = 'u32[72,128]{1,0:T(1,128)}', space=vmem, size = 0x9000, scoped, tag = 'internal scratch']
  %s0 = inlined_call_operand.vmem [shape: f32[32,64], index: 0, kind: input, shape index: {}]
  %s1 = inlined_call_operand.vmem [shape: f32[64,256], index: 1, kind: input, shape index: {}]
  %s2 = inlined_call_operand.vmem [shape: f32[1,256], index: 2, kind: input, shape index: {}]
  %s3 = inlined_call_operand.vmem [shape: f32[32,256], index: 3, kind: output, shape index: {}]
  %s4 = sld [smem:[#allocation0]]
  $region22: #{vqvae_forward.9} parent=0
    _
  %s6 = ssub.s32 1, %s4
  %s7 = scalar_select 0, %s6, %s4
  // Predicated region
  $region2: #{vqvae_forward.9} parent=0 // pred_check
    _
  $region3: #{vqvae_forward.9} parent=0 // pred_check_branch
    %9 = sbr.rel (0) target = $region5
  $region4: #{vqvae_forward.9} parent=0 // pred_region
    _
  $region5: #{vqvae_forward.9} parent=0 // pred_fallthru
    _
  // Predicated region
  $region6: #{vqvae_forward.9} parent=0 // pred_check
    _
  $region7: #{vqvae_forward.9} parent=0 // pred_check_branch
    %11 = sbr.rel (0) target = $region9
  $region8: #{vqvae_forward.9} parent=0 // pred_region
    _
  $region9: #{vqvae_forward.9} parent=0 // pred_fallthru
    _
  // Predicated region
  $region10: #{vqvae_forward.9} parent=0 // pred_check
    _
  $region11: #{vqvae_forward.9} parent=0 // pred_check_branch
    %13 = sbr.rel (0) target = $region13
  $region12: #{vqvae_forward.9} parent=0 // pred_region
    _
  $region13: #{vqvae_forward.9} parent=0 // pred_fallthru
    _
  %v14 = vld [vmem:[%s0] sm:$0xff]
  %v15 = vld [vmem:[%s0 + $0x8] sm:$0xff]
  %v16 = vld [vmem:[%s0 + $0x10] sm:$0xff]
  %v17 = vld [vmem:[%s0 + $0x18] sm:$0xff]
  %v18 = vld [vmem:[%s1] sm:$0xff]
  %v19 = vld [vmem:[%s1 + $0x8] sm:$0xff]
  %v20 = vld [vmem:[%s1 + $0x10] sm:$0xff]
  %v21 = vld [vmem:[%s1 + $0x18] sm:$0xff]
  %v22 = vld [vmem:[%s1 + $0x20] sm:$0xff]
  %v23 = vld [vmem:[%s1 + $0x28] sm:$0xff]
  %v24 = vld [vmem:[%s1 + $0x30] sm:$0xff]
  %v25 = vld [vmem:[%s1 + $0x38] sm:$0xff]
  %v26 = vld [vmem:[%s1 + $0x40] sm:$0xff]
  %v27 = vld [vmem:[%s1 + $0x48] sm:$0xff]
  %v28 = vld [vmem:[%s1 + $0x50] sm:$0xff]
  %v29 = vld [vmem:[%s1 + $0x58] sm:$0xff]
  %v30 = vld [vmem:[%s1 + $0x60] sm:$0xff]
  %v31 = vld [vmem:[%s1 + $0x68] sm:$0xff]
  %v32 = vld [vmem:[%s1 + $0x70] sm:$0xff]
  %v33 = vld [vmem:[%s1 + $0x78] sm:$0xff]
  %v34 = vld [vmem:[%s2] sm:$0x3]
  %v36 = vperm.slane %v34, 0
  %v37 = vperm.slane %v34, 1
  %vm40 = vcmask 523264
  %v42 = vsel %vm40, %v14, 0
  %v45 = vsel %vm40, %v15, 0
  %v48 = vsel %vm40, %v16, 0
  %v51 = vsel %vm40, %v17, 0
  %53 = vmatpush.msra.mxu0 0.0
  %54 = vmatpush.msra.mxu0 0.0
  %55 = vmatpush.msra.mxu0 0.0
  %56 = vmatpush.msra.mxu0 0.0
  %57 = vmatpush.msra.mxu0 0.0
  %58 = vmatpush.msra.mxu0 0.0
  %59 = vmatpush.msra.mxu0 0.0
  %60 = vmatpush.msra.mxu0 0.0
  %61 = vmatpush.msra.mxu0 %v32
  %62 = vmatpush.msra.mxu0 %v30
  %63 = vmatpush.msra.mxu0 %v28
  %64 = vmatpush.msra.mxu0 %v26
  %65 = vmatpush.msra.mxu0 %v24
  %66 = vmatpush.msra.mxu0 %v22
  %67 = vmatpush.msra.mxu0 %v20
  %68 = vmatpush.msra.mxu0 %v18
  %69 = vmatmul.f32.gmra.mxu0 %v42
  %v70 = vpop.f32.mrf.mxu0
  %v71 = vadd.f32 %v36, %v70
  %72 = vmatmul.f32.gmra.mxu0 %v45
  %v73 = vpop.f32.mrf.mxu0
  %v74 = vadd.f32 %v36, %v73
  %75 = vmatmul.f32.gmra.mxu0 %v48
  %v76 = vpop.f32.mrf.mxu0
  %v77 = vadd.f32 %v36, %v76
  %78 = vmatmul.f32.gmra.mxu0 %v51
  %v79 = vpop.f32.mrf.mxu0
  %v80 = vadd.f32 %v36, %v79
  %81 = vdwg.mxu0
  %82 = vmatpush.msra.mxu0 0.0
  %83 = vmatpush.msra.mxu0 0.0
  %84 = vmatpush.msra.mxu0 0.0
  %85 = vmatpush.msra.mxu0 0.0
  %86 = vmatpush.msra.mxu0 0.0
  %87 = vmatpush.msra.mxu0 0.0
  %88 = vmatpush.msra.mxu0 0.0
  %89 = vmatpush.msra.mxu0 0.0
  %90 = vmatpush.msra.mxu0 %v33
  %91 = vmatpush.msra.mxu0 %v31
  %92 = vmatpush.msra.mxu0 %v29
  %93 = vmatpush.msra.mxu0 %v27
  %94 = vmatpush.msra.mxu0 %v25
  %95 = vmatpush.msra.mxu0 %v23
  %96 = vmatpush.msra.mxu0 %v21
  %97 = vmatpush.msra.mxu0 %v19
  %98 = vmatmul.f32.gmra.mxu0 %v42
  %v99 = vpop.f32.mrf.mxu0
  %v100 = vadd.f32 %v37, %v99
  %101 = vmatmul.f32.gmra.mxu0 %v45
  %v102 = vpop.f32.mrf.mxu0
  %v103 = vadd.f32 %v37, %v102
  %104 = vmatmul.f32.gmra.mxu0 %v48
  %v105 = vpop.f32.mrf.mxu0
  %v106 = vadd.f32 %v37, %v105
  %107 = vmatmul.f32.gmra.mxu0 %v51
  %v108 = vpop.f32.mrf.mxu0
  %v109 = vadd.f32 %v37, %v108
  %110 = vdwg.mxu0
  %v111 = vmax.f32 %v71, 0.0
  %v112 = vmax.f32 %v100, 0.0
  %v113 = vmax.f32 %v74, 0.0
  %v114 = vmax.f32 %v103, 0.0
  %v115 = vmax.f32 %v77, 0.0
  %v116 = vmax.f32 %v106, 0.0
  %v117 = vmax.f32 %v80, 0.0
  %v118 = vmax.f32 %v109, 0.0
  %119 = vst [vmem:[%s3] sm:$0xff] %v111
  %120 = vst [vmem:[%s3 + $0x8] sm:$0xff] %v112
  %121 = vst [vmem:[%s3 + $0x10] sm:$0xff] %v113
  %122 = vst [vmem:[%s3 + $0x18] sm:$0xff] %v114
  %123 = vst [vmem:[%s3 + $0x20] sm:$0xff] %v115
  %124 = vst [vmem:[%s3 + $0x28] sm:$0xff] %v116
  %125 = vst [vmem:[%s3 + $0x30] sm:$0xff] %v117
  %126 = vst [vmem:[%s3 + $0x38] sm:$0xff] %v118
  // Predicated region
  $region14: #{vqvae_forward.9} parent=0 // pred_check
    _
  $region15: #{vqvae_forward.9} parent=0 // pred_check_branch
    %128 = sbr.rel (0) target = $region17
  $region16: #{vqvae_forward.9} parent=0 // pred_region
    _
  $region17: #{vqvae_forward.9} parent=0 // pred_fallthru
    _
  // Predicated region
  $region18: #{vqvae_forward.9} parent=0 // pred_check
    _
  $region19: #{vqvae_forward.9} parent=0 // pred_check_branch
    %130 = sbr.rel (0) target = $region21
  $region20: #{vqvae_forward.9} parent=0 // pred_region
    _
  $region21: #{vqvae_forward.9} parent=0 // pred_fallthru
    _

// kernel: vqvae_forward.8
$region0: #{vqvae_forward.8}
  #allocation0 [shape = 'u32[]', space=smem, size = 0x4, offset = 0x4, fixed_abs, tag = 'smem constant byte address 0x4 - core index']
  #allocation1 [shape = 'u32[72,128]{1,0:T(1,128)}', space=vmem, size = 0x9000, scoped, tag = 'internal scratch']
  #allocation2 [shape = 'f32[1]{0:T(128)}', space=smem, size = 0x200, scoped, tag = 'scratch operand']
  %s0 = inlined_call_operand.vmem [shape: f32[32,64], index: 0, kind: input, shape index: {}]
  %s1 = inlined_call_operand.vmem [shape: f32[64,128], index: 1, kind: input, shape index: {}]
  %s2 = inlined_call_operand.vmem [shape: f32[1,128], index: 2, kind: input, shape index: {}]
  %s3 = inlined_call_operand.vmem [shape: f32[128,128], index: 3, kind: input, shape index: {}]
  %s4 = inlined_call_operand.vmem [shape: f32[32,128], index: 4, kind: output, shape index: {0}]
  %s5 = inlined_call_operand.hbm [shape: f32[1,1], index: 5, kind: output, shape index: {1}]
  %6 = xla_tuple %s4, %s5
  %s7 = sld [smem:[#allocation0]]
  $region42: #{vqvae_forward.8} parent=0
    _
  %s9 = ssub.s32 1, %s7
  %s10 = scalar_select 0, %s9, %s7
  $region1: #{vqvae_forward.8} parent=0
    #allocation3 [shape = 'u8[512]{0}', space=smem, size = 0x200, scoped, tag = 'output window, operand 1, single buffered']
    #allocation4 [shape = 's32[1]{0}', space=sflag, size = 0x4, scoped, tag = 'scoped memory for vqvae_forward.8']
    %11 = vsyncpa [#allocation4], 0
    // Predicated region
    $region2: #{vqvae_forward.8} parent=1 // pred_check
      _
    $region3: #{vqvae_forward.8} parent=1 // pred_check_branch
      %13 = sbr.rel (0) target = $region5
    $region4: #{vqvae_forward.8} parent=1 // pred_region
      _
    $region5: #{vqvae_forward.8} parent=1 // pred_fallthru
      _
    // Predicated region
    $region6: #{vqvae_forward.8} parent=1 // pred_check
      _
    $region7: #{vqvae_forward.8} parent=1 // pred_check_branch
      %15 = sbr.rel (0) target = $region9
    $region8: #{vqvae_forward.8} parent=1 // pred_region
      _
    $region9: #{vqvae_forward.8} parent=1 // pred_fallthru
      _
    // Predicated region
    $region10: #{vqvae_forward.8} parent=1 // pred_check
      _
    $region11: #{vqvae_forward.8} parent=1 // pred_check_branch
      %17 = sbr.rel (0) target = $region13
    $region12: #{vqvae_forward.8} parent=1 // pred_region
      _
    $region13: #{vqvae_forward.8} parent=1 // pred_fallthru
      _
    // Predicated region
    $region14: #{vqvae_forward.8} parent=1 // pred_check
      _
    $region15: #{vqvae_forward.8} parent=1 // pred_check_branch
      %19 = sbr.rel (0) target = $region17
    $region16: #{vqvae_forward.8} parent=1 // pred_region
      _
    $region17: #{vqvae_forward.8} parent=1 // pred_fallthru
      _
    %p20 = scmp.eq.s32.totalorder 0, 0
    // Predicated region
    $region18: #{vqvae_forward.8} parent=1 // pred_check
      %p21 = pneg %p20
    $region19: #{vqvae_forward.8} parent=1 // pred_check_branch
      %23 = sbr.rel (%p21) target = $region21
    $region20: #{vqvae_forward.8} parent=1 // pred_region
      %s24 = scalar_lea.smem [#allocation2], 0
      %25 = sst [smem:[%s24]] 0.0
    $region21: #{vqvae_forward.8} parent=1 // pred_fallthru
      _
    %v26 = vld [vmem:[%s0] sm:$0xff]
    %v27 = vld [vmem:[%s0 + $0x8] sm:$0xff]
    %v28 = vld [vmem:[%s0 + $0x10] sm:$0xff]
    %v29 = vld [vmem:[%s0 + $0x18] sm:$0xff]
    %v30 = vld [vmem:[%s1] sm:$0xff]
    %v31 = vld [vmem:[%s1 + $0x8] sm:$0xff]
    %v32 = vld [vmem:[%s1 + $0x10] sm:$0xff]
    %v33 = vld [vmem:[%s1 + $0x18] sm:$0xff]
    %v34 = vld [vmem:[%s1 + $0x20] sm:$0xff]
    %v35 = vld [vmem:[%s1 + $0x28] sm:$0xff]
    %v36 = vld [vmem:[%s1 + $0x30] sm:$0xff]
    %v37 = vld [vmem:[%s1 + $0x38] sm:$0xff]
    %v38 = vld [vmem:[%s2] sm:$0x1]
    %v40 = vperm.slane %v38, 0
    %vm42 = vcmask 523264
    %v44 = vsel %vm42, %v26, 0
    %v47 = vsel %vm42, %v27, 0
    %v50 = vsel %vm42, %v28, 0
    %v53 = vsel %vm42, %v29, 0
    %55 = vmatpush.msra.mxu0 0.0
    %56 = vmatpush.msra.mxu0 0.0
    %57 = vmatpush.msra.mxu0 0.0
    %58 = vmatpush.msra.mxu0 0.0
    %59 = vmatpush.msra.mxu0 0.0
    %60 = vmatpush.msra.mxu0 0.0
    %61 = vmatpush.msra.mxu0 0.0
    %62 = vmatpush.msra.mxu0 0.0
    %63 = vmatpush.msra.mxu0 %v37
    %64 = vmatpush.msra.mxu0 %v36
    %65 = vmatpush.msra.mxu0 %v35
    %66 = vmatpush.msra.mxu0 %v34
    %67 = vmatpush.msra.mxu0 %v33
    %68 = vmatpush.msra.mxu0 %v32
    %69 = vmatpush.msra.mxu0 %v31
    %70 = vmatpush.msra.mxu0 %v30
    %71 = vmatmul.f32.gmra.mxu0 %v44
    %v72 = vpop.f32.mrf.mxu0
    %v73 = vadd.f32 %v40, %v72
    %74 = vmatmul.f32.gmra.mxu0 %v47
    %v75 = vpop.f32.mrf.mxu0
    %v76 = vadd.f32 %v40, %v75
    %77 = vmatmul.f32.gmra.mxu0 %v50
    %v78 = vpop.f32.mrf.mxu0
    %v79 = vadd.f32 %v40, %v78
    %80 = vmatmul.f32.gmra.mxu0 %v53
    %v81 = vpop.f32.mrf.mxu0
    %v82 = vadd.f32 %v40, %v81
    %83 = vdwg.mxu0
    %v84 = vld [vmem:[%s3] sm:$0xff]
    %v85 = vld [vmem:[%s3 + $0x8] sm:$0xff]
    %v86 = vld [vmem:[%s3 + $0x10] sm:$0xff]
    %v87 = vld [vmem:[%s3 + $0x18] sm:$0xff]
    %v88 = vld [vmem:[%s3 + $0x20] sm:$0xff]
    %v89 = vld [vmem:[%s3 + $0x28] sm:$0xff]
    %v90 = vld [vmem:[%s3 + $0x30] sm:$0xff]
    %v91 = vld [vmem:[%s3 + $0x38] sm:$0xff]
    %v92 = vld [vmem:[%s3 + $0x40] sm:$0xff]
    %v93 = vld [vmem:[%s3 + $0x48] sm:$0xff]
    %v94 = vld [vmem:[%s3 + $0x50] sm:$0xff]
    %v95 = vld [vmem:[%s3 + $0x58] sm:$0xff]
    %v96 = vld [vmem:[%s3 + $0x60] sm:$0xff]
    %v97 = vld [vmem:[%s3 + $0x68] sm:$0xff]
    %v98 = vld [vmem:[%s3 + $0x70] sm:$0xff]
    %v99 = vld [vmem:[%s3 + $0x78] sm:$0xff]
    %v100 = vmul.f32 %v73, %v73
    %v101 = vmul.f32 %v76, %v76
    %v102 = vmul.f32 %v79, %v79
    %v103 = vmul.f32 %v82, %v82
    %104 = vadd.xlane.f32.xlu0 %v100
    %v105 = vpop.xlane.xlu0 %104
    %106 = vadd.xlane.f32.xlu0 %v101
    %v107 = vpop.xlane.xlu0 %106
    %108 = vadd.xlane.f32.xlu0 %v102
    %v109 = vpop.xlane.xlu0 %108
    %110 = vadd.xlane.f32.xlu0 %v103
    %v111 = vpop.xlane.xlu0 %110
    %v112 = vmul.f32 %v84, %v84
    %v113 = vmul.f32 %v85, %v85
    %v114 = vmul.f32 %v86, %v86
    %v115 = vmul.f32 %v87, %v87
    %v116 = vmul.f32 %v88, %v88
    %v117 = vmul.f32 %v89, %v89
    %v118 = vmul.f32 %v90, %v90
    %v119 = vmul.f32 %v91, %v91
    %v120 = vmul.f32 %v92, %v92
    %v121 = vmul.f32 %v93, %v93
    %v122 = vmul.f32 %v94, %v94
    %v123 = vmul.f32 %v95, %v95
    %v124 = vmul.f32 %v96, %v96
    %v125 = vmul.f32 %v97, %v97
    %v126 = vmul.f32 %v98, %v98
    %v127 = vmul.f32 %v99, %v99
    %128 = vadd.xlane.f32.xlu0 %v112
    %v129 = vpop.xlane.xlu0 %128
    %130 = vadd.xlane.f32.xlu0 %v113
    %v131 = vpop.xlane.xlu0 %130
    %132 = vadd.xlane.f32.xlu0 %v114
    %v133 = vpop.xlane.xlu0 %132
    %134 = vadd.xlane.f32.xlu0 %v115
    %v135 = vpop.xlane.xlu0 %134
    %136 = vadd.xlane.f32.xlu0 %v116
    %v137 = vpop.xlane.xlu0 %136
    %138 = vadd.xlane.f32.xlu0 %v117
    %v139 = vpop.xlane.xlu0 %138
    %140 = vadd.xlane.f32.xlu0 %v118
    %v141 = vpop.xlane.xlu0 %140
    %142 = vadd.xlane.f32.xlu0 %v119
    %v143 = vpop.xlane.xlu0 %142
    %144 = vadd.xlane.f32.xlu0 %v120
    %v145 = vpop.xlane.xlu0 %144
    %146 = vadd.xlane.f32.xlu0 %v121
    %v147 = vpop.xlane.xlu0 %146
    %148 = vadd.xlane.f32.xlu0 %v122
    %v149 = vpop.xlane.xlu0 %148
    %150 = vadd.xlane.f32.xlu0 %v123
    %v151 = vpop.xlane.xlu0 %150
    %152 = vadd.xlane.f32.xlu0 %v124
    %v153 = vpop.xlane.xlu0 %152
    %154 = vadd.xlane.f32.xlu0 %v125
    %v155 = vpop.xlane.xlu0 %154
    %156 = vadd.xlane.f32.xlu0 %v126
    %v157 = vpop.xlane.xlu0 %156
    %158 = vadd.xlane.f32.xlu0 %v127
    %v159 = vpop.xlane.xlu0 %158
    %160 = vmatpush.xpose.msra.mxu0 %v99
    %161 = vmatpush.xpose.msra.mxu0 %v98
    %162 = vmatpush.xpose.msra.mxu0 %v97
    %163 = vmatpush.xpose.msra.mxu0 %v96
    %164 = vmatpush.xpose.msra.mxu0 %v95
    %165 = vmatpush.xpose.msra.mxu0 %v94
    %166 = vmatpush.xpose.msra.mxu0 %v93
    %167 = vmatpush.xpose.msra.mxu0 %v92
    %168 = vmatpush.xpose.msra.mxu0 %v91
    %169 = vmatpush.xpose.msra.mxu0 %v90
    %170 = vmatpush.xpose.msra.mxu0 %v89
    %171 = vmatpush.xpose.msra.mxu0 %v88
    %172 = vmatpush.xpose.msra.mxu0 %v87
    %173 = vmatpush.xpose.msra.mxu0 %v86
    %174 = vmatpush.xpose.msra.mxu0 %v85
    %175 = vmatpush.xpose.msra.mxu0 %v84
    %176 = vmatmul.f32.gmra.mxu0 %v73
    %v177 = vpop.f32.mrf.mxu0
    %v178 = vadd.f32 0.0, %v177
    %179 = vmatmul.f32.gmra.mxu0 %v76
    %v180 = vpop.f32.mrf.mxu0
    %v181 = vadd.f32 0.0, %v180
    %182 = vmatmul.f32.gmra.mxu0 %v79
    %v183 = vpop.f32.mrf.mxu0
    %v184 = vadd.f32 0.0, %v183
    %185 = vmatmul.f32.gmra.mxu0 %v82
    %v186 = vpop.f32.mrf.mxu0
    %v187 = vadd.f32 0.0, %v186
    %188 = vdwg.mxu0
    %v205 = vlaneseq
    %v206 = vand.u32 %v205, 127
    %v207 = vperm.slane %v129, %v206
    %v208 = vadd.s32 %v206, 4294967288
    %v209 = vperm.slane %v131, %v208
    %vm210 = vcmask 130112
    %v211 = vsel %vm210, %v209, %v207
    %v212 = vadd.s32 %v206, 4294967280
    %v213 = vperm.slane %v133, %v212
    %vm214 = vcmask 195712
    %v215 = vsel %vm214, %v213, %v211
    %v216 = vadd.s32 %v206, 4294967272
    %v217 = vperm.slane %v135, %v216
    %vm218 = vcmask 261312
    %v219 = vsel %vm218, %v217, %v215
    %v220 = vadd.s32 %v206, 4294967264
    %v221 = vperm.slane %v137, %v220
    %vm222 = vcmask 326912
    %v223 = vsel %vm222, %v221, %v219
    %v224 = vadd.s32 %v206, 4294967256
    %v225 = vperm.slane %v139, %v224
    %vm226 = vcmask 392512
    %v227 = vsel %vm226, %v225, %v223
    %v228 = vadd.s32 %v206, 4294967248
    %v229 = vperm.slane %v141, %v228
    %vm230 = vcmask 458112
    %v231 = vsel %vm230, %v229, %v227
    %v232 = vadd.s32 %v206, 4294967240
    %v233 = vperm.slane %v143, %v232
    %vm234 = vcmask 523712
    %v235 = vsel %vm234, %v233, %v231
    %v236 = vadd.s32 %v206, 4294967232
    %v237 = vperm.slane %v145, %v236
    %vm238 = vcmask 589312
    %v239 = vsel %vm238, %v237, %v235
    %v240 = vadd.s32 %v206, 4294967224
    %v241 = vperm.slane %v147, %v240
    %vm242 = vcmask 654912
    %v243 = vsel %vm242, %v241, %v239
    %v244 = vadd.s32 %v206, 4294967216
    %v245 = vperm.slane %v149, %v244
    %vm246 = vcmask 720512
    %v247 = vsel %vm246, %v245, %v243
    %v248 = vadd.s32 %v206, 4294967208
    %v249 = vperm.slane %v151, %v248
    %vm250 = vcmask 786112
    %v251 = vsel %vm250, %v249, %v247
    %v252 = vadd.s32 %v206, 4294967200
    %v253 = vperm.slane %v153, %v252
    %vm254 = vcmask 851712
    %v255 = vsel %vm254, %v253, %v251
    %v256 = vadd.s32 %v206, 4294967192
    %v257 = vperm.slane %v155, %v256
    %vm258 = vcmask 917312
    %v259 = vsel %vm258, %v257, %v255
    %v260 = vadd.s32 %v206, 4294967184
    %v261 = vperm.slane %v157, %v260
    %vm262 = vcmask 982912
    %v263 = vsel %vm262, %v261, %v259
    %v264 = vadd.s32 %v206, 4294967176
    %v265 = vperm.slane %v159, %v264
    %vm266 = vcmask 1048512
    %v267 = vsel %vm266, %v265, %v263
    %vm268 = vcmask 1042434
    %v269 = vsel %vm268, %v267, %v267
    %vm270 = vcmask 1043459
    %v271 = vsel %vm270, %v267, %v269
    %vm272 = vcmask 1044484
    %v273 = vsel %vm272, %v267, %v271
    %vm274 = vcmask 1045509
    %v275 = vsel %vm274, %v267, %v273
    %vm276 = vcmask 1046534
    %v277 = vsel %vm276, %v267, %v275
    %vm278 = vcmask 1047559
    %v279 = vsel %vm278, %v267, %v277
    %v281 = vadd.f32 %v105, %v279
    %v282 = vadd.f32 %v107, %v279
    %v283 = vadd.f32 %v109, %v279
    %v284 = vadd.f32 %v111, %v279
    %v285 = vmul.f32 %v178, 2.0
    %v286 = vmul.f32 %v181, 2.0
    %v287 = vmul.f32 %v184, 2.0
    %v288 = vmul.f32 %v187, 2.0
    %v289 = vsub.f32 %v281, %v285
    %v290 = vsub.f32 %v282, %v286
    %v291 = vsub.f32 %v283, %v287
    %v292 = vsub.f32 %v284, %v288
    %vm293 = vcmp.lt.s32.totalorder %v206, 64
    %v294 = vsel %vm293, %v289, inf
    %v295 = vsel %vm293, %v290, inf
    %v296 = vsel %vm293, %v291, inf
    %v297 = vsel %vm293, %v292, inf
    %298 = vmin.xlane.f32.xlu0 %v294
    %v299 = vpop.xlane.xlu0 %298
    %300 = vmin.xlane.f32.xlu0 %v295
    %v301 = vpop.xlane.xlu0 %300
    %302 = vmin.xlane.f32.xlu0 %v296
    %v303 = vpop.xlane.xlu0 %302
    %304 = vmin.xlane.f32.xlu0 %v297
    %v305 = vpop.xlane.xlu0 %304
    %vm306 = vcmp.eq.f32.partialorder %v294, %v299
    %vm307 = vcmp.eq.f32.partialorder %v295, %v301
    %vm308 = vcmp.eq.f32.partialorder %v296, %v303
    %vm309 = vcmp.eq.f32.partialorder %v297, %v305
    %v310 = vsel %vm306, %v206, 128
    %v311 = vsel %vm307, %v206, 128
    %v312 = vsel %vm308, %v206, 128
    %v313 = vsel %vm309, %v206, 128
    %v314 = vand.u32 %v310, 65535
    %v315 = vshra.s32 %v310, 16
    %v316 = vcvt.s32.f32 %v314
    %v317 = vcvt.s32.f32 %v315
    %318 = vmin.xlane.f32.xlu0 %v317
    %v319 = vpop.xlane.xlu0 %318
    %vm320 = vcmp.eq.f32.partialorder %v317, %v319
    %v321 = vsel %vm320, %v316, inf
    %322 = vmin.xlane.f32.xlu0 %v321
    %v323 = vpop.xlane.xlu0 %322
    %v324 = vcvt.f32.s32 %v323
    %v325 = vcvt.f32.s32 %v319
    %v326 = vshll.u32 %v325, 16
    %v327 = vadd.s32 %v326, %v324
    %v328 = vand.u32 %v311, 65535
    %v329 = vshra.s32 %v311, 16
    %v330 = vcvt.s32.f32 %v328
    %v331 = vcvt.s32.f32 %v329
    %332 = vmin.xlane.f32.xlu0 %v331
    %v333 = vpop.xlane.xlu0 %332
    %vm334 = vcmp.eq.f32.partialorder %v331, %v333
    %v335 = vsel %vm334, %v330, inf
    %336 = vmin.xlane.f32.xlu0 %v335
    %v337 = vpop.xlane.xlu0 %336
    %v338 = vcvt.f32.s32 %v337
    %v339 = vcvt.f32.s32 %v333
    %v340 = vshll.u32 %v339, 16
    %v341 = vadd.s32 %v340, %v338
    %v342 = vand.u32 %v312, 65535
    %v343 = vshra.s32 %v312, 16
    %v344 = vcvt.s32.f32 %v342
    %v345 = vcvt.s32.f32 %v343
    %346 = vmin.xlane.f32.xlu0 %v345
    %v347 = vpop.xlane.xlu0 %346
    %vm348 = vcmp.eq.f32.partialorder %v345, %v347
    %v349 = vsel %vm348, %v344, inf
    %350 = vmin.xlane.f32.xlu0 %v349
    %v351 = vpop.xlane.xlu0 %350
    %v352 = vcvt.f32.s32 %v351
    %v353 = vcvt.f32.s32 %v347
    %v354 = vshll.u32 %v353, 16
    %v355 = vadd.s32 %v354, %v352
    %v356 = vand.u32 %v313, 65535
    %v357 = vshra.s32 %v313, 16
    %v358 = vcvt.s32.f32 %v356
    %v359 = vcvt.s32.f32 %v357
    %360 = vmin.xlane.f32.xlu0 %v359
    %v361 = vpop.xlane.xlu0 %360
    %vm362 = vcmp.eq.f32.partialorder %v359, %v361
    %v363 = vsel %vm362, %v358, inf
    %364 = vmin.xlane.f32.xlu0 %v363
    %v365 = vpop.xlane.xlu0 %364
    %v366 = vcvt.f32.s32 %v365
    %v367 = vcvt.f32.s32 %v361
    %v368 = vshll.u32 %v367, 16
    %v369 = vadd.s32 %v368, %v366
    %vm370 = vcmp.eq.s32.totalorder %v206, %v327
    %vm371 = vcmp.eq.s32.totalorder %v206, %v341
    %vm372 = vcmp.eq.s32.totalorder %v206, %v355
    %vm373 = vcmp.eq.s32.totalorder %v206, %v369
    %v374 = vsel %vm370, 1, 0
    %v375 = vsel %vm371, 1, 0
    %v376 = vsel %vm372, 1, 0
    %v377 = vsel %vm373, 1, 0
    %v378 = vcvt.s32.f32 %v374
    %v379 = vcvt.s32.f32 %v375
    %v380 = vcvt.s32.f32 %v376
    %v381 = vcvt.s32.f32 %v377
    %382 = vmatpush.msra.mxu0 %v99
    %383 = vmatpush.msra.mxu0 %v98
    %384 = vmatpush.msra.mxu0 %v97
    %385 = vmatpush.msra.mxu0 %v96
    %386 = vmatpush.msra.mxu0 %v95
    %387 = vmatpush.msra.mxu0 %v94
    %388 = vmatpush.msra.mxu0 %v93
    %389 = vmatpush.msra.mxu0 %v92
    %390 = vmatpush.msra.mxu0 %v91
    %391 = vmatpush.msra.mxu0 %v90
    %392 = vmatpush.msra.mxu0 %v89
    %393 = vmatpush.msra.mxu0 %v88
    %394 = vmatpush.msra.mxu0 %v87
    %395 = vmatpush.msra.mxu0 %v86
    %396 = vmatpush.msra.mxu0 %v85
    %397 = vmatpush.msra.mxu0 %v84
    %398 = vmatmul.f32.gmra.mxu0 %v378
    %v399 = vpop.f32.mrf.mxu0
    %v400 = vadd.f32 0.0, %v399
    %401 = vmatmul.f32.gmra.mxu0 %v379
    %v402 = vpop.f32.mrf.mxu0
    %v403 = vadd.f32 0.0, %v402
    %404 = vmatmul.f32.gmra.mxu0 %v380
    %v405 = vpop.f32.mrf.mxu0
    %v406 = vadd.f32 0.0, %v405
    %407 = vmatmul.f32.gmra.mxu0 %v381
    %v408 = vpop.f32.mrf.mxu0
    %v409 = vadd.f32 0.0, %v408
    %410 = vdwg.mxu0
    %s411 = smul.u32 0, 32
    %v412 = vlaneseq
    %v413 = vshrl.u32 %v412, 7
    %v414 = vadd.s32 %v413, 8
    %v415 = vadd.s32 %v413, 16
    %v416 = vadd.s32 %v413, 24
    %v417 = vstv %s411
    %v418 = vadd.s32 %v417, %v413
    %v419 = vadd.s32 %v417, %v414
    %v420 = vadd.s32 %v417, %v415
    %v421 = vadd.s32 %v417, %v416
    %vm422 = vcmp.lt.s32.totalorder %v418, 32
    %vm423 = vcmp.lt.s32.totalorder %v419, 32
    %vm424 = vcmp.lt.s32.totalorder %v420, 32
    %vm425 = vcmp.lt.s32.totalorder %v421, 32
    %v426 = vsub.f32 %v400, %v73
    %v427 = vsub.f32 %v403, %v76
    %v428 = vsub.f32 %v406, %v79
    %v429 = vsub.f32 %v409, %v82
    %v430 = vsel %vm422, %v426, 0.0
    %v431 = vsel %vm423, %v427, 0.0
    %v432 = vsel %vm424, %v428, 0.0
    %v433 = vsel %vm425, %v429, 0.0
    %s434 = sld [smem:[#allocation2]]
    %v435 = vmul.f32 %v430, %v430
    %v436 = vmul.f32 %v431, %v431
    %v437 = vmul.f32 %v432, %v432
    %v438 = vmul.f32 %v433, %v433
    %v439 = vadd.f32 %v435, %v436
    %v440 = vadd.f32 %v439, %v437
    %v441 = vadd.f32 %v440, %v438
    %442 = vadd.xlane.f32.xlu0 %v441
    %v443 = vpop.xlane.xlu0 %442
    %v444 = vrot.slane %v443, 4
    %v445 = vadd.f32 %v443, %v444
    %v446 = vrot.slane %v445, 2
    %v447 = vadd.f32 %v445, %v446
    %v448 = vrot.slane %v447, 1
    %v449 = vadd.f32 %v447, %v448
    %s450 = vtos %v449
    %s451 = sadd.f32 %s434, %s450
    %s452 = scalar_lea.smem [#allocation2], 0
    %453 = sst [smem:[%s452]] %s451
    %454 = vst [vmem:[%s4] sm:$0xff] %v400
    %455 = vst [vmem:[%s4 + $0x8] sm:$0xff] %v403
    %456 = vst [vmem:[%s4 + $0x10] sm:$0xff] %v406
    %457 = vst [vmem:[%s4 + $0x18] sm:$0xff] %v409
    // Predicated region
    $region22: #{vqvae_forward.8} parent=1 // pred_check
      %p458 = pneg %p20
    $region23: #{vqvae_forward.8} parent=1 // pred_check_branch
      %460 = sbr.rel (%p458) target = $region25
    $region24: #{vqvae_forward.8} parent=1 // pred_region
      %s461 = sld [smem:[#allocation2]]
      %s462 = smul.f32 %s461, 0.0024414063
      %s463 = scalar_lea.smem [#allocation3], 0
      %464 = sst [smem:[%s463]] %s462
    $region25: #{vqvae_forward.8} parent=1 // pred_fallthru
      _
    // Predicated region
    $region26: #{vqvae_forward.8} parent=1 // pred_check
      _
    $region27: #{vqvae_forward.8} parent=1 // pred_check_branch
      %466 = sbr.rel (0) target = $region29
    $region28: #{vqvae_forward.8} parent=1 // pred_region
      _
    $region29: #{vqvae_forward.8} parent=1 // pred_fallthru
      _
    // Predicated region
    $region30: #{vqvae_forward.8} parent=1 // pred_check
      _
    $region31: #{vqvae_forward.8} parent=1 // pred_check_branch
      %468 = sbr.rel (0) target = $region33
    $region32: #{vqvae_forward.8} parent=1 // pred_region
      %470 = vsyncadd [#allocation4], 0
      %s472 = sshll.u32 %s5, 4
      %s473 = int_to_ptr.hbm [resolvable:$true] %s472
      %475 = dma.smem_to_hbm [#allocation3], 16, %s473, [#allocation4]
    $region33: #{vqvae_forward.8} parent=1 // pred_fallthru
      _
    // Predicated region
    $region34: #{vqvae_forward.8} parent=1 // pred_check
      _
    $region35: #{vqvae_forward.8} parent=1 // pred_check_branch
      %477 = sbr.rel (0) target = $region37
    $region36: #{vqvae_forward.8} parent=1 // pred_region
      _
    $region37: #{vqvae_forward.8} parent=1 // pred_fallthru
      _
    // Predicated region
    $region38: #{vqvae_forward.8} parent=1 // pred_check
      _
    $region39: #{vqvae_forward.8} parent=1 // pred_check_branch
      %479 = sbr.rel (0) target = $region41
    $region40: #{vqvae_forward.8} parent=1 // pred_region
      %481 = dma.done [#allocation4], 16
    $region41: #{vqvae_forward.8} parent=1 // pred_fallthru
      _
    %482 = sfence
    %483 = vsyncpa [#allocation4], 1

// kernel: vqvae_forward.10
$region0: #{vqvae_forward.10}
  #allocation0 [shape = 'u32[]', space=smem, size = 0x4, offset = 0x4, fixed_abs, tag = 'smem constant byte address 0x4 - core index']
  #allocation1 [shape = 'u32[72,128]{1,0:T(1,128)}', space=vmem, size = 0x9000, scoped, tag = 'internal scratch']
  %s0 = inlined_call_operand.vmem [shape: f32[128,256], index: 0, kind: input, shape index: {}]
  %s1 = inlined_call_operand.vmem [shape: f32[256,128], index: 1, kind: input, shape index: {}]
  %s2 = inlined_call_operand.vmem [shape: f32[1,128], index: 2, kind: input, shape index: {}]
  %s3 = inlined_call_operand.vmem [shape: f32[128,128], index: 3, kind: output, shape index: {}]
  %s4 = sld [smem:[#allocation0]]
  $region22: #{vqvae_forward.10} parent=0
    _
  %s6 = ssub.s32 1, %s4
  %s7 = scalar_select 0, %s6, %s4
  // Predicated region
  $region2: #{vqvae_forward.10} parent=0 // pred_check
    _
  $region3: #{vqvae_forward.10} parent=0 // pred_check_branch
    %9 = sbr.rel (0) target = $region5
  $region4: #{vqvae_forward.10} parent=0 // pred_region
    _
  $region5: #{vqvae_forward.10} parent=0 // pred_fallthru
    _
  // Predicated region
  $region6: #{vqvae_forward.10} parent=0 // pred_check
    _
  $region7: #{vqvae_forward.10} parent=0 // pred_check_branch
    %11 = sbr.rel (0) target = $region9
  $region8: #{vqvae_forward.10} parent=0 // pred_region
    _
  $region9: #{vqvae_forward.10} parent=0 // pred_fallthru
    _
  // Predicated region
  $region10: #{vqvae_forward.10} parent=0 // pred_check
    _
  $region11: #{vqvae_forward.10} parent=0 // pred_check_branch
    %13 = sbr.rel (0) target = $region13
  $region12: #{vqvae_forward.10} parent=0 // pred_region
    _
  $region13: #{vqvae_forward.10} parent=0 // pred_fallthru
    _
  %v14 = vld [vmem:[%s0] sm:$0xff]
  %v15 = vld [vmem:[%s0 + $0x8] sm:$0xff]
  %v16 = vld [vmem:[%s0 + $0x10] sm:$0xff]
  %v17 = vld [vmem:[%s0 + $0x18] sm:$0xff]
  %v18 = vld [vmem:[%s0 + $0x20] sm:$0xff]
  %v19 = vld [vmem:[%s0 + $0x28] sm:$0xff]
  %v20 = vld [vmem:[%s0 + $0x30] sm:$0xff]
  %v21 = vld [vmem:[%s0 + $0x38] sm:$0xff]
  %v22 = vld [vmem:[%s0 + $0x40] sm:$0xff]
  %v23 = vld [vmem:[%s0 + $0x48] sm:$0xff]
  %v24 = vld [vmem:[%s0 + $0x50] sm:$0xff]
  %v25 = vld [vmem:[%s0 + $0x58] sm:$0xff]
  %v26 = vld [vmem:[%s0 + $0x60] sm:$0xff]
  %v27 = vld [vmem:[%s0 + $0x68] sm:$0xff]
  %v28 = vld [vmem:[%s0 + $0x70] sm:$0xff]
  %v29 = vld [vmem:[%s0 + $0x78] sm:$0xff]
  %v30 = vld [vmem:[%s0 + $0x80] sm:$0xff]
  %v31 = vld [vmem:[%s0 + $0x88] sm:$0xff]
  %v32 = vld [vmem:[%s0 + $0x90] sm:$0xff]
  %v33 = vld [vmem:[%s0 + $0x98] sm:$0xff]
  %v34 = vld [vmem:[%s0 + $0xa0] sm:$0xff]
  %v35 = vld [vmem:[%s0 + $0xa8] sm:$0xff]
  %v36 = vld [vmem:[%s0 + $0xb0] sm:$0xff]
  %v37 = vld [vmem:[%s0 + $0xb8] sm:$0xff]
  %v38 = vld [vmem:[%s0 + $0xc0] sm:$0xff]
  %v39 = vld [vmem:[%s0 + $0xc8] sm:$0xff]
  %v40 = vld [vmem:[%s0 + $0xd0] sm:$0xff]
  %v41 = vld [vmem:[%s0 + $0xd8] sm:$0xff]
  %v42 = vld [vmem:[%s0 + $0xe0] sm:$0xff]
  %v43 = vld [vmem:[%s0 + $0xe8] sm:$0xff]
  %v44 = vld [vmem:[%s0 + $0xf0] sm:$0xff]
  %v45 = vld [vmem:[%s0 + $0xf8] sm:$0xff]
  %v46 = vld [vmem:[%s1] sm:$0xff]
  %v47 = vld [vmem:[%s1 + $0x8] sm:$0xff]
  %v48 = vld [vmem:[%s1 + $0x10] sm:$0xff]
  %v49 = vld [vmem:[%s1 + $0x18] sm:$0xff]
  %v50 = vld [vmem:[%s1 + $0x20] sm:$0xff]
  %v51 = vld [vmem:[%s1 + $0x28] sm:$0xff]
  %v52 = vld [vmem:[%s1 + $0x30] sm:$0xff]
  %v53 = vld [vmem:[%s1 + $0x38] sm:$0xff]
  %v54 = vld [vmem:[%s1 + $0x40] sm:$0xff]
  %v55 = vld [vmem:[%s1 + $0x48] sm:$0xff]
  %v56 = vld [vmem:[%s1 + $0x50] sm:$0xff]
  %v57 = vld [vmem:[%s1 + $0x58] sm:$0xff]
  %v58 = vld [vmem:[%s1 + $0x60] sm:$0xff]
  %v59 = vld [vmem:[%s1 + $0x68] sm:$0xff]
  %v60 = vld [vmem:[%s1 + $0x70] sm:$0xff]
  %v61 = vld [vmem:[%s1 + $0x78] sm:$0xff]
  %v62 = vld [vmem:[%s1 + $0x80] sm:$0xff]
  %v63 = vld [vmem:[%s1 + $0x88] sm:$0xff]
  %v64 = vld [vmem:[%s1 + $0x90] sm:$0xff]
  %v65 = vld [vmem:[%s1 + $0x98] sm:$0xff]
  %v66 = vld [vmem:[%s1 + $0xa0] sm:$0xff]
  %v67 = vld [vmem:[%s1 + $0xa8] sm:$0xff]
  %v68 = vld [vmem:[%s1 + $0xb0] sm:$0xff]
  %v69 = vld [vmem:[%s1 + $0xb8] sm:$0xff]
  %v70 = vld [vmem:[%s1 + $0xc0] sm:$0xff]
  %v71 = vld [vmem:[%s1 + $0xc8] sm:$0xff]
  %v72 = vld [vmem:[%s1 + $0xd0] sm:$0xff]
  %v73 = vld [vmem:[%s1 + $0xd8] sm:$0xff]
  %v74 = vld [vmem:[%s1 + $0xe0] sm:$0xff]
  %v75 = vld [vmem:[%s1 + $0xe8] sm:$0xff]
  %v76 = vld [vmem:[%s1 + $0xf0] sm:$0xff]
  %v77 = vld [vmem:[%s1 + $0xf8] sm:$0xff]
  %v78 = vld [vmem:[%s2] sm:$0x1]
  %v80 = vperm.slane %v78, 0
  %82 = vmatpush.msra.mxu0 %v61
  %83 = vmatpush.msra.mxu0 %v60
  %84 = vmatpush.msra.mxu0 %v59
  %85 = vmatpush.msra.mxu0 %v58
  %86 = vmatpush.msra.mxu0 %v57
  %87 = vmatpush.msra.mxu0 %v56
  %88 = vmatpush.msra.mxu0 %v55
  %89 = vmatpush.msra.mxu0 %v54
  %90 = vmatpush.msra.mxu0 %v53
  %91 = vmatpush.msra.mxu0 %v52
  %92 = vmatpush.msra.mxu0 %v51
  %93 = vmatpush.msra.mxu0 %v50
  %94 = vmatpush.msra.mxu0 %v49
  %95 = vmatpush.msra.mxu0 %v48
  %96 = vmatpush.msra.mxu0 %v47
  %97 = vmatpush.msra.mxu0 %v46
  %98 = vmatmul.f32.gmra.mxu0 %v14
  %v99 = vpop.f32.mrf.mxu0
  %v100 = vadd.f32 %v80, %v99
  %101 = vmatmul.f32.gmra.mxu0 %v16
  %v102 = vpop.f32.mrf.mxu0
  %v103 = vadd.f32 %v80, %v102
  %104 = vmatmul.f32.gmra.mxu0 %v18
  %v105 = vpop.f32.mrf.mxu0
  %v106 = vadd.f32 %v80, %v105
  %107 = vmatmul.f32.gmra.mxu0 %v20
  %v108 = vpop.f32.mrf.mxu0
  %v109 = vadd.f32 %v80, %v108
  %110 = vmatmul.f32.gmra.mxu0 %v22
  %v111 = vpop.f32.mrf.mxu0
  %v112 = vadd.f32 %v80, %v111
  %113 = vmatmul.f32.gmra.mxu0 %v24
  %v114 = vpop.f32.mrf.mxu0
  %v115 = vadd.f32 %v80, %v114
  %116 = vmatmul.f32.gmra.mxu0 %v26
  %v117 = vpop.f32.mrf.mxu0
  %v118 = vadd.f32 %v80, %v117
  %119 = vmatmul.f32.gmra.mxu0 %v28
  %v120 = vpop.f32.mrf.mxu0
  %v121 = vadd.f32 %v80, %v120
  %122 = vmatmul.f32.gmra.mxu0 %v30
  %v123 = vpop.f32.mrf.mxu0
  %v124 = vadd.f32 %v80, %v123
  %125 = vmatmul.f32.gmra.mxu0 %v32
  %v126 = vpop.f32.mrf.mxu0
  %v127 = vadd.f32 %v80, %v126
  %128 = vmatmul.f32.gmra.mxu0 %v34
  %v129 = vpop.f32.mrf.mxu0
  %v130 = vadd.f32 %v80, %v129
  %131 = vmatmul.f32.gmra.mxu0 %v36
  %v132 = vpop.f32.mrf.mxu0
  %v133 = vadd.f32 %v80, %v132
  %134 = vmatmul.f32.gmra.mxu0 %v38
  %v135 = vpop.f32.mrf.mxu0
  %v136 = vadd.f32 %v80, %v135
  %137 = vmatmul.f32.gmra.mxu0 %v40
  %v138 = vpop.f32.mrf.mxu0
  %v139 = vadd.f32 %v80, %v138
  %140 = vmatmul.f32.gmra.mxu0 %v42
  %v141 = vpop.f32.mrf.mxu0
  %v142 = vadd.f32 %v80, %v141
  %143 = vmatmul.f32.gmra.mxu0 %v44
  %v144 = vpop.f32.mrf.mxu0
  %v145 = vadd.f32 %v80, %v144
  %146 = vdwg.mxu0
  %147 = vmatpush.msra.mxu0 %v77
  %148 = vmatpush.msra.mxu0 %v76
  %149 = vmatpush.msra.mxu0 %v75
  %150 = vmatpush.msra.mxu0 %v74
  %151 = vmatpush.msra.mxu0 %v73
  %152 = vmatpush.msra.mxu0 %v72
  %153 = vmatpush.msra.mxu0 %v71
  %154 = vmatpush.msra.mxu0 %v70
  %155 = vmatpush.msra.mxu0 %v69
  %156 = vmatpush.msra.mxu0 %v68
  %157 = vmatpush.msra.mxu0 %v67
  %158 = vmatpush.msra.mxu0 %v66
  %159 = vmatpush.msra.mxu0 %v65
  %160 = vmatpush.msra.mxu0 %v64
  %161 = vmatpush.msra.mxu0 %v63
  %162 = vmatpush.msra.mxu0 %v62
  %163 = vmatmul.f32.gmra.mxu0 %v15
  %v164 = vpop.f32.mrf.mxu0
  %v165 = vadd.f32 %v100, %v164
  %166 = vmatmul.f32.gmra.mxu0 %v17
  %v167 = vpop.f32.mrf.mxu0
  %v168 = vadd.f32 %v103, %v167
  %169 = vmatmul.f32.gmra.mxu0 %v19
  %v170 = vpop.f32.mrf.mxu0
  %v171 = vadd.f32 %v106, %v170
  %172 = vmatmul.f32.gmra.mxu0 %v21
  %v173 = vpop.f32.mrf.mxu0
  %v174 = vadd.f32 %v109, %v173
  %175 = vmatmul.f32.gmra.mxu0 %v23
  %v176 = vpop.f32.mrf.mxu0
  %v177 = vadd.f32 %v112, %v176
  %178 = vmatmul.f32.gmra.mxu0 %v25
  %v179 = vpop.f32.mrf.mxu0
  %v180 = vadd.f32 %v115, %v179
  %181 = vmatmul.f32.gmra.mxu0 %v27
  %v182 = vpop.f32.mrf.mxu0
  %v183 = vadd.f32 %v118, %v182
  %184 = vmatmul.f32.gmra.mxu0 %v29
  %v185 = vpop.f32.mrf.mxu0
  %v186 = vadd.f32 %v121, %v185
  %187 = vmatmul.f32.gmra.mxu0 %v31
  %v188 = vpop.f32.mrf.mxu0
  %v189 = vadd.f32 %v124, %v188
  %190 = vmatmul.f32.gmra.mxu0 %v33
  %v191 = vpop.f32.mrf.mxu0
  %v192 = vadd.f32 %v127, %v191
  %193 = vmatmul.f32.gmra.mxu0 %v35
  %v194 = vpop.f32.mrf.mxu0
  %v195 = vadd.f32 %v130, %v194
  %196 = vmatmul.f32.gmra.mxu0 %v37
  %v197 = vpop.f32.mrf.mxu0
  %v198 = vadd.f32 %v133, %v197
  %199 = vmatmul.f32.gmra.mxu0 %v39
  %v200 = vpop.f32.mrf.mxu0
  %v201 = vadd.f32 %v136, %v200
  %202 = vmatmul.f32.gmra.mxu0 %v41
  %v203 = vpop.f32.mrf.mxu0
  %v204 = vadd.f32 %v139, %v203
  %205 = vmatmul.f32.gmra.mxu0 %v43
  %v206 = vpop.f32.mrf.mxu0
  %v207 = vadd.f32 %v142, %v206
  %208 = vmatmul.f32.gmra.mxu0 %v45
  %v209 = vpop.f32.mrf.mxu0
  %v210 = vadd.f32 %v145, %v209
  %211 = vdwg.mxu0
  %v212 = vmax.f32 %v165, 0.0
  %v213 = vmax.f32 %v168, 0.0
  %v214 = vmax.f32 %v171, 0.0
  %v215 = vmax.f32 %v174, 0.0
  %v216 = vmax.f32 %v177, 0.0
  %v217 = vmax.f32 %v180, 0.0
  %v218 = vmax.f32 %v183, 0.0
  %v219 = vmax.f32 %v186, 0.0
  %v220 = vmax.f32 %v189, 0.0
  %v221 = vmax.f32 %v192, 0.0
  %v222 = vmax.f32 %v195, 0.0
  %v223 = vmax.f32 %v198, 0.0
  %v224 = vmax.f32 %v201, 0.0
  %v225 = vmax.f32 %v204, 0.0
  %v226 = vmax.f32 %v207, 0.0
  %v227 = vmax.f32 %v210, 0.0
  %228 = vst [vmem:[%s3] sm:$0xff] %v212
  %229 = vst [vmem:[%s3 + $0x8] sm:$0xff] %v213
  %230 = vst [vmem:[%s3 + $0x10] sm:$0xff] %v214
  %231 = vst [vmem:[%s3 + $0x18] sm:$0xff] %v215
  %232 = vst [vmem:[%s3 + $0x20] sm:$0xff] %v216
  %233 = vst [vmem:[%s3 + $0x28] sm:$0xff] %v217
  %234 = vst [vmem:[%s3 + $0x30] sm:$0xff] %v218
  %235 = vst [vmem:[%s3 + $0x38] sm:$0xff] %v219
  %236 = vst [vmem:[%s3 + $0x40] sm:$0xff] %v220
  %237 = vst [vmem:[%s3 + $0x48] sm:$0xff] %v221
  %238 = vst [vmem:[%s3 + $0x50] sm:$0xff] %v222
  %239 = vst [vmem:[%s3 + $0x58] sm:$0xff] %v223
  %240 = vst [vmem:[%s3 + $0x60] sm:$0xff] %v224
  %241 = vst [vmem:[%s3 + $0x68] sm:$0xff] %v225
  %242 = vst [vmem:[%s3 + $0x70] sm:$0xff] %v226
  %243 = vst [vmem:[%s3 + $0x78] sm:$0xff] %v227
  // Predicated region
  $region14: #{vqvae_forward.10} parent=0 // pred_check
    _
  $region15: #{vqvae_forward.10} parent=0 // pred_check_branch
    %245 = sbr.rel (0) target = $region17
  $region16: #{vqvae_forward.10} parent=0 // pred_region
    _
  $region17: #{vqvae_forward.10} parent=0 // pred_fallthru
    _
  // Predicated region
  $region18: #{vqvae_forward.10} parent=0 // pred_check
    _
  $region19: #{vqvae_forward.10} parent=0 // pred_check_branch
    %247 = sbr.rel (0) target = $region21
  $region20: #{vqvae_forward.10} parent=0 // pred_region
    _
  $region21: #{vqvae_forward.10} parent=0 // pred_fallthru
    _

// kernel: vqvae_forward.11
$region0: #{vqvae_forward.11}
  #allocation0 [shape = 'u32[]', space=smem, size = 0x4, offset = 0x4, fixed_abs, tag = 'smem constant byte address 0x4 - core index']
  #allocation1 [shape = 'u32[72,128]{1,0:T(1,128)}', space=vmem, size = 0x9000, scoped, tag = 'internal scratch']
  #allocation2 [shape = 'f32[1]{0:T(128)}', space=smem, size = 0x200, scoped, tag = 'scratch operand']
  %s0 = inlined_call_operand.vmem [shape: f32[512,288], index: 0, kind: input, shape index: {}]
  %s1 = inlined_call_operand.vmem [shape: f32[288,128], index: 1, kind: input, shape index: {}]
  %s2 = inlined_call_operand.vmem [shape: f32[1,128], index: 2, kind: input, shape index: {}]
  %s3 = inlined_call_operand.vmem [shape: f32[512,128], index: 3, kind: input, shape index: {}]
  %s4 = inlined_call_operand.hbm [shape: f32[1,1], index: 4, kind: output, shape index: {}]
  %s5 = sld [smem:[#allocation0]]
  $region57: #{vqvae_forward.11} parent=0
    _
  %s7 = ssub.s32 1, %s5
  %s8 = scalar_select 0, %s7, %s5
  $region1: #{vqvae_forward.11} parent=0
    #allocation3 [shape = 'u8[512]{0}', space=smem, size = 0x200, scoped, tag = 'output window, operand 0, single buffered']
    #allocation4 [shape = 's32[2]{0}', space=sflag, size = 0x8, scoped, tag = 'scoped memory for vqvae_forward.11']
    %9 = vsyncpa [#allocation4], 0
    loop: start=0, step=1, limit=4
    $region2: #{vqvae_forward.11} parent=1 // loop_pre_header
      _
    $region3: #{vqvae_forward.11} parent=1 // loop_header
      %s11 = sphi 0, %s15
      %p12 = scmp.ge.s32.totalorder %s11, 4
      %s18 = sphi 0, %s30
      %s19 = sphi 0, %s26
      %s20 = sphi 0, %s18
      %s21 = sphi 0, %s19
      %s22 = sphi 0, %s20
      %s23 = sphi 0, %s21
      %s33 = sphi 0, %s35
      %s36 = sphi 0, %s33
      %s37 = sphi 0, %s36
      %s53 = sphi 0, %s37
      %s59 = sphi 0, %s61
      %s62 = sphi 0, %s59
      %s63 = sphi 0, %s62
      %s79 = sphi 0, %s63
      %s85 = sphi 0, %s87
      %s88 = sphi 0, %s85
      %s89 = sphi 0, %s88
      %s105 = sphi 0, %s89
      %s113 = sphi 0, %s115
      %s116 = sphi 0, %s113
      %s117 = sphi 0, %s116
      %s133 = sphi 0, %s117
      %s137 = sphi 0, %s137
      %s139 = sphi 0, %s137
      %s140 = sphi 0, %s139
      %s154 = sphi 0, %s140
    $region4: #{vqvae_forward.11} parent=1 // loop_header_branch
      %14 = sbr.rel (%p12) target = $region8
    $region5: #{vqvae_forward.11} parent=1 // loop_body
      %s16 = ssub.s32 %s11, 1
      %s17 = ssub.s32 %s11, 2
      %s24 = sadd.s32 1, %s19
      %p25 = scmp.ge.s32.totalorder %s24, 1
      %s26 = scalar_select %p25, 0, %s24
      %s27 = sadd.s32 1, %s18
      %s28 = scalar_select %p25, %s27, %s18
      %p29 = scmp.ge.s32.totalorder %s28, 2
      %s30 = scalar_select %p29, 0, %s28
      %s31 = ssub.s32 %s18, %s30
      %p32 = scmp.eq.s32.totalorder %s31, 0
      %s34 = sadd.s32 %s33, 1
      %s35 = scalar_select %p32, %s33, %s34
      %p38 = pneg %p32
      %p39 = scmp.eq.s32.totalorder %s11, 1
      %p40 = por %p38, %p39
      %p41 = scmp.ne.s32.totalorder %s33, %s36
      %p42 = scmp.eq.s32.totalorder %s11, 0
      %p43 = por %p41, %p42
      %p44 = scmp.ne.s32.totalorder %s33, %s36
      %p45 = scmp.eq.s32.totalorder %s16, 1
      %p46 = por %p44, %p45
      %p47 = scmp.ne.s32.totalorder %s36, %s37
      %p48 = scmp.eq.s32.totalorder %s16, 0
      %p49 = por %p47, %p48
      %p50 = scmp.ne.s32.totalorder %s36, %s37
      %p51 = scmp.eq.s32.totalorder %s17, 1
      %p52 = por %p50, %p51
      %p54 = scmp.ne.s32.totalorder %s37, %s53
      %p55 = scmp.eq.s32.totalorder %s17, 0
      %p56 = por %p54, %p55
      %s57 = ssub.s32 %s19, %s26
      %p58 = scmp.eq.s32.totalorder %s57, 0
      %s60 = sadd.s32 %s59, 1
      %s61 = scalar_select %p58, %s59, %s60
      %p64 = pneg %p58
      %p65 = scmp.eq.s32.totalorder %s11, 1
      %p66 = por %p64, %p65
      %p67 = scmp.ne.s32.totalorder %s59, %s62
      %p68 = scmp.eq.s32.totalorder %s11, 0
      %p69 = por %p67, %p68
      %p70 = scmp.ne.s32.totalorder %s59, %s62
      %p71 = scmp.eq.s32.totalorder %s16, 1
      %p72 = por %p70, %p71
      %p73 = scmp.ne.s32.totalorder %s62, %s63
      %p74 = scmp.eq.s32.totalorder %s16, 0
      %p75 = por %p73, %p74
      %p76 = scmp.ne.s32.totalorder %s62, %s63
      %p77 = scmp.eq.s32.totalorder %s17, 1
      %p78 = por %p76, %p77
      %p80 = scmp.ne.s32.totalorder %s63, %s79
      %p81 = scmp.eq.s32.totalorder %s17, 0
      %p82 = por %p80, %p81
      %s83 = ssub.s32 %s19, %s26
      %p84 = scmp.eq.s32.totalorder %s83, 0
      %s86 = sadd.s32 %s85, 1
      %s87 = scalar_select %p84, %s85, %s86
      %p90 = pneg %p84
      %p91 = scmp.eq.s32.totalorder %s11, 1
      %p92 = por %p90, %p91
      %p93 = scmp.ne.s32.totalorder %s85, %s88
      %p94 = scmp.eq.s32.totalorder %s11, 0
      %p95 = por %p93, %p94
      %p96 = scmp.ne.s32.totalorder %s85, %s88
      %p97 = scmp.eq.s32.totalorder %s16, 1
      %p98 = por %p96, %p97
      %p99 = scmp.ne.s32.totalorder %s88, %s89
      %p100 = scmp.eq.s32.totalorder %s16, 0
      %p101 = por %p99, %p100
      %p102 = scmp.ne.s32.totalorder %s88, %s89
      %p103 = scmp.eq.s32.totalorder %s17, 1
      %p104 = por %p102, %p103
      %p106 = scmp.ne.s32.totalorder %s89, %s105
      %p107 = scmp.eq.s32.totalorder %s17, 0
      %p108 = por %p106, %p107
      %s109 = ssub.s32 %s18, %s30
      %s110 = ssub.s32 %s19, %s26
      %s111 = sor.u32 %s109, %s110
      %p112 = scmp.eq.s32.totalorder %s111, 0
      %s114 = sadd.s32 %s113, 1
      %s115 = scalar_select %p112, %s113, %s114
      %p118 = pneg %p112
      %p119 = scmp.eq.s32.totalorder %s11, 1
      %p120 = por %p118, %p119
      %p121 = scmp.ne.s32.totalorder %s113, %s116
      %p122 = scmp.eq.s32.totalorder %s11, 0
      %p123 = por %p121, %p122
      %p124 = scmp.ne.s32.totalorder %s113, %s116
      %p125 = scmp.eq.s32.totalorder %s16, 1
      %p126 = por %p124, %p125
      %p127 = scmp.ne.s32.totalorder %s116, %s117
      %p128 = scmp.eq.s32.totalorder %s16, 0
      %p129 = por %p127, %p128
      %p130 = scmp.ne.s32.totalorder %s116, %s117
      %p131 = scmp.eq.s32.totalorder %s17, 1
      %p132 = por %p130, %p131
      %p134 = scmp.ne.s32.totalorder %s117, %s133
      %p135 = scmp.eq.s32.totalorder %s17, 0
      %p136 = por %p134, %p135
      %s138 = sadd.s32 %s137, 1
      %p141 = scmp.eq.s32.totalorder %s11, 1
      %p142 = scmp.ne.s32.totalorder %s137, %s139
      %p143 = scmp.eq.s32.totalorder %s11, 0
      %p144 = por %p142, %p143
      %p145 = scmp.ne.s32.totalorder %s137, %s139
      %p146 = scmp.eq.s32.totalorder %s16, 1
      %p147 = por %p145, %p146
      %p148 = scmp.ne.s32.totalorder %s139, %s140
      %p149 = scmp.eq.s32.totalorder %s16, 0
      %p150 = por %p148, %p149
      %p151 = scmp.ne.s32.totalorder %s139, %s140
      %p152 = scmp.eq.s32.totalorder %s17, 1
      %p153 = por %p151, %p152
      %p155 = scmp.ne.s32.totalorder %s140, %s154
      %p156 = scmp.eq.s32.totalorder %s17, 0
      %p157 = por %p155, %p156
      %p158 = scmp.le.s32.totalorder 1, %s11
      %p159 = scmp.lt.s32.totalorder %s11, 3
      %p160 = pnand %p158, %p159
      %p161 = pneg %p160
      // Predicated region
      $region9: #{vqvae_forward.11} parent=5 // pred_check
        _
      $region10: #{vqvae_forward.11} parent=5 // pred_check_branch
        %163 = sbr.rel (%p160) target = $region12
      $region11: #{vqvae_forward.11} parent=5 // pred_region
        %s164 = ssub.s32 %s11, 1
        // Predicated region
        $region13: #{vqvae_forward.11} parent=11 // pred_check
          %p165 = pneg %p75
        $region14: #{vqvae_forward.11} parent=11 // pred_check_branch
          %167 = sbr.rel (%p165) target = $region16
        $region15: #{vqvae_forward.11} parent=11 // pred_region
          %p168 = scmp.lt.s32.totalorder %s21, 0
          %s169 = scalar_select %p168, %s21, 0
          %s170 = smul.addr %s169, 8
          %s171 = scalar_lea.vmem %s1, %s170
        $region16: #{vqvae_forward.11} parent=11 // pred_fallthru
          _
        // Predicated region
        $region17: #{vqvae_forward.11} parent=11 // pred_check
          %p172 = pneg %p101
        $region18: #{vqvae_forward.11} parent=11 // pred_check_branch
          %174 = sbr.rel (%p172) target = $region20
        $region19: #{vqvae_forward.11} parent=11 // pred_region
          %p175 = scmp.lt.s32.totalorder %s21, 0
          %s176 = scalar_select %p175, %s21, 0
          %s177 = scalar_lea.vmem %s2, %s176
        $region20: #{vqvae_forward.11} parent=11 // pred_fallthru
          _
      $region12: #{vqvae_forward.11} parent=5 // pred_fallthru
        _
      %p178 = scmp.lt.s32.totalorder %s11, 2
      // Predicated region
      $region21: #{vqvae_forward.11} parent=5 // pred_check
        %p179 = pneg %p178
      $region22: #{vqvae_forward.11} parent=5 // pred_check_branch
        %181 = sbr.rel (%p179) target = $region24
      $region23: #{vqvae_forward.11} parent=5 // pred_region
        // Predicated region
        $region25: #{vqvae_forward.11} parent=23 // pred_check
          %p182 = pneg %p43
        $region26: #{vqvae_forward.11} parent=23 // pred_check_branch
          %184 = sbr.rel (%p182) target = $region28
        $region27: #{vqvae_forward.11} parent=23 // pred_region
          %s185 = smul.u32 32, %s18
          %p186 = scmp.lt.s32.totalorder %s185, 63
          %s187 = scalar_select %p186, %s185, 63
          %s188 = smul.addr %s187, 3
          %s189 = smul.addr %s188, 8
          %s190 = scalar_lea.vmem %s0, %s189
          %s191 = smul.u32 32, %s18
        $region28: #{vqvae_forward.11} parent=23 // pred_fallthru
          _
        // Predicated region
        $region29: #{vqvae_forward.11} parent=23 // pred_check
          %p192 = pneg %p123
        $region30: #{vqvae_forward.11} parent=23 // pred_check_branch
          %194 = sbr.rel (%p192) target = $region32
        $region31: #{vqvae_forward.11} parent=23 // pred_region
          %s195 = smul.u32 32, %s18
          %p196 = scmp.lt.s32.totalorder %s195, 63
          %s197 = scalar_select %p196, %s195, 63
          %p198 = scmp.lt.s32.totalorder %s19, 0
          %s199 = scalar_select %p198, %s19, 0
          %s200 = sadd.s32 %s199, %s197
          %s201 = smul.addr %s200, 8
          %s202 = scalar_lea.vmem %s3, %s201
          %s203 = smul.u32 32, %s18
        $region32: #{vqvae_forward.11} parent=23 // pred_fallthru
          _
      $region24: #{vqvae_forward.11} parent=5 // pred_fallthru
        _
      %p204 = scmp.le.s32.totalorder 1, %s11
      %p205 = scmp.lt.s32.totalorder %s11, 3
      %p206 = pnand %p204, %p205
      %p207 = pneg %p206
      // Predicated region
      $region33: #{vqvae_forward.11} parent=5 // pred_check
        _
      $region34: #{vqvae_forward.11} parent=5 // pred_check_branch
        %209 = sbr.rel (%p206) target = $region36
      $region35: #{vqvae_forward.11} parent=5 // pred_region
        %s210 = ssub.s32 %s11, 1
        %s211 = smul.u32 32, %s20
        %p212 = scmp.lt.s32.totalorder %s211, 63
        %s213 = scalar_select %p212, %s211, 63
        %s214 = smul.addr %s213, 3
        %s215 = smul.addr %s214, 8
        %s216 = scalar_lea.vmem %s0, %s215
        %p217 = pneg %p49
        %p218 = pneg %p46
        %p219 = scmp.lt.s32.totalorder %s21, 0
        %s220 = scalar_select %p219, %s21, 0
        %s221 = smul.addr %s220, 8
        %s222 = scalar_lea.vmem %s1, %s221
        %p223 = pneg %p75
        %p224 = pneg %p72
        %p225 = scmp.lt.s32.totalorder %s21, 0
        %s226 = scalar_select %p225, %s21, 0
        %s227 = scalar_lea.vmem %s2, %s226
        %p228 = pneg %p101
        %p229 = pneg %p98
        %s230 = smul.u32 32, %s20
        %p231 = scmp.lt.s32.totalorder %s230, 63
        %s232 = scalar_select %p231, %s230, 63
        %p233 = scmp.lt.s32.totalorder %s21, 0
        %s234 = scalar_select %p233, %s21, 0
        %s235 = sadd.s32 %s234, %s232
        %s236 = smul.addr %s235, 8
        %s237 = scalar_lea.vmem %s3, %s236
        %p238 = pneg %p129
        %p239 = pneg %p126
        %p240 = pneg %p150
        %p241 = pneg %p147
        %s242 = smul.u32 32, %s20
        %p243 = scmp.lt.s32.totalorder %s242, 63
        %s244 = scalar_select %p243, %s242, 63
        %s245 = smul.addr %s244, 3
        %s246 = smul.addr %s245, 8
        %s247 = scalar_lea.vmem %s0, %s246
        %s248 = smul.u32 32, %s20
        %p249 = scmp.lt.s32.totalorder %s21, 0
        %s250 = scalar_select %p249, %s21, 0
        %s251 = smul.addr %s250, 8
        %s252 = scalar_lea.vmem %s1, %s251
        %p253 = scmp.lt.s32.totalorder %s21, 0
        %s254 = scalar_select %p253, %s21, 0
        %s255 = scalar_lea.vmem %s2, %s254
        %s256 = smul.u32 32, %s20
        %p257 = scmp.lt.s32.totalorder %s256, 63
        %s258 = scalar_select %p257, %s256, 63
        %p259 = scmp.lt.s32.totalorder %s21, 0
        %s260 = scalar_select %p259, %s21, 0
        %s261 = sadd.s32 %s260, %s258
        %s262 = smul.addr %s261, 8
        %s263 = scalar_lea.vmem %s3, %s262
        %s264 = smul.u32 32, %s20
        %p265 = scmp.eq.s32.totalorder %s20, 0
        %p266 = scmp.eq.s32.totalorder %s21, 0
        %p267 = pnand %p265, %p266
        %p268 = pneg %p267
        // Predicated region
        $region37: #{vqvae_forward.11} parent=35 // pred_check
          _
        $region38: #{vqvae_forward.11} parent=35 // pred_check_branch
          %270 = sbr.rel (%p267) target = $region40
        $region39: #{vqvae_forward.11} parent=35 // pred_region
          %s271 = scalar_lea.smem [#allocation2], 0
          %272 = sst [smem:[%s271]] 0.0
        $region40: #{vqvae_forward.11} parent=35 // pred_fallthru
          _
        %v273 = vld [vmem:[%s247] sm:$0xff]
        %v274 = vld [vmem:[%s247 + $0x8] sm:$0xff]
        %v275 = vld [vmem:[%s247 + $0x10] sm:$0xff]
        %v276 = vld [vmem:[%s247 + $0x18] sm:$0xff]
        %v277 = vld [vmem:[%s247 + $0x20] sm:$0xff]
        %v278 = vld [vmem:[%s247 + $0x28] sm:$0xff]
        %v279 = vld [vmem:[%s247 + $0x30] sm:$0xff]
        %v280 = vld [vmem:[%s247 + $0x38] sm:$0xff]
        %v281 = vld [vmem:[%s247 + $0x40] sm:$0xff]
        %v282 = vld [vmem:[%s247 + $0x48] sm:$0xff]
        %v283 = vld [vmem:[%s247 + $0x50] sm:$0xff]
        %v284 = vld [vmem:[%s247 + $0x58] sm:$0xff]
        %v285 = vld [vmem:[%s247 + $0x60] sm:$0xff]
        %v286 = vld [vmem:[%s247 + $0x68] sm:$0xff]
        %v287 = vld [vmem:[%s247 + $0x70] sm:$0xff]
        %v288 = vld [vmem:[%s247 + $0x78] sm:$0xff]
        %v289 = vld [vmem:[%s247 + $0x80] sm:$0xff]
        %v290 = vld [vmem:[%s247 + $0x88] sm:$0xff]
        %v291 = vld [vmem:[%s247 + $0x90] sm:$0xff]
        %v292 = vld [vmem:[%s247 + $0x98] sm:$0xff]
        %v293 = vld [vmem:[%s247 + $0xa0] sm:$0xff]
        %v294 = vld [vmem:[%s247 + $0xa8] sm:$0xff]
        %v295 = vld [vmem:[%s247 + $0xb0] sm:$0xff]
        %v296 = vld [vmem:[%s247 + $0xb8] sm:$0xff]
        %v297 = vld [vmem:[%s247 + $0xc0] sm:$0xff]
        %v298 = vld [vmem:[%s247 + $0xc8] sm:$0xff]
        %v299 = vld [vmem:[%s247 + $0xd0] sm:$0xff]
        %v300 = vld [vmem:[%s247 + $0xd8] sm:$0xff]
        %v301 = vld [vmem:[%s247 + $0xe0] sm:$0xff]
        %v302 = vld [vmem:[%s247 + $0xe8] sm:$0xff]
        %v303 = vld [vmem:[%s247 + $0xf0] sm:$0xff]
        %v304 = vld [vmem:[%s247 + $0xf8] sm:$0xff]
        %v305 = vld [vmem:[%s247 + $0x100] sm:$0xff]
        %v306 = vld [vmem:[%s247 + $0x108] sm:$0xff]
        %v307 = vld [vmem:[%s247 + $0x110] sm:$0xff]
        %v308 = vld [vmem:[%s247 + $0x118] sm:$0xff]
        %v309 = vld [vmem:[%s247 + $0x120] sm:$0xff]
        %v310 = vld [vmem:[%s247 + $0x128] sm:$0xff]
        %v311 = vld [vmem:[%s247 + $0x130] sm:$0xff]
        %v312 = vld [vmem:[%s247 + $0x138] sm:$0xff]
        %v313 = vld [vmem:[%s247 + $0x140] sm:$0xff]
        %v314 = vld [vmem:[%s247 + $0x148] sm:$0xff]
        %v315 = vld [vmem:[%s247 + $0x150] sm:$0xff]
        %v316 = vld [vmem:[%s247 + $0x158] sm:$0xff]
        %v317 = vld [vmem:[%s247 + $0x160] sm:$0xff]
        %v318 = vld [vmem:[%s247 + $0x168] sm:$0xff]
        %v319 = vld [vmem:[%s247 + $0x170] sm:$0xff]
        %v320 = vld [vmem:[%s247 + $0x178] sm:$0xff]
        %v321 = vld [vmem:[%s247 + $0x180] sm:$0xff]
        %v322 = vld [vmem:[%s247 + $0x188] sm:$0xff]
        %v323 = vld [vmem:[%s247 + $0x190] sm:$0xff]
        %v324 = vld [vmem:[%s247 + $0x198] sm:$0xff]
        %v325 = vld [vmem:[%s247 + $0x1a0] sm:$0xff]
        %v326 = vld [vmem:[%s247 + $0x1a8] sm:$0xff]
        %v327 = vld [vmem:[%s247 + $0x1b0] sm:$0xff]
        %v328 = vld [vmem:[%s247 + $0x1b8] sm:$0xff]
        %v329 = vld [vmem:[%s247 + $0x1c0] sm:$0xff]
        %v330 = vld [vmem:[%s247 + $0x1c8] sm:$0xff]
        %v331 = vld [vmem:[%s247 + $0x1d0] sm:$0xff]
        %v332 = vld [vmem:[%s247 + $0x1d8] sm:$0xff]
        %v333 = vld [vmem:[%s247 + $0x1e0] sm:$0xff]
        %v334 = vld [vmem:[%s247 + $0x1e8] sm:$0xff]
        %v335 = vld [vmem:[%s247 + $0x1f0] sm:$0xff]
        %v336 = vld [vmem:[%s247 + $0x1f8] sm:$0xff]
        %v337 = vld [vmem:[%s247 + $0x200] sm:$0xff]
        %v338 = vld [vmem:[%s247 + $0x208] sm:$0xff]
        %v339 = vld [vmem:[%s247 + $0x210] sm:$0xff]
        %v340 = vld [vmem:[%s247 + $0x218] sm:$0xff]
        %v341 = vld [vmem:[%s247 + $0x220] sm:$0xff]
        %v342 = vld [vmem:[%s247 + $0x228] sm:$0xff]
        %v343 = vld [vmem:[%s247 + $0x230] sm:$0xff]
        %v344 = vld [vmem:[%s247 + $0x238] sm:$0xff]
        %v345 = vld [vmem:[%s247 + $0x240] sm:$0xff]
        %v346 = vld [vmem:[%s247 + $0x248] sm:$0xff]
        %v347 = vld [vmem:[%s247 + $0x250] sm:$0xff]
        %v348 = vld [vmem:[%s247 + $0x258] sm:$0xff]
        %v349 = vld [vmem:[%s247 + $0x260] sm:$0xff]
        %v350 = vld [vmem:[%s247 + $0x268] sm:$0xff]
        %v351 = vld [vmem:[%s247 + $0x270] sm:$0xff]
        %v352 = vld [vmem:[%s247 + $0x278] sm:$0xff]
        %v353 = vld [vmem:[%s247 + $0x280] sm:$0xff]
        %v354 = vld [vmem:[%s247 + $0x288] sm:$0xff]
        %v355 = vld [vmem:[%s247 + $0x290] sm:$0xff]
        %v356 = vld [vmem:[%s247 + $0x298] sm:$0xff]
        %v357 = vld [vmem:[%s247 + $0x2a0] sm:$0xff]
        %v358 = vld [vmem:[%s247 + $0x2a8] sm:$0xff]
        %v359 = vld [vmem:[%s247 + $0x2b0] sm:$0xff]
        %v360 = vld [vmem:[%s247 + $0x2b8] sm:$0xff]
        %v361 = vld [vmem:[%s247 + $0x2c0] sm:$0xff]
        %v362 = vld [vmem:[%s247 + $0x2c8] sm:$0xff]
        %v363 = vld [vmem:[%s247 + $0x2d0] sm:$0xff]
        %v364 = vld [vmem:[%s247 + $0x2d8] sm:$0xff]
        %v365 = vld [vmem:[%s247 + $0x2e0] sm:$0xff]
        %v366 = vld [vmem:[%s247 + $0x2e8] sm:$0xff]
        %v367 = vld [vmem:[%s247 + $0x2f0] sm:$0xff]
        %v368 = vld [vmem:[%s247 + $0x2f8] sm:$0xff]
        %v369 = vld [vmem:[%s252] sm:$0xff]
        %v370 = vld [vmem:[%s252 + $0x8] sm:$0xff]
        %v371 = vld [vmem:[%s252 + $0x10] sm:$0xff]
        %v372 = vld [vmem:[%s252 + $0x18] sm:$0xff]
        %v373 = vld [vmem:[%s252 + $0x20] sm:$0xff]
        %v374 = vld [vmem:[%s252 + $0x28] sm:$0xff]
        %v375 = vld [vmem:[%s252 + $0x30] sm:$0xff]
        %v376 = vld [vmem:[%s252 + $0x38] sm:$0xff]
        %v377 = vld [vmem:[%s252 + $0x40] sm:$0xff]
        %v378 = vld [vmem:[%s252 + $0x48] sm:$0xff]
        %v379 = vld [vmem:[%s252 + $0x50] sm:$0xff]
        %v380 = vld [vmem:[%s252 + $0x58] sm:$0xff]
        %v381 = vld [vmem:[%s252 + $0x60] sm:$0xff]
        %v382 = vld [vmem:[%s252 + $0x68] sm:$0xff]
        %v383 = vld [vmem:[%s252 + $0x70] sm:$0xff]
        %v384 = vld [vmem:[%s252 + $0x78] sm:$0xff]
        %v385 = vld [vmem:[%s252 + $0x80] sm:$0xff]
        %v386 = vld [vmem:[%s252 + $0x88] sm:$0xff]
        %v387 = vld [vmem:[%s252 + $0x90] sm:$0xff]
        %v388 = vld [vmem:[%s252 + $0x98] sm:$0xff]
        %v389 = vld [vmem:[%s252 + $0xa0] sm:$0xff]
        %v390 = vld [vmem:[%s252 + $0xa8] sm:$0xff]
        %v391 = vld [vmem:[%s252 + $0xb0] sm:$0xff]
        %v392 = vld [vmem:[%s252 + $0xb8] sm:$0xff]
        %v393 = vld [vmem:[%s252 + $0xc0] sm:$0xff]
        %v394 = vld [vmem:[%s252 + $0xc8] sm:$0xff]
        %v395 = vld [vmem:[%s252 + $0xd0] sm:$0xff]
        %v396 = vld [vmem:[%s252 + $0xd8] sm:$0xff]
        %v397 = vld [vmem:[%s252 + $0xe0] sm:$0xff]
        %v398 = vld [vmem:[%s252 + $0xe8] sm:$0xff]
        %v399 = vld [vmem:[%s252 + $0xf0] sm:$0xff]
        %v400 = vld [vmem:[%s252 + $0xf8] sm:$0xff]
        %v401 = vld [vmem:[%s252 + $0x100] sm:$0xff]
        %v402 = vld [vmem:[%s252 + $0x108] sm:$0xff]
        %v403 = vld [vmem:[%s252 + $0x110] sm:$0xff]
        %v404 = vld [vmem:[%s252 + $0x118] sm:$0xff]
        %v405 = vld [vmem:[%s255] sm:$0x1]
        %v407 = vperm.slane %v405, 0
        %vm409 = vcmask 261120
        %v411 = vsel %vm409, %v275, 0
        %v414 = vsel %vm409, %v278, 0
        %v417 = vsel %vm409, %v281, 0
        %v420 = vsel %vm409, %v284, 0
        %v423 = vsel %vm409, %v287, 0
        %v426 = vsel %vm409, %v290, 0
        %v429 = vsel %vm409, %v293, 0
        %v432 = vsel %vm409, %v296, 0
        %v435 = vsel %vm409, %v299, 0
        %v438 = vsel %vm409, %v302, 0
        %v441 = vsel %vm409, %v305, 0
        %v444 = vsel %vm409, %v308, 0
        %v447 = vsel %vm409, %v311, 0
        %v450 = vsel %vm409, %v314, 0
        %v453 = vsel %vm409, %v317, 0
        %v456 = vsel %vm409, %v320, 0
        %v459 = vsel %vm409, %v323, 0
        %v462 = vsel %vm409, %v326, 0
        %v465 = vsel %vm409, %v329, 0
        %v468 = vsel %vm409, %v332, 0
        %v471 = vsel %vm409, %v335, 0
        %v474 = vsel %vm409, %v338, 0
        %v477 = vsel %vm409, %v341, 0
        %v480 = vsel %vm409, %v344, 0
        %v483 = vsel %vm409, %v347, 0
        %v486 = vsel %vm409, %v350, 0
        %v489 = vsel %vm409, %v353, 0
        %v492 = vsel %vm409, %v356, 0
        %v495 = vsel %vm409, %v359, 0
        %v498 = vsel %vm409, %v362, 0
        %v501 = vsel %vm409, %v365, 0
        %v504 = vsel %vm409, %v368, 0
        %506 = vmatpush.msra.mxu0 %v384
        %507 = vmatpush.msra.mxu0 %v383
        %508 = vmatpush.msra.mxu0 %v382
        %509 = vmatpush.msra.mxu0 %v381
        %510 = vmatpush.msra.mxu0 %v380
        %511 = vmatpush.msra.mxu0 %v379
        %512 = vmatpush.msra.mxu0 %v378
        %513 = vmatpush.msra.mxu0 %v377
        %514 = vmatpush.msra.mxu0 %v376
        %515 = vmatpush.msra.mxu0 %v375
        %516 = vmatpush.msra.mxu0 %v374
        %517 = vmatpush.msra.mxu0 %v373
        %518 = vmatpush.msra.mxu0 %v372
        %519 = vmatpush.msra.mxu0 %v371
        %520 = vmatpush.msra.mxu0 %v370
        %521 = vmatpush.msra.mxu0 %v369
        %522 = vmatmul.f32.gmra.mxu0 %v273
        %v523 = vpop.f32.mrf.mxu0
        %v524 = vadd.f32 %v407, %v523
        %525 = vmatmul.f32.gmra.mxu0 %v276
        %v526 = vpop.f32.mrf.mxu0
        %v527 = vadd.f32 %v407, %v526
        %528 = vmatmul.f32.gmra.mxu0 %v279
        %v529 = vpop.f32.mrf.mxu0
        %v530 = vadd.f32 %v407, %v529
        %531 = vmatmul.f32.gmra.mxu0 %v282
        %v532 = vpop.f32.mrf.mxu0
        %v533 = vadd.f32 %v407, %v532
        %534 = vmatmul.f32.gmra.mxu0 %v285
        %v535 = vpop.f32.mrf.mxu0
        %v536 = vadd.f32 %v407, %v535
        %537 = vmatmul.f32.gmra.mxu0 %v288
        %v538 = vpop.f32.mrf.mxu0
        %v539 = vadd.f32 %v407, %v538
        %540 = vmatmul.f32.gmra.mxu0 %v291
        %v541 = vpop.f32.mrf.mxu0
        %v542 = vadd.f32 %v407, %v541
        %543 = vmatmul.f32.gmra.mxu0 %v294
        %v544 = vpop.f32.mrf.mxu0
        %v545 = vadd.f32 %v407, %v544
        %546 = vmatmul.f32.gmra.mxu0 %v297
        %v547 = vpop.f32.mrf.mxu0
        %v548 = vadd.f32 %v407, %v547
        %549 = vmatmul.f32.gmra.mxu0 %v300
        %v550 = vpop.f32.mrf.mxu0
        %v551 = vadd.f32 %v407, %v550
        %552 = vmatmul.f32.gmra.mxu0 %v303
        %v553 = vpop.f32.mrf.mxu0
        %v554 = vadd.f32 %v407, %v553
        %555 = vmatmul.f32.gmra.mxu0 %v306
        %v556 = vpop.f32.mrf.mxu0
        %v557 = vadd.f32 %v407, %v556
        %558 = vmatmul.f32.gmra.mxu0 %v309
        %v559 = vpop.f32.mrf.mxu0
        %v560 = vadd.f32 %v407, %v559
        %561 = vmatmul.f32.gmra.mxu0 %v312
        %v562 = vpop.f32.mrf.mxu0
        %v563 = vadd.f32 %v407, %v562
        %564 = vmatmul.f32.gmra.mxu0 %v315
        %v565 = vpop.f32.mrf.mxu0
        %v566 = vadd.f32 %v407, %v565
        %567 = vmatmul.f32.gmra.mxu0 %v318
        %v568 = vpop.f32.mrf.mxu0
        %v569 = vadd.f32 %v407, %v568
        %570 = vmatmul.f32.gmra.mxu0 %v321
        %v571 = vpop.f32.mrf.mxu0
        %v572 = vadd.f32 %v407, %v571
        %573 = vmatmul.f32.gmra.mxu0 %v324
        %v574 = vpop.f32.mrf.mxu0
        %v575 = vadd.f32 %v407, %v574
        %576 = vmatmul.f32.gmra.mxu0 %v327
        %v577 = vpop.f32.mrf.mxu0
        %v578 = vadd.f32 %v407, %v577
        %579 = vmatmul.f32.gmra.mxu0 %v330
        %v580 = vpop.f32.mrf.mxu0
        %v581 = vadd.f32 %v407, %v580
        %582 = vmatmul.f32.gmra.mxu0 %v333
        %v583 = vpop.f32.mrf.mxu0
        %v584 = vadd.f32 %v407, %v583
        %585 = vmatmul.f32.gmra.mxu0 %v336
        %v586 = vpop.f32.mrf.mxu0
        %v587 = vadd.f32 %v407, %v586
        %588 = vmatmul.f32.gmra.mxu0 %v339
        %v589 = vpop.f32.mrf.mxu0
        %v590 = vadd.f32 %v407, %v589
        %591 = vmatmul.f32.gmra.mxu0 %v342
        %v592 = vpop.f32.mrf.mxu0
        %v593 = vadd.f32 %v407, %v592
        %594 = vmatmul.f32.gmra.mxu0 %v345
        %v595 = vpop.f32.mrf.mxu0
        %v596 = vadd.f32 %v407, %v595
        %597 = vmatmul.f32.gmra.mxu0 %v348
        %v598 = vpop.f32.mrf.mxu0
        %v599 = vadd.f32 %v407, %v598
        %600 = vmatmul.f32.gmra.mxu0 %v351
        %v601 = vpop.f32.mrf.mxu0
        %v602 = vadd.f32 %v407, %v601
        %603 = vmatmul.f32.gmra.mxu0 %v354
        %v604 = vpop.f32.mrf.mxu0
        %v605 = vadd.f32 %v407, %v604
        %606 = vmatmul.f32.gmra.mxu0 %v357
        %v607 = vpop.f32.mrf.mxu0
        %v608 = vadd.f32 %v407, %v607
        %609 = vmatmul.f32.gmra.mxu0 %v360
        %v610 = vpop.f32.mrf.mxu0
        %v611 = vadd.f32 %v407, %v610
        %612 = vmatmul.f32.gmra.mxu0 %v363
        %v613 = vpop.f32.mrf.mxu0
        %v614 = vadd.f32 %v407, %v613
        %615 = vmatmul.f32.gmra.mxu0 %v366
        %v616 = vpop.f32.mrf.mxu0
        %v617 = vadd.f32 %v407, %v616
        %618 = vdwg.mxu0
        %619 = vmatpush.msra.mxu0 %v400
        %620 = vmatpush.msra.mxu0 %v399
        %621 = vmatpush.msra.mxu0 %v398
        %622 = vmatpush.msra.mxu0 %v397
        %623 = vmatpush.msra.mxu0 %v396
        %624 = vmatpush.msra.mxu0 %v395
        %625 = vmatpush.msra.mxu0 %v394
        %626 = vmatpush.msra.mxu0 %v393
        %627 = vmatpush.msra.mxu0 %v392
        %628 = vmatpush.msra.mxu0 %v391
        %629 = vmatpush.msra.mxu0 %v390
        %630 = vmatpush.msra.mxu0 %v389
        %631 = vmatpush.msra.mxu0 %v388
        %632 = vmatpush.msra.mxu0 %v387
        %633 = vmatpush.msra.mxu0 %v386
        %634 = vmatpush.msra.mxu0 %v385
        %635 = vmatmul.f32.gmra.mxu0 %v274
        %v636 = vpop.f32.mrf.mxu0
        %v637 = vadd.f32 %v524, %v636
        %638 = vmatmul.f32.gmra.mxu0 %v277
        %v639 = vpop.f32.mrf.mxu0
        %v640 = vadd.f32 %v527, %v639
        %641 = vmatmul.f32.gmra.mxu0 %v280
        %v642 = vpop.f32.mrf.mxu0
        %v643 = vadd.f32 %v530, %v642
        %644 = vmatmul.f32.gmra.mxu0 %v283
        %v645 = vpop.f32.mrf.mxu0
        %v646 = vadd.f32 %v533, %v645
        %647 = vmatmul.f32.gmra.mxu0 %v286
        %v648 = vpop.f32.mrf.mxu0
        %v649 = vadd.f32 %v536, %v648
        %650 = vmatmul.f32.gmra.mxu0 %v289
        %v651 = vpop.f32.mrf.mxu0
        %v652 = vadd.f32 %v539, %v651
        %653 = vmatmul.f32.gmra.mxu0 %v292
        %v654 = vpop.f32.mrf.mxu0
        %v655 = vadd.f32 %v542, %v654
        %656 = vmatmul.f32.gmra.mxu0 %v295
        %v657 = vpop.f32.mrf.mxu0
        %v658 = vadd.f32 %v545, %v657
        %659 = vmatmul.f32.gmra.mxu0 %v298
        %v660 = vpop.f32.mrf.mxu0
        %v661 = vadd.f32 %v548, %v660
        %662 = vmatmul.f32.gmra.mxu0 %v301
        %v663 = vpop.f32.mrf.mxu0
        %v664 = vadd.f32 %v551, %v663
        %665 = vmatmul.f32.gmra.mxu0 %v304
        %v666 = vpop.f32.mrf.mxu0
        %v667 = vadd.f32 %v554, %v666
        %668 = vmatmul.f32.gmra.mxu0 %v307
        %v669 = vpop.f32.mrf.mxu0
        %v670 = vadd.f32 %v557, %v669
        %671 = vmatmul.f32.gmra.mxu0 %v310
        %v672 = vpop.f32.mrf.mxu0
        %v673 = vadd.f32 %v560, %v672
        %674 = vmatmul.f32.gmra.mxu0 %v313
        %v675 = vpop.f32.mrf.mxu0
        %v676 = vadd.f32 %v563, %v675
        %677 = vmatmul.f32.gmra.mxu0 %v316
        %v678 = vpop.f32.mrf.mxu0
        %v679 = vadd.f32 %v566, %v678
        %680 = vmatmul.f32.gmra.mxu0 %v319
        %v681 = vpop.f32.mrf.mxu0
        %v682 = vadd.f32 %v569, %v681
        %683 = vmatmul.f32.gmra.mxu0 %v322
        %v684 = vpop.f32.mrf.mxu0
        %v685 = vadd.f32 %v572, %v684
        %686 = vmatmul.f32.gmra.mxu0 %v325
        %v687 = vpop.f32.mrf.mxu0
        %v688 = vadd.f32 %v575, %v687
        %689 = vmatmul.f32.gmra.mxu0 %v328
        %v690 = vpop.f32.mrf.mxu0
        %v691 = vadd.f32 %v578, %v690
        %692 = vmatmul.f32.gmra.mxu0 %v331
        %v693 = vpop.f32.mrf.mxu0
        %v694 = vadd.f32 %v581, %v693
        %695 = vmatmul.f32.gmra.mxu0 %v334
        %v696 = vpop.f32.mrf.mxu0
        %v697 = vadd.f32 %v584, %v696
        %698 = vmatmul.f32.gmra.mxu0 %v337
        %v699 = vpop.f32.mrf.mxu0
        %v700 = vadd.f32 %v587, %v699
        %701 = vmatmul.f32.gmra.mxu0 %v340
        %v702 = vpop.f32.mrf.mxu0
        %v703 = vadd.f32 %v590, %v702
        %704 = vmatmul.f32.gmra.mxu0 %v343
        %v705 = vpop.f32.mrf.mxu0
        %v706 = vadd.f32 %v593, %v705
        %707 = vmatmul.f32.gmra.mxu0 %v346
        %v708 = vpop.f32.mrf.mxu0
        %v709 = vadd.f32 %v596, %v708
        %710 = vmatmul.f32.gmra.mxu0 %v349
        %v711 = vpop.f32.mrf.mxu0
        %v712 = vadd.f32 %v599, %v711
        %713 = vmatmul.f32.gmra.mxu0 %v352
        %v714 = vpop.f32.mrf.mxu0
        %v715 = vadd.f32 %v602, %v714
        %716 = vmatmul.f32.gmra.mxu0 %v355
        %v717 = vpop.f32.mrf.mxu0
        %v718 = vadd.f32 %v605, %v717
        %719 = vmatmul.f32.gmra.mxu0 %v358
        %v720 = vpop.f32.mrf.mxu0
        %v721 = vadd.f32 %v608, %v720
        %722 = vmatmul.f32.gmra.mxu0 %v361
        %v723 = vpop.f32.mrf.mxu0
        %v724 = vadd.f32 %v611, %v723
        %725 = vmatmul.f32.gmra.mxu0 %v364
        %v726 = vpop.f32.mrf.mxu0
        %v727 = vadd.f32 %v614, %v726
        %728 = vmatmul.f32.gmra.mxu0 %v367
        %v729 = vpop.f32.mrf.mxu0
        %v730 = vadd.f32 %v617, %v729
        %731 = vdwg.mxu0
        %732 = vmatpush.msra.mxu0 0.0
        %733 = vmatpush.msra.mxu0 0.0
        %734 = vmatpush.msra.mxu0 0.0
        %735 = vmatpush.msra.mxu0 0.0
        %736 = vmatpush.msra.mxu0 0.0
        %737 = vmatpush.msra.mxu0 0.0
        %738 = vmatpush.msra.mxu0 0.0
        %739 = vmatpush.msra.mxu0 0.0
        %740 = vmatpush.msra.mxu0 0.0
        %741 = vmatpush.msra.mxu0 0.0
        %742 = vmatpush.msra.mxu0 0.0
        %743 = vmatpush.msra.mxu0 0.0
        %744 = vmatpush.msra.mxu0 %v404
        %745 = vmatpush.msra.mxu0 %v403
        %746 = vmatpush.msra.mxu0 %v402
        %747 = vmatpush.msra.mxu0 %v401
        %748 = vmatmul.f32.gmra.mxu0 %v411
        %v749 = vpop.f32.mrf.mxu0
        %v750 = vadd.f32 %v637, %v749
        %751 = vmatmul.f32.gmra.mxu0 %v414
        %v752 = vpop.f32.mrf.mxu0
        %v753 = vadd.f32 %v640, %v752
        %754 = vmatmul.f32.gmra.mxu0 %v417
        %v755 = vpop.f32.mrf.mxu0
        %v756 = vadd.f32 %v643, %v755
        %757 = vmatmul.f32.gmra.mxu0 %v420
        %v758 = vpop.f32.mrf.mxu0
        %v759 = vadd.f32 %v646, %v758
        %760 = vmatmul.f32.gmra.mxu0 %v423
        %v761 = vpop.f32.mrf.mxu0
        %v762 = vadd.f32 %v649, %v761
        %763 = vmatmul.f32.gmra.mxu0 %v426
        %v764 = vpop.f32.mrf.mxu0
        %v765 = vadd.f32 %v652, %v764
        %766 = vmatmul.f32.gmra.mxu0 %v429
        %v767 = vpop.f32.mrf.mxu0
        %v768 = vadd.f32 %v655, %v767
        %769 = vmatmul.f32.gmra.mxu0 %v432
        %v770 = vpop.f32.mrf.mxu0
        %v771 = vadd.f32 %v658, %v770
        %772 = vmatmul.f32.gmra.mxu0 %v435
        %v773 = vpop.f32.mrf.mxu0
        %v774 = vadd.f32 %v661, %v773
        %775 = vmatmul.f32.gmra.mxu0 %v438
        %v776 = vpop.f32.mrf.mxu0
        %v777 = vadd.f32 %v664, %v776
        %778 = vmatmul.f32.gmra.mxu0 %v441
        %v779 = vpop.f32.mrf.mxu0
        %v780 = vadd.f32 %v667, %v779
        %781 = vmatmul.f32.gmra.mxu0 %v444
        %v782 = vpop.f32.mrf.mxu0
        %v783 = vadd.f32 %v670, %v782
        %784 = vmatmul.f32.gmra.mxu0 %v447
        %v785 = vpop.f32.mrf.mxu0
        %v786 = vadd.f32 %v673, %v785
        %787 = vmatmul.f32.gmra.mxu0 %v450
        %v788 = vpop.f32.mrf.mxu0
        %v789 = vadd.f32 %v676, %v788
        %790 = vmatmul.f32.gmra.mxu0 %v453
        %v791 = vpop.f32.mrf.mxu0
        %v792 = vadd.f32 %v679, %v791
        %793 = vmatmul.f32.gmra.mxu0 %v456
        %v794 = vpop.f32.mrf.mxu0
        %v795 = vadd.f32 %v682, %v794
        %796 = vmatmul.f32.gmra.mxu0 %v459
        %v797 = vpop.f32.mrf.mxu0
        %v798 = vadd.f32 %v685, %v797
        %799 = vmatmul.f32.gmra.mxu0 %v462
        %v800 = vpop.f32.mrf.mxu0
        %v801 = vadd.f32 %v688, %v800
        %802 = vmatmul.f32.gmra.mxu0 %v465
        %v803 = vpop.f32.mrf.mxu0
        %v804 = vadd.f32 %v691, %v803
        %805 = vmatmul.f32.gmra.mxu0 %v468
        %v806 = vpop.f32.mrf.mxu0
        %v807 = vadd.f32 %v694, %v806
        %808 = vmatmul.f32.gmra.mxu0 %v471
        %v809 = vpop.f32.mrf.mxu0
        %v810 = vadd.f32 %v697, %v809
        %811 = vmatmul.f32.gmra.mxu0 %v474
        %v812 = vpop.f32.mrf.mxu0
        %v813 = vadd.f32 %v700, %v812
        %814 = vmatmul.f32.gmra.mxu0 %v477
        %v815 = vpop.f32.mrf.mxu0
        %v816 = vadd.f32 %v703, %v815
        %817 = vmatmul.f32.gmra.mxu0 %v480
        %v818 = vpop.f32.mrf.mxu0
        %v819 = vadd.f32 %v706, %v818
        %820 = vmatmul.f32.gmra.mxu0 %v483
        %v821 = vpop.f32.mrf.mxu0
        %v822 = vadd.f32 %v709, %v821
        %823 = vmatmul.f32.gmra.mxu0 %v486
        %v824 = vpop.f32.mrf.mxu0
        %v825 = vadd.f32 %v712, %v824
        %826 = vmatmul.f32.gmra.mxu0 %v489
        %v827 = vpop.f32.mrf.mxu0
        %v828 = vadd.f32 %v715, %v827
        %829 = vmatmul.f32.gmra.mxu0 %v492
        %v830 = vpop.f32.mrf.mxu0
        %v831 = vadd.f32 %v718, %v830
        %832 = vmatmul.f32.gmra.mxu0 %v495
        %v833 = vpop.f32.mrf.mxu0
        %v834 = vadd.f32 %v721, %v833
        %835 = vmatmul.f32.gmra.mxu0 %v498
        %v836 = vpop.f32.mrf.mxu0
        %v837 = vadd.f32 %v724, %v836
        %838 = vmatmul.f32.gmra.mxu0 %v501
        %v839 = vpop.f32.mrf.mxu0
        %v840 = vadd.f32 %v727, %v839
        %841 = vmatmul.f32.gmra.mxu0 %v504
        %v842 = vpop.f32.mrf.mxu0
        %v843 = vadd.f32 %v730, %v842
        %844 = vdwg.mxu0
        %v845 = vld [vmem:[%s263] sm:$0xff]
        %v846 = vld [vmem:[%s263 + $0x8] sm:$0xff]
        %v847 = vld [vmem:[%s263 + $0x10] sm:$0xff]
        %v848 = vld [vmem:[%s263 + $0x18] sm:$0xff]
        %v849 = vld [vmem:[%s263 + $0x20] sm:$0xff]
        %v850 = vld [vmem:[%s263 + $0x28] sm:$0xff]
        %v851 = vld [vmem:[%s263 + $0x30] sm:$0xff]
        %v852 = vld [vmem:[%s263 + $0x38] sm:$0xff]
        %v853 = vld [vmem:[%s263 + $0x40] sm:$0xff]
        %v854 = vld [vmem:[%s263 + $0x48] sm:$0xff]
        %v855 = vld [vmem:[%s263 + $0x50] sm:$0xff]
        %v856 = vld [vmem:[%s263 + $0x58] sm:$0xff]
        %v857 = vld [vmem:[%s263 + $0x60] sm:$0xff]
        %v858 = vld [vmem:[%s263 + $0x68] sm:$0xff]
        %v859 = vld [vmem:[%s263 + $0x70] sm:$0xff]
        %v860 = vld [vmem:[%s263 + $0x78] sm:$0xff]
        %v861 = vld [vmem:[%s263 + $0x80] sm:$0xff]
        %v862 = vld [vmem:[%s263 + $0x88] sm:$0xff]
        %v863 = vld [vmem:[%s263 + $0x90] sm:$0xff]
        %v864 = vld [vmem:[%s263 + $0x98] sm:$0xff]
        %v865 = vld [vmem:[%s263 + $0xa0] sm:$0xff]
        %v866 = vld [vmem:[%s263 + $0xa8] sm:$0xff]
        %v867 = vld [vmem:[%s263 + $0xb0] sm:$0xff]
        %v868 = vld [vmem:[%s263 + $0xb8] sm:$0xff]
        %v869 = vld [vmem:[%s263 + $0xc0] sm:$0xff]
        %v870 = vld [vmem:[%s263 + $0xc8] sm:$0xff]
        %v871 = vld [vmem:[%s263 + $0xd0] sm:$0xff]
        %v872 = vld [vmem:[%s263 + $0xd8] sm:$0xff]
        %v873 = vld [vmem:[%s263 + $0xe0] sm:$0xff]
        %v874 = vld [vmem:[%s263 + $0xe8] sm:$0xff]
        %v875 = vld [vmem:[%s263 + $0xf0] sm:$0xff]
        %v876 = vld [vmem:[%s263 + $0xf8] sm:$0xff]
        %v877 = vsub.f32 %v750, %v845
        %v878 = vsub.f32 %v753, %v846
        %v879 = vsub.f32 %v756, %v847
        %v880 = vsub.f32 %v759, %v848
        %v881 = vsub.f32 %v762, %v849
        %v882 = vsub.f32 %v765, %v850
        %v883 = vsub.f32 %v768, %v851
        %v884 = vsub.f32 %v771, %v852
        %v885 = vsub.f32 %v774, %v853
        %v886 = vsub.f32 %v777, %v854
        %v887 = vsub.f32 %v780, %v855
        %v888 = vsub.f32 %v783, %v856
        %v889 = vsub.f32 %v786, %v857
        %v890 = vsub.f32 %v789, %v858
        %v891 = vsub.f32 %v792, %v859
        %v892 = vsub.f32 %v795, %v860
        %v893 = vsub.f32 %v798, %v861
        %v894 = vsub.f32 %v801, %v862
        %v895 = vsub.f32 %v804, %v863
        %v896 = vsub.f32 %v807, %v864
        %v897 = vsub.f32 %v810, %v865
        %v898 = vsub.f32 %v813, %v866
        %v899 = vsub.f32 %v816, %v867
        %v900 = vsub.f32 %v819, %v868
        %v901 = vsub.f32 %v822, %v869
        %v902 = vsub.f32 %v825, %v870
        %v903 = vsub.f32 %v828, %v871
        %v904 = vsub.f32 %v831, %v872
        %v905 = vsub.f32 %v834, %v873
        %v906 = vsub.f32 %v837, %v874
        %v907 = vsub.f32 %v840, %v875
        %v908 = vsub.f32 %v843, %v876
        %s909 = smul.u32 %s20, 256
        %v910 = vlaneseq
        %v911 = vshrl.u32 %v910, 7
        %v912 = vadd.s32 %v911, 8
        %v913 = vadd.s32 %v911, 16
        %v914 = vadd.s32 %v911, 24
        %v915 = vadd.s32 %v911, 32
        %v916 = vadd.s32 %v911, 40
        %v917 = vadd.s32 %v911, 48
        %v918 = vadd.s32 %v911, 56
        %v919 = vadd.s32 %v911, 64
        %v920 = vadd.s32 %v911, 72
        %v921 = vadd.s32 %v911, 80
        %v922 = vadd.s32 %v911, 88
        %v923 = vadd.s32 %v911, 96
        %v924 = vadd.s32 %v911, 104
        %v925 = vadd.s32 %v911, 112
        %v926 = vadd.s32 %v911, 120
        %v927 = vadd.s32 %v911, 128
        %v928 = vadd.s32 %v911, 136
        %v929 = vadd.s32 %v911, 144
        %v930 = vadd.s32 %v911, 152
        %v931 = vadd.s32 %v911, 160
        %v932 = vadd.s32 %v911, 168
        %v933 = vadd.s32 %v911, 176
        %v934 = vadd.s32 %v911, 184
        %v935 = vadd.s32 %v911, 192
        %v936 = vadd.s32 %v911, 200
        %v937 = vadd.s32 %v911, 208
        %v938 = vadd.s32 %v911, 216
        %v939 = vadd.s32 %v911, 224
        %v940 = vadd.s32 %v911, 232
        %v941 = vadd.s32 %v911, 240
        %v942 = vadd.s32 %v911, 248
        %v943 = vstv %s909
        %v944 = vadd.s32 %v943, %v911
        %v945 = vadd.s32 %v943, %v912
        %v946 = vadd.s32 %v943, %v913
        %v947 = vadd.s32 %v943, %v914
        %v948 = vadd.s32 %v943, %v915
        %v949 = vadd.s32 %v943, %v916
        %v950 = vadd.s32 %v943, %v917
        %v951 = vadd.s32 %v943, %v918
        %v952 = vadd.s32 %v943, %v919
        %v953 = vadd.s32 %v943, %v920
        %v954 = vadd.s32 %v943, %v921
        %v955 = vadd.s32 %v943, %v922
        %v956 = vadd.s32 %v943, %v923
        %v957 = vadd.s32 %v943, %v924
        %v958 = vadd.s32 %v943, %v925
        %v959 = vadd.s32 %v943, %v926
        %v960 = vadd.s32 %v943, %v927
        %v961 = vadd.s32 %v943, %v928
        %v962 = vadd.s32 %v943, %v929
        %v963 = vadd.s32 %v943, %v930
        %v964 = vadd.s32 %v943, %v931
        %v965 = vadd.s32 %v943, %v932
        %v966 = vadd.s32 %v943, %v933
        %v967 = vadd.s32 %v943, %v934
        %v968 = vadd.s32 %v943, %v935
        %v969 = vadd.s32 %v943, %v936
        %v970 = vadd.s32 %v943, %v937
        %v971 = vadd.s32 %v943, %v938
        %v972 = vadd.s32 %v943, %v939
        %v973 = vadd.s32 %v943, %v940
        %v974 = vadd.s32 %v943, %v941
        %v975 = vadd.s32 %v943, %v942
        %vm976 = vcmp.lt.s32.totalorder %v944, 512
        %vm977 = vcmp.lt.s32.totalorder %v945, 512
        %vm978 = vcmp.lt.s32.totalorder %v946, 512
        %vm979 = vcmp.lt.s32.totalorder %v947, 512
        %vm980 = vcmp.lt.s32.totalorder %v948, 512
        %vm981 = vcmp.lt.s32.totalorder %v949, 512
        %vm982 = vcmp.lt.s32.totalorder %v950, 512
        %vm983 = vcmp.lt.s32.totalorder %v951, 512
        %vm984 = vcmp.lt.s32.totalorder %v952, 512
        %vm985 = vcmp.lt.s32.totalorder %v953, 512
        %vm986 = vcmp.lt.s32.totalorder %v954, 512
        %vm987 = vcmp.lt.s32.totalorder %v955, 512
        %vm988 = vcmp.lt.s32.totalorder %v956, 512
        %vm989 = vcmp.lt.s32.totalorder %v957, 512
        %vm990 = vcmp.lt.s32.totalorder %v958, 512
        %vm991 = vcmp.lt.s32.totalorder %v959, 512
        %vm992 = vcmp.lt.s32.totalorder %v960, 512
        %vm993 = vcmp.lt.s32.totalorder %v961, 512
        %vm994 = vcmp.lt.s32.totalorder %v962, 512
        %vm995 = vcmp.lt.s32.totalorder %v963, 512
        %vm996 = vcmp.lt.s32.totalorder %v964, 512
        %vm997 = vcmp.lt.s32.totalorder %v965, 512
        %vm998 = vcmp.lt.s32.totalorder %v966, 512
        %vm999 = vcmp.lt.s32.totalorder %v967, 512
        %vm1000 = vcmp.lt.s32.totalorder %v968, 512
        %vm1001 = vcmp.lt.s32.totalorder %v969, 512
        %vm1002 = vcmp.lt.s32.totalorder %v970, 512
        %vm1003 = vcmp.lt.s32.totalorder %v971, 512
        %vm1004 = vcmp.lt.s32.totalorder %v972, 512
        %vm1005 = vcmp.lt.s32.totalorder %v973, 512
        %vm1006 = vcmp.lt.s32.totalorder %v974, 512
        %vm1007 = vcmp.lt.s32.totalorder %v975, 512
        %v1008 = vsel %vm976, %v877, 0.0
        %v1009 = vsel %vm977, %v878, 0.0
        %v1010 = vsel %vm978, %v879, 0.0
        %v1011 = vsel %vm979, %v880, 0.0
        %v1012 = vsel %vm980, %v881, 0.0
        %v1013 = vsel %vm981, %v882, 0.0
        %v1014 = vsel %vm982, %v883, 0.0
        %v1015 = vsel %vm983, %v884, 0.0
        %v1016 = vsel %vm984, %v885, 0.0
        %v1017 = vsel %vm985, %v886, 0.0
        %v1018 = vsel %vm986, %v887, 0.0
        %v1019 = vsel %vm987, %v888, 0.0
        %v1020 = vsel %vm988, %v889, 0.0
        %v1021 = vsel %vm989, %v890, 0.0
        %v1022 = vsel %vm990, %v891, 0.0
        %v1023 = vsel %vm991, %v892, 0.0
        %v1024 = vsel %vm992, %v893, 0.0
        %v1025 = vsel %vm993, %v894, 0.0
        %v1026 = vsel %vm994, %v895, 0.0
        %v1027 = vsel %vm995, %v896, 0.0
        %v1028 = vsel %vm996, %v897, 0.0
        %v1029 = vsel %vm997, %v898, 0.0
        %v1030 = vsel %vm998, %v899, 0.0
        %v1031 = vsel %vm999, %v900, 0.0
        %v1032 = vsel %vm1000, %v901, 0.0
        %v1033 = vsel %vm1001, %v902, 0.0
        %v1034 = vsel %vm1002, %v903, 0.0
        %v1035 = vsel %vm1003, %v904, 0.0
        %v1036 = vsel %vm1004, %v905, 0.0
        %v1037 = vsel %vm1005, %v906, 0.0
        %v1038 = vsel %vm1006, %v907, 0.0
        %v1039 = vsel %vm1007, %v908, 0.0
        %s1040 = sld [smem:[#allocation2]]
        %v1041 = vmul.f32 %v1008, %v1008
        %v1042 = vmul.f32 %v1009, %v1009
        %v1043 = vmul.f32 %v1010, %v1010
        %v1044 = vmul.f32 %v1011, %v1011
        %v1045 = vmul.f32 %v1012, %v1012
        %v1046 = vmul.f32 %v1013, %v1013
        %v1047 = vmul.f32 %v1014, %v1014
        %v1048 = vmul.f32 %v1015, %v1015
        %v1049 = vmul.f32 %v1016, %v1016
        %v1050 = vmul.f32 %v1017, %v1017
        %v1051 = vmul.f32 %v1018, %v1018
        %v1052 = vmul.f32 %v1019, %v1019
        %v1053 = vmul.f32 %v1020, %v1020
        %v1054 = vmul.f32 %v1021, %v1021
        %v1055 = vmul.f32 %v1022, %v1022
        %v1056 = vmul.f32 %v1023, %v1023
        %v1057 = vmul.f32 %v1024, %v1024
        %v1058 = vmul.f32 %v1025, %v1025
        %v1059 = vmul.f32 %v1026, %v1026
        %v1060 = vmul.f32 %v1027, %v1027
        %v1061 = vmul.f32 %v1028, %v1028
        %v1062 = vmul.f32 %v1029, %v1029
        %v1063 = vmul.f32 %v1030, %v1030
        %v1064 = vmul.f32 %v1031, %v1031
        %v1065 = vmul.f32 %v1032, %v1032
        %v1066 = vmul.f32 %v1033, %v1033
        %v1067 = vmul.f32 %v1034, %v1034
        %v1068 = vmul.f32 %v1035, %v1035
        %v1069 = vmul.f32 %v1036, %v1036
        %v1070 = vmul.f32 %v1037, %v1037
        %v1071 = vmul.f32 %v1038, %v1038
        %v1072 = vmul.f32 %v1039, %v1039
        %v1073 = vadd.f32 %v1041, %v1042
        %v1074 = vadd.f32 %v1073, %v1043
        %v1075 = vadd.f32 %v1074, %v1044
        %v1076 = vadd.f32 %v1075, %v1045
        %v1077 = vadd.f32 %v1076, %v1046
        %v1078 = vadd.f32 %v1077, %v1047
        %v1079 = vadd.f32 %v1078, %v1048
        %v1080 = vadd.f32 %v1079, %v1049
        %v1081 = vadd.f32 %v1080, %v1050
        %v1082 = vadd.f32 %v1081, %v1051
        %v1083 = vadd.f32 %v1082, %v1052
        %v1084 = vadd.f32 %v1083, %v1053
        %v1085 = vadd.f32 %v1084, %v1054
        %v1086 = vadd.f32 %v1085, %v1055
        %v1087 = vadd.f32 %v1086, %v1056
        %v1088 = vadd.f32 %v1087, %v1057
        %v1089 = vadd.f32 %v1088, %v1058
        %v1090 = vadd.f32 %v1089, %v1059
        %v1091 = vadd.f32 %v1090, %v1060
        %v1092 = vadd.f32 %v1091, %v1061
        %v1093 = vadd.f32 %v1092, %v1062
        %v1094 = vadd.f32 %v1093, %v1063
        %v1095 = vadd.f32 %v1094, %v1064
        %v1096 = vadd.f32 %v1095, %v1065
        %v1097 = vadd.f32 %v1096, %v1066
        %v1098 = vadd.f32 %v1097, %v1067
        %v1099 = vadd.f32 %v1098, %v1068
        %v1100 = vadd.f32 %v1099, %v1069
        %v1101 = vadd.f32 %v1100, %v1070
        %v1102 = vadd.f32 %v1101, %v1071
        %v1103 = vadd.f32 %v1102, %v1072
        %1104 = vadd.xlane.f32.xlu0 %v1103
        %v1105 = vpop.xlane.xlu0 %1104
        %v1106 = vrot.slane %v1105, 4
        %v1107 = vadd.f32 %v1105, %v1106
        %v1108 = vrot.slane %v1107, 2
        %v1109 = vadd.f32 %v1107, %v1108
        %v1110 = vrot.slane %v1109, 1
        %v1111 = vadd.f32 %v1109, %v1110
        %s1112 = vtos %v1111
        %s1113 = sadd.f32 %s1040, %s1112
        %s1114 = scalar_lea.smem [#allocation2], 0
        %1115 = sst [smem:[%s1114]] %s1113
        %p1116 = scmp.eq.s32.totalorder %s20, 1
        %p1117 = pnand %p1116, %p266
        %p1118 = pneg %p1117
        // Predicated region
        $region41: #{vqvae_forward.11} parent=35 // pred_check
          _
        $region42: #{vqvae_forward.11} parent=35 // pred_check_branch
          %1120 = sbr.rel (%p1117) target = $region44
        $region43: #{vqvae_forward.11} parent=35 // pred_region
          %s1121 = sld [smem:[#allocation2]]
          %s1122 = smul.f32 %s1121, 0.0006510417
          %s1123 = scalar_lea.smem [#allocation3], 0
          %1124 = sst [smem:[%s1123]] %s1122
        $region44: #{vqvae_forward.11} parent=35 // pred_fallthru
          _
        // Predicated region
        $region45: #{vqvae_forward.11} parent=35 // pred_check
          %p1125 = pneg %p147
        $region46: #{vqvae_forward.11} parent=35 // pred_check_branch
          %1127 = sbr.rel (%p1125) target = $region48
        $region47: #{vqvae_forward.11} parent=35 // pred_region
          %1129 = vsyncadd [#allocation4], 0
          %s1131 = sshll.u32 %s4, 4
          %s1132 = int_to_ptr.hbm [resolvable:$true] %s1131
          %1134 = dma.smem_to_hbm [#allocation3], 16, %s1132, [#allocation4]
        $region48: #{vqvae_forward.11} parent=35 // pred_fallthru
          _
        // Predicated region
        $region49: #{vqvae_forward.11} parent=35 // pred_check
          %p1135 = pneg %p147
        $region50: #{vqvae_forward.11} parent=35 // pred_check_branch
          %1137 = sbr.rel (%p1135) target = $region52
        $region51: #{vqvae_forward.11} parent=35 // pred_region
          %1139 = dma.done [#allocation4], 16
        $region52: #{vqvae_forward.11} parent=35 // pred_fallthru
          _
        %1140 = sfence
      $region36: #{vqvae_forward.11} parent=5 // pred_fallthru
        _
      %p1141 = scmp.le.s32.totalorder 2, %s11
      // Predicated region
      $region53: #{vqvae_forward.11} parent=5 // pred_check
        %p1142 = pneg %p1141
      $region54: #{vqvae_forward.11} parent=5 // pred_check_branch
        %1144 = sbr.rel (%p1142) target = $region56
      $region55: #{vqvae_forward.11} parent=5 // pred_region
        %s1145 = ssub.s32 %s11, 2
      $region56: #{vqvae_forward.11} parent=5 // pred_fallthru
        _
    $region6: #{vqvae_forward.11} parent=1 // loop_footer
      %s15 = sadd.s32 1, %s11
    $region7: #{vqvae_forward.11} parent=1 // loop_footer_branch
      %10 = sbr.rel target = $region3
    $region8: #{vqvae_forward.11} parent=1 // loop_exit
      _
    %1146 = vsyncpa [#allocation4], 1
    %s1147 = scalar_lea.sflag [#allocation4], 1
    %1148 = vsyncpa %s1147, 1

</llo_original>
